<compile_context>
chip_gen: v6e
topology: v6e:2x2x1
jax: 0.10.0
libtpu: 0.0.40
codegen_flags: <defaults>
</compile_context>

<pallas_src>
import functools

import jax
import jax.numpy as jnp
from jax import lax
from jax.experimental import pallas as pl
from jax.experimental.pallas import tpu as pltpu

EPS = 1e-5
LANE = 128


def _round_up(x, m):
    return (x + m - 1) // m * m


def _vmem_limit_bytes():
    # ~0.75 * physical VMEM, capped at 100 MiB: ~96 MiB on v5e/v6e (128 MiB), ~48 MiB on v7x (64 MiB).
    try:
        cap = pltpu.get_tpu_info().vmem_capacity_bytes
    except Exception:
        cap = 64 * 1024 * 1024
    return int(min(100 * 1024 * 1024, cap * 3 // 4))


# --------------------------------------------------------------------------------------
# In-kernel helpers
# --------------------------------------------------------------------------------------
def _conv3x3_im2col(pad_ref, col_ref, w_ref):
    """3x3 SAME conv of the (already written) interior of pad_ref as ONE MXU matmul.

    pad_ref: (Hp+2, Wp+2, C) f32, zero border, interior = activation
    col_ref: (Hp*Wp, 9*C)    compute-dtype im2col scratch (C % 128 == 0 -> lane-aligned writes)
    w_ref:   (9*C, Cout)     compute-dtype weights, row index = (ky*3 + kx)*C + ci
    returns: (Hp*Wp, Cout)   f32 (MXU accumulates in f32)
    """
    Hp, Wp = pad_ref.shape[0] - 2, pad_ref.shape[1] - 2
    C = pad_ref.shape[2]
    M = Hp * Wp
    # TODO(synk): the kx=0/2 tap reads are sublane-misaligned (W offsets 0/2 of a Wp+2 buffer);
    # at production C a lane-folded (W*C) layout + pltpu.roll would move the shift onto the XLU.
    for ky in range(3):
        for kx in range(3):
            k = ky * 3 + kx
            patch = pad_ref[ky:ky + Hp, kx:kx + Wp, :]                  # (Hp, Wp, C)
            col_ref[:, k * C:(k + 1) * C] = patch.reshape(M, C).astype(col_ref.dtype)
    return jnp.dot(col_ref[...], w_ref[...], preferred_element_type=jnp.float32)


def _partial_bn_stats(y, st_ref):
    """Per-tile centered stats: st_ref[0] = sum(y), st_ref[1] = sum((y - tile_mean)^2)."""
    m = y.shape[0]
    s = jnp.sum(y, axis=0, keepdims=True)                               # (1, C)
    d = y - s * (1.0 / m)
    st_ref[0:1, :] = s
    st_ref[1:2, :] = jnp.sum(d * d, axis=0, keepdims=True)


# --------------------------------------------------------------------------------------
# Stage A: MaxPool2d(2) + Conv1 + partial BN1 stats
# --------------------------------------------------------------------------------------
def _pool_conv1_kernel(x_ref, w_ref, y_ref, st_ref, pad_ref, col_ref):
    # x_ref: (Hp, 2, Wp, 2*C) pooled-layout input;  w_ref: (9*C, Cout)
    # y_ref: (Hp, Wp, Cout) conv1 pre-activation;   st_ref: (2, Cout) partial BN1 stats
    Hp, _, Wp, _ = x_ref.shape
    C = pad_ref.shape[-1]
    Cout = y_ref.shape[-1]

    # MaxPool2d(2): H-pool = plain index on the folded size-2 axis, W-pool = lane-half max.
    x = x_ref[...]
    hmax = jnp.maximum(x[:, 0], x[:, 1])                                # (Hp, Wp, 2*C)
    pooled = jnp.maximum(hmax[:, :, :C], hmax[:, :, C:])                # (Hp, Wp, C)

    # One full-slab zero per tile (megacore-safe; avoids narrow border-column masked stores).
    pad_ref[...] = jnp.zeros_like(pad_ref)
    pad_ref[1:Hp + 1, 1:Wp + 1, :] = pooled

    y = _conv3x3_im2col(pad_ref, col_ref, w_ref)                        # (Hp*Wp, Cout) f32
    _partial_bn_stats(y, st_ref)
    y_ref[...] = y.reshape(Hp, Wp, Cout)


# --------------------------------------------------------------------------------------
# Stage B: BN1 apply + ReLU (direct into conv2 halo buffer) + Conv2 + partial BN2 stats
# --------------------------------------------------------------------------------------
def _bn1_conv2_kernel(y1_ref, sc_ref, sh_ref, w_ref, y2_ref, st_ref, pad_ref, col_ref):
    Hp, Wp, C = y1_ref.shape
    Cout = y2_ref.shape[-1]

    pad_ref[...] = jnp.zeros_like(pad_ref)
    # BN1 scale/shift were folded from global batch stats in the wrapper; ReLU fused; result
    # stored straight into the conv2 halo buffer (no intermediate round trip / relayout).
    pad_ref[1:Hp + 1, 1:Wp + 1, :] = jnp.maximum(
        y1_ref[...] * sc_ref[0, :] + sh_ref[0, :], 0.0)

    y = _conv3x3_im2col(pad_ref, col_ref, w_ref)                        # (Hp*Wp, Cout) f32
    _partial_bn_stats(y, st_ref)
    y2_ref[...] = y.reshape(Hp, Wp, Cout)


# --------------------------------------------------------------------------------------
# Stage C: BN2 apply + ReLU
# --------------------------------------------------------------------------------------
def _bn2_relu_kernel(y2_ref, sc_ref, sh_ref, o_ref):
    o_ref[...] = jnp.maximum(y2_ref[...] * sc_ref[0, :] + sh_ref[0, :], 0.0)


# --------------------------------------------------------------------------------------
# Wrapper
# --------------------------------------------------------------------------------------
def _bn_scale_shift(stats, gamma, beta, count_per_tile):
    """Chan/Welford parallel combine of per-tile (sum, centered M2) -> per-channel scale/shift."""
    sums, m2s = stats[:, 0, :], stats[:, 1, :]                          # (T, C)
    n_t = float(count_per_tile)
    total = float(stats.shape[0] * count_per_tile)
    mean = jnp.sum(sums, axis=0) / total
    mean_t = sums / n_t
    var = (jnp.sum(m2s, axis=0) + n_t * jnp.sum((mean_t - mean) ** 2, axis=0)) / total
    scale = gamma * lax.rsqrt(var + EPS)                                # biased var (PyTorch BN)
    shift = beta - mean * scale
    return scale.reshape(1, -1), shift.reshape(1, -1)


@functools.partial(jax.jit, static_argnames=("compute_dtype",))
def down_forward(x_nchw, params, *, compute_dtype=jnp.bfloat16):
    """Pallas Down forward. x_nchw: (N, Cin, H, W) -> (N, Cout, H//2, W//2) f32."""
    w1, g1, b1, w2, g2, b2 = params                  # PyTorch layouts (OIHW weights, (C,) affine)
    N, Cin, H, W = x_nchw.shape
    Cout = w1.shape[0]
    Hp, Wp = H // 2, W // 2
    Cip, Cop = _round_up(Cin, LANE), _round_up(Cout, LANE)
    M = Hp * Wp
    cparams = pltpu.CompilerParams(dimension_semantics=("parallel",),
                                   vmem_limit_bytes=_vmem_limit_bytes())

    # ---- wrapper-side layout plumbing: NCHW -> lane-dense NHWC, channels padded to 128 ----
    xp = jnp.transpose(x_nchw, (0, 2, 3, 1)).astype(jnp.float32)
    xp = jnp.pad(xp, ((0, 0), (0, 0), (0, 0), (0, Cip - Cin)))
    # (N, 2*Hp, 2*Wp, Cip) -> (N*Hp, 2, Wp, 2*Cip): in-kernel pool needs no strided slices.
    x_pool = xp.reshape(N, Hp, 2, Wp, 2, Cip).reshape(N * Hp, 2, Wp, 2 * Cip)

    def conv_weight(w, ci, cip, co, cop):
        # OIHW -> im2col (9*cip, cop): row = (ky*3 + kx)*cip + ci_idx, col = co_idx
        wt = jnp.transpose(w, (2, 3, 1, 0)).astype(jnp.float32)
        wt = jnp.pad(wt, ((0, 0), (0, 0), (0, cip - ci), (0, cop - co)))
        return wt.reshape(9 * cip, cop).astype(compute_dtype)

    w1k = conv_weight(w1, Cin, Cip, Cout, Cop)
    w2k = conv_weight(w2, Cout, Cop, Cout, Cop)
    g1p = jnp.pad(g1.astype(jnp.float32), (0, Cop - Cout))
    b1p = jnp.pad(b1.astype(jnp.float32), (0, Cop - Cout))
    g2p = jnp.pad(g2.astype(jnp.float32), (0, Cop - Cout))
    b2p = jnp.pad(b2.astype(jnp.float32), (0, Cop - Cout))

    act_spec = pl.BlockSpec((Hp, Wp, Cop), lambda n: (n, 0, 0))
    vec_spec = pl.BlockSpec((1, Cop), lambda n: (0, 0))
    st_spec = pl.BlockSpec((None, 2, Cop), lambda n: (n, 0, 0))

    # ---- stage A: maxpool + conv1 + partial BN1 stats --------------------------------------
    y1, st1 = pl.pallas_call(
        _pool_conv1_kernel,
        grid=(N,),
        in_specs=[pl.BlockSpec((Hp, 2, Wp, 2 * Cip), lambda n: (n, 0, 0, 0)),
                  pl.BlockSpec((9 * Cip, Cop), lambda n: (0, 0))],
        out_specs=[act_spec, st_spec],
        out_shape=[jax.ShapeDtypeStruct((N * Hp, Wp, Cop), jnp.float32),
                   jax.ShapeDtypeStruct((N, 2, Cop), jnp.float32)],
        scratch_shapes=[pltpu.VMEM((Hp + 2, Wp + 2, Cip), jnp.float32),
                        pltpu.VMEM((M, 9 * Cip), compute_dtype)],
        compiler_params=cparams,
    )(x_pool, w1k)
    sc1, sh1 = _bn_scale_shift(st1, g1p, b1p, M)

    # ---- stage B: BN1+ReLU -> conv2 + partial BN2 stats ------------------------------------
    y2, st2 = pl.pallas_call(
        _bn1_conv2_kernel,
        grid=(N,),
        in_specs=[act_spec, vec_spec, vec_spec,
                  pl.BlockSpec((9 * Cop, Cop), lambda n: (0, 0))],
        out_specs=[act_spec, st_spec],
        out_shape=[jax.ShapeDtypeStruct((N * Hp, Wp, Cop), jnp.float32),
                   jax.ShapeDtypeStruct((N, 2, Cop), jnp.float32)],
        scratch_shapes=[pltpu.VMEM((Hp + 2, Wp + 2, Cop), jnp.float32),
                        pltpu.VMEM((M, 9 * Cop), compute_dtype)],
        compiler_params=cparams,
    )(y1, sc1, sh1, w2k)
    sc2, sh2 = _bn_scale_shift(st2, g2p, b2p, M)

    # ---- stage C: BN2 + ReLU ---------------------------------------------------------------
    out = pl.pallas_call(
        _bn2_relu_kernel,
        grid=(N,),
        in_specs=[act_spec, vec_spec, vec_spec],
        out_specs=act_spec,
        out_shape=jax.ShapeDtypeStruct((N * Hp, Wp, Cop), jnp.float32),
        compiler_params=cparams,
    )(y2, sc2, sh2)

    out = out.reshape(N, Hp, Wp, Cop)[:, :, :, :Cout]
    return jnp.transpose(out, (0, 3, 1, 2))


# --------------------------------------------------------------------------------------
# Pure-JAX reference (XLA conv) for correctness checking
# --------------------------------------------------------------------------------------
def down_reference(x_nchw, params):
    w1, g1, b1, w2, g2, b2 = params
    x = jnp.transpose(x_nchw, (0, 2, 3, 1)).astype(jnp.float32)
    x = lax.reduce_window(x, -jnp.inf, lax.max, (1, 2, 2, 1), (1, 2, 2, 1), 'VALID')

    def conv_bn_relu(x, w, g, b):
        wk = jnp.transpose(w, (2, 3, 1, 0)).astype(jnp.float32)   # HWIO
        y = lax.conv_general_dilated(x, wk, (1, 1), 'SAME',
                                     dimension_numbers=('NHWC', 'HWIO', 'NHWC'))
        mean = jnp.mean(y, axis=(0, 1, 2), keepdims=True)
        var = jnp.mean((y - mean) ** 2, axis=(0, 1, 2), keepdims=True)
        y = (y - mean) * lax.rsqrt(var + EPS) * g.reshape(1, 1, 1, -1) + b.reshape(1, 1, 1, -1)
        return jnp.maximum(y, 0.0)

    x = conv_bn_relu(x, w1, g1, b1)
    x = conv_bn_relu(x, w2, g2, b2)
    return jnp.transpose(x, (0, 3, 1, 2))


if __name__ == "__main__":
    N, Cin, Cout, H, W = 2, 4, 8, 16, 16

    key = jax.random.PRNGKey(0)
    kx, k1, k2, kg1, kb1, kg2, kb2 = jax.random.split(key, 7)

    x = jax.random.normal(kx, (N, Cin, H, W), jnp.float32)
    # deterministic synthetic parameters (shapes follow nn.Conv2d / nn.BatchNorm2d)
    w1 = jax.random.normal(k1, (Cout, Cin, 3, 3), jnp.float32) * 0.2
    w2 = jax.random.normal(k2, (Cout, Cout, 3, 3), jnp.float32) * 0.2
    g1 = 1.0 + 0.1 * jax.random.normal(kg1, (Cout,), jnp.float32)
    b1 = 0.1 * jax.random.normal(kb1, (Cout,), jnp.float32)
    g2 = 1.0 + 0.1 * jax.random.normal(kg2, (Cout,), jnp.float32)
    b2 = 0.1 * jax.random.normal(kb2, (Cout,), jnp.float32)
    params = (w1, g1, b1, w2, g2, b2)

    ref = jax.block_until_ready(down_reference(x, params))

    # strict f32-MXU path: matches PyTorch f32 numerics
    out_f32 = jax.block_until_ready(down_forward(x, params, compute_dtype=jnp.float32))
    assert out_f32.shape == (N, Cout, H // 2, W // 2), out_f32.shape
    assert jnp.allclose(out_f32, ref, atol=1e-4, rtol=1e-4), \
        float(jnp.max(jnp.abs(out_f32 - ref)))

    # bf16-MXU path (production default; f32 accumulation): looser tolerance
    out_bf16 = jax.block_until_ready(down_forward(x, params, compute_dtype=jnp.bfloat16))
    assert out_bf16.shape == (N, Cout, H // 2, W // 2), out_bf16.shape
    assert jnp.allclose(out_bf16, ref, atol=5e-2, rtol=5e-2), \
        float(jnp.max(jnp.abs(out_bf16 - ref)))

    print("KERNEL_OK")
</pallas_src>

<mosaic_0001>
module attributes {stable_mosaic.version = 11 : i64} {
  func.func @_bn1_conv2_kernel(%arg0: i32, %arg1: memref<8x8x128xf32, #tpu.memory_space<vmem>>, %arg2: memref<1x128xf32, #tpu.memory_space<vmem>>, %arg3: memref<1x128xf32, #tpu.memory_space<vmem>>, %arg4: memref<1152x128xf32, #tpu.memory_space<vmem>>, %arg5: memref<8x8x128xf32, #tpu.memory_space<vmem>>, %arg6: memref<1x2x128xf32, #tpu.memory_space<vmem>>, %arg7: memref<10x10x128xf32, #tpu.memory_space<vmem>>, %arg8: memref<64x1152xf32, #tpu.memory_space<vmem>>) attributes {dimension_semantics = [#tpu.dimension_semantics<parallel>], iteration_bounds = array<i64: 2>, scalar_prefetch = 0 : i64, scratch_operands = 2 : i64, tpu.core_type = #tpu.core_type<tc>, window_params = [{transform_indices = @transform_0, window_bounds = array<i64: 8, 8, 128>}, {pipeline_mode = #tpu.pipeline_mode<synchronous>, transform_indices = @transform_1, window_bounds = array<i64: 1, 128>}, {pipeline_mode = #tpu.pipeline_mode<synchronous>, transform_indices = @transform_2, window_bounds = array<i64: 1, 128>}, {pipeline_mode = #tpu.pipeline_mode<synchronous>, transform_indices = @transform_3, window_bounds = array<i64: 1152, 128>}, {transform_indices = @transform_4, window_bounds = array<i64: 8, 8, 128>}, {transform_indices = @transform_5, window_bounds = array<i64: 1, 2, 128>}]} {
    %cst = arith.constant 0.000000e+00 : f32
    %0 = vector.broadcast %cst : f32 to vector<10x10x128xf32>
    %c0 = arith.constant 0 : index
    %c0_0 = arith.constant 0 : index
    %c0_1 = arith.constant 0 : index
    %1 = vector.load %arg7[%c0, %c0_0, %c0_1] : memref<10x10x128xf32, #tpu.memory_space<vmem>>, vector<10x10x128xf32>
    tpu.vector_store %arg7[%c0, %c0_0, %c0_1], %0 {strides = array<i32>} : memref<10x10x128xf32, #tpu.memory_space<vmem>>, vector<10x10x128xf32>,
    %c0_2 = arith.constant 0 : index
    %c0_3 = arith.constant 0 : index
    %c0_4 = arith.constant 0 : index
    %2 = vector.load %arg1[%c0_2, %c0_3, %c0_4] : memref<8x8x128xf32, #tpu.memory_space<vmem>>, vector<8x8x128xf32>
    %c0_5 = arith.constant 0 : index
    %c0_6 = arith.constant 0 : index
    %3 = vector.load %arg2[%c0_5, %c0_6] : memref<1x128xf32, #tpu.memory_space<vmem>>, vector<1x128xf32>
    %4 = vector.shape_cast %3 : vector<1x128xf32> to vector<128xf32>
    %5 = vector.shape_cast %4 : vector<128xf32> to vector<1x1x128xf32>
    %6 = vector.broadcast %5 : vector<1x1x128xf32> to vector<8x8x128xf32>
    %7 = arith.mulf %2, %6 : vector<8x8x128xf32>
    %c0_7 = arith.constant 0 : index
    %c0_8 = arith.constant 0 : index
    %8 = vector.load %arg3[%c0_7, %c0_8] : memref<1x128xf32, #tpu.memory_space<vmem>>, vector<1x128xf32>
    %9 = vector.shape_cast %8 : vector<1x128xf32> to vector<128xf32>
    %10 = vector.shape_cast %9 : vector<128xf32> to vector<1x1x128xf32>
    %11 = vector.broadcast %10 : vector<1x1x128xf32> to vector<8x8x128xf32>
    %12 = arith.addf %7, %11 : vector<8x8x128xf32>
    %cst_9 = arith.constant 0.000000e+00 : f32
    %13 = vector.broadcast %cst_9 : f32 to vector<8x8x128xf32>
    %14 = arith.maximumf %12, %13 : vector<8x8x128xf32>
    %c1 = arith.constant 1 : index
    %c1_10 = arith.constant 1 : index
    %c0_11 = arith.constant 0 : index
    %15 = vector.load %arg7[%c1, %c1_10, %c0_11] : memref<10x10x128xf32, #tpu.memory_space<vmem>>, vector<8x8x128xf32>
    tpu.vector_store %arg7[%c1, %c1_10, %c0_11], %14 {strides = array<i32>} : memref<10x10x128xf32, #tpu.memory_space<vmem>>, vector<8x8x128xf32>,
    %c0_12 = arith.constant 0 : index
    %c0_13 = arith.constant 0 : index
    %c0_14 = arith.constant 0 : index
    %16 = vector.load %arg7[%c0_12, %c0_13, %c0_14] : memref<10x10x128xf32, #tpu.memory_space<vmem>>, vector<8x8x128xf32>
    %17 = vector.shape_cast %16 : vector<8x8x128xf32> to vector<64x128xf32>
    %c0_15 = arith.constant 0 : index
    %c0_16 = arith.constant 0 : index
    %18 = vector.load %arg8[%c0_15, %c0_16] : memref<64x1152xf32, #tpu.memory_space<vmem>>, vector<64x128xf32>
    tpu.vector_store %arg8[%c0_15, %c0_16], %17 {strides = array<i32>} : memref<64x1152xf32, #tpu.memory_space<vmem>>, vector<64x128xf32>,
    %c0_17 = arith.constant 0 : index
    %c1_18 = arith.constant 1 : index
    %c0_19 = arith.constant 0 : index
    %19 = vector.load %arg7[%c0_17, %c1_18, %c0_19] : memref<10x10x128xf32, #tpu.memory_space<vmem>>, vector<8x8x128xf32>
    %20 = vector.shape_cast %19 : vector<8x8x128xf32> to vector<64x128xf32>
    %c0_20 = arith.constant 0 : index
    %c128 = arith.constant 128 : index
    %21 = vector.load %arg8[%c0_20, %c128] : memref<64x1152xf32, #tpu.memory_space<vmem>>, vector<64x128xf32>
    tpu.vector_store %arg8[%c0_20, %c128], %20 {strides = array<i32>} : memref<64x1152xf32, #tpu.memory_space<vmem>>, vector<64x128xf32>,
    %c0_21 = arith.constant 0 : index
    %c2 = arith.constant 2 : index
    %c0_22 = arith.constant 0 : index
    %22 = vector.load %arg7[%c0_21, %c2, %c0_22] : memref<10x10x128xf32, #tpu.memory_space<vmem>>, vector<8x8x128xf32>
    %23 = vector.shape_cast %22 : vector<8x8x128xf32> to vector<64x128xf32>
    %c0_23 = arith.constant 0 : index
    %c256 = arith.constant 256 : index
    %24 = vector.load %arg8[%c0_23, %c256] : memref<64x1152xf32, #tpu.memory_space<vmem>>, vector<64x128xf32>
    tpu.vector_store %arg8[%c0_23, %c256], %23 {strides = array<i32>} : memref<64x1152xf32, #tpu.memory_space<vmem>>, vector<64x128xf32>,
    %c1_24 = arith.constant 1 : index
    %c0_25 = arith.constant 0 : index
    %c0_26 = arith.constant 0 : index
    %25 = vector.load %arg7[%c1_24, %c0_25, %c0_26] : memref<10x10x128xf32, #tpu.memory_space<vmem>>, vector<8x8x128xf32>
    %26 = vector.shape_cast %25 : vector<8x8x128xf32> to vector<64x128xf32>
    %c0_27 = arith.constant 0 : index
    %c384 = arith.constant 384 : index
    %27 = vector.load %arg8[%c0_27, %c384] : memref<64x1152xf32, #tpu.memory_space<vmem>>, vector<64x128xf32>
    tpu.vector_store %arg8[%c0_27, %c384], %26 {strides = array<i32>} : memref<64x1152xf32, #tpu.memory_space<vmem>>, vector<64x128xf32>,
    %c1_28 = arith.constant 1 : index
    %c1_29 = arith.constant 1 : index
    %c0_30 = arith.constant 0 : index
    %28 = vector.load %arg7[%c1_28, %c1_29, %c0_30] : memref<10x10x128xf32, #tpu.memory_space<vmem>>, vector<8x8x128xf32>
    %29 = vector.shape_cast %28 : vector<8x8x128xf32> to vector<64x128xf32>
    %c0_31 = arith.constant 0 : index
    %c512 = arith.constant 512 : index
    %30 = vector.load %arg8[%c0_31, %c512] : memref<64x1152xf32, #tpu.memory_space<vmem>>, vector<64x128xf32>
    tpu.vector_store %arg8[%c0_31, %c512], %29 {strides = array<i32>} : memref<64x1152xf32, #tpu.memory_space<vmem>>, vector<64x128xf32>,
    %c1_32 = arith.constant 1 : index
    %c2_33 = arith.constant 2 : index
    %c0_34 = arith.constant 0 : index
    %31 = vector.load %arg7[%c1_32, %c2_33, %c0_34] : memref<10x10x128xf32, #tpu.memory_space<vmem>>, vector<8x8x128xf32>
    %32 = vector.shape_cast %31 : vector<8x8x128xf32> to vector<64x128xf32>
    %c0_35 = arith.constant 0 : index
    %c640 = arith.constant 640 : index
    %33 = vector.load %arg8[%c0_35, %c640] : memref<64x1152xf32, #tpu.memory_space<vmem>>, vector<64x128xf32>
    tpu.vector_store %arg8[%c0_35, %c640], %32 {strides = array<i32>} : memref<64x1152xf32, #tpu.memory_space<vmem>>, vector<64x128xf32>,
    %c2_36 = arith.constant 2 : index
    %c0_37 = arith.constant 0 : index
    %c0_38 = arith.constant 0 : index
    %34 = vector.load %arg7[%c2_36, %c0_37, %c0_38] : memref<10x10x128xf32, #tpu.memory_space<vmem>>, vector<8x8x128xf32>
    %35 = vector.shape_cast %34 : vector<8x8x128xf32> to vector<64x128xf32>
    %c0_39 = arith.constant 0 : index
    %c768 = arith.constant 768 : index
    %36 = vector.load %arg8[%c0_39, %c768] : memref<64x1152xf32, #tpu.memory_space<vmem>>, vector<64x128xf32>
    tpu.vector_store %arg8[%c0_39, %c768], %35 {strides = array<i32>} : memref<64x1152xf32, #tpu.memory_space<vmem>>, vector<64x128xf32>,
    %c2_40 = arith.constant 2 : index
    %c1_41 = arith.constant 1 : index
    %c0_42 = arith.constant 0 : index
    %37 = vector.load %arg7[%c2_40, %c1_41, %c0_42] : memref<10x10x128xf32, #tpu.memory_space<vmem>>, vector<8x8x128xf32>
    %38 = vector.shape_cast %37 : vector<8x8x128xf32> to vector<64x128xf32>
    %c0_43 = arith.constant 0 : index
    %c896 = arith.constant 896 : index
    %39 = vector.load %arg8[%c0_43, %c896] : memref<64x1152xf32, #tpu.memory_space<vmem>>, vector<64x128xf32>
    tpu.vector_store %arg8[%c0_43, %c896], %38 {strides = array<i32>} : memref<64x1152xf32, #tpu.memory_space<vmem>>, vector<64x128xf32>,
    %c2_44 = arith.constant 2 : index
    %c2_45 = arith.constant 2 : index
    %c0_46 = arith.constant 0 : index
    %40 = vector.load %arg7[%c2_44, %c2_45, %c0_46] : memref<10x10x128xf32, #tpu.memory_space<vmem>>, vector<8x8x128xf32>
    %41 = vector.shape_cast %40 : vector<8x8x128xf32> to vector<64x128xf32>
    %c0_47 = arith.constant 0 : index
    %c1024 = arith.constant 1024 : index
    %42 = vector.load %arg8[%c0_47, %c1024] : memref<64x1152xf32, #tpu.memory_space<vmem>>, vector<64x128xf32>
    tpu.vector_store %arg8[%c0_47, %c1024], %41 {strides = array<i32>} : memref<64x1152xf32, #tpu.memory_space<vmem>>, vector<64x128xf32>,
    %c0_48 = arith.constant 0 : index
    %c0_49 = arith.constant 0 : index
    %43 = vector.load %arg8[%c0_48, %c0_49] : memref<64x1152xf32, #tpu.memory_space<vmem>>, vector<64x1152xf32>
    %c0_50 = arith.constant 0 : index
    %c0_51 = arith.constant 0 : index
    %44 = vector.load %arg4[%c0_50, %c0_51] : memref<1152x128xf32, #tpu.memory_space<vmem>>, vector<1152x128xf32>
    %cst_52 = arith.constant dense<0.000000e+00> : vector<64x128xf32>
    %45 = tpu.matmul %43, %44, %cst_52 {dimension_numbers = #tpu.dot_dimension_numbers<[1], [0], [0], [1], [0, 0, 1, 1], [], []>} : vector<64x1152xf32>, vector<1152x128xf32>, vector<64x128xf32> -> vector<64x128xf32>
    %cst_53 = arith.constant dense<0.000000e+00> : vector<128xf32>
    %46 = vector.multi_reduction <add>, %45, %cst_53 [0] : vector<64x128xf32> to vector<128xf32>
    %47 = vector.shape_cast %46 : vector<128xf32> to vector<1x128xf32>
    %cst_54 = arith.constant 1.562500e-02 : f32
    %48 = vector.broadcast %cst_54 : f32 to vector<1x128xf32>
    %49 = arith.mulf %47, %48 : vector<1x128xf32>
    %50 = vector.broadcast %49 : vector<1x128xf32> to vector<64x128xf32>
    %51 = arith.subf %45, %50 : vector<64x128xf32>
    %c0_55 = arith.constant 0 : index
    %c0_56 = arith.constant 0 : index
    %c0_57 = arith.constant 0 : index
    %52 = vector.load %arg6[%c0_55, %c0_56, %c0_57] : memref<1x2x128xf32, #tpu.memory_space<vmem>>, vector<1x1x128xf32>
    %53 = vector.shape_cast %52 : vector<1x1x128xf32> to vector<1x128xf32>
    %54 = vector.shape_cast %47 : vector<1x128xf32> to vector<1x1x128xf32>
    tpu.vector_store %arg6[%c0_55, %c0_56, %c0_57], %54 {strides = array<i32>} : memref<1x2x128xf32, #tpu.memory_space<vmem>>, vector<1x1x128xf32>,
    %55 = arith.mulf %51, %51 : vector<64x128xf32>
    %cst_58 = arith.constant dense<0.000000e+00> : vector<128xf32>
    %56 = vector.multi_reduction <add>, %55, %cst_58 [0] : vector<64x128xf32> to vector<128xf32>
    %57 = vector.shape_cast %56 : vector<128xf32> to vector<1x128xf32>
    %c0_59 = arith.constant 0 : index
    %c1_60 = arith.constant 1 : index
    %c0_61 = arith.constant 0 : index
    %58 = vector.load %arg6[%c0_59, %c1_60, %c0_61] : memref<1x2x128xf32, #tpu.memory_space<vmem>>, vector<1x1x128xf32>
    %59 = vector.shape_cast %58 : vector<1x1x128xf32> to vector<1x128xf32>
    %60 = vector.shape_cast %57 : vector<1x128xf32> to vector<1x1x128xf32>
    tpu.vector_store %arg6[%c0_59, %c1_60, %c0_61], %60 {strides = array<i32>} : memref<1x2x128xf32, #tpu.memory_space<vmem>>, vector<1x1x128xf32>,
    %61 = vector.shape_cast %45 : vector<64x128xf32> to vector<8x8x128xf32>
    %c0_62 = arith.constant 0 : index
    %c0_63 = arith.constant 0 : index
    %c0_64 = arith.constant 0 : index
    %62 = vector.load %arg5[%c0_62, %c0_63, %c0_64] : memref<8x8x128xf32, #tpu.memory_space<vmem>>, vector<8x8x128xf32>
    tpu.vector_store %arg5[%c0_62, %c0_63, %c0_64], %61 {strides = array<i32>} : memref<8x8x128xf32, #tpu.memory_space<vmem>>, vector<8x8x128xf32>,
    return
  }
  func.func @transform_0(%arg0: i32) -> (i32, i32, i32) {
    %c0_i32 = arith.constant 0 : i32
    %c0_i32_0 = arith.constant 0 : i32
    %c0_i32_1 = arith.constant 0 : i32
    return %arg0, %c0_i32, %c0_i32_0 : i32, i32, i32
  }
  func.func @transform_1(%arg0: i32) -> (i32, i32) {
    %c0_i32 = arith.constant 0 : i32
    %c0_i32_0 = arith.constant 0 : i32
    %c0_i32_1 = arith.constant 0 : i32
    return %c0_i32, %c0_i32_0 : i32, i32
  }
  func.func @transform_2(%arg0: i32) -> (i32, i32) {
    %c0_i32 = arith.constant 0 : i32
    %c0_i32_0 = arith.constant 0 : i32
    %c0_i32_1 = arith.constant 0 : i32
    return %c0_i32, %c0_i32_0 : i32, i32
  }
  func.func @transform_3(%arg0: i32) -> (i32, i32) {
    %c0_i32 = arith.constant 0 : i32
    %c0_i32_0 = arith.constant 0 : i32
    %c0_i32_1 = arith.constant 0 : i32
    return %c0_i32, %c0_i32_0 : i32, i32
  }
  func.func @transform_4(%arg0: i32) -> (i32, i32, i32) {
    %c0_i32 = arith.constant 0 : i32
    %c0_i32_0 = arith.constant 0 : i32
    %c0_i32_1 = arith.constant 0 : i32
    return %arg0, %c0_i32, %c0_i32_0 : i32, i32, i32
  }
  func.func @transform_5(%arg0: i32) -> (i32, i32, i32) {
    %c0_i32 = arith.constant 0 : i32
    %c0_i32_0 = arith.constant 0 : i32
    %c0_i32_1 = arith.constant 0 : i32
    return %arg0, %c0_i32, %c0_i32_0 : i32, i32, i32
  }
}

module attributes {stable_mosaic.version = 11 : i64} {
  func.func @_pool_conv1_kernel(%arg0: i32, %arg1: memref<8x2x8x256xf32, #tpu.memory_space<vmem>>, %arg2: memref<1152x128xf32, #tpu.memory_space<vmem>>, %arg3: memref<8x8x128xf32, #tpu.memory_space<vmem>>, %arg4: memref<1x2x128xf32, #tpu.memory_space<vmem>>, %arg5: memref<10x10x128xf32, #tpu.memory_space<vmem>>, %arg6: memref<64x1152xf32, #tpu.memory_space<vmem>>) attributes {dimension_semantics = [#tpu.dimension_semantics<parallel>], iteration_bounds = array<i64: 2>, scalar_prefetch = 0 : i64, scratch_operands = 2 : i64, tpu.core_type = #tpu.core_type<tc>, window_params = [{transform_indices = @transform_0, window_bounds = array<i64: 8, 2, 8, 256>}, {pipeline_mode = #tpu.pipeline_mode<synchronous>, transform_indices = @transform_1, window_bounds = array<i64: 1152, 128>}, {transform_indices = @transform_2, window_bounds = array<i64: 8, 8, 128>}, {transform_indices = @transform_3, window_bounds = array<i64: 1, 2, 128>}]} {
    %c0 = arith.constant 0 : index
    %c0_0 = arith.constant 0 : index
    %c0_1 = arith.constant 0 : index
    %c0_2 = arith.constant 0 : index
    %0 = vector.load %arg1[%c0, %c0_0, %c0_1, %c0_2] : memref<8x2x8x256xf32, #tpu.memory_space<vmem>>, vector<8x2x8x256xf32>
    %1 = vector.extract_strided_slice %0 {offsets = [0, 0, 0, 0], sizes = [8, 1, 8, 256], strides = [1, 1, 1, 1]} : vector<8x2x8x256xf32> to vector<8x1x8x256xf32>
    %2 = vector.shape_cast %1 : vector<8x1x8x256xf32> to vector<8x8x256xf32>
    %3 = vector.extract_strided_slice %0 {offsets = [0, 1, 0, 0], sizes = [8, 1, 8, 256], strides = [1, 1, 1, 1]} : vector<8x2x8x256xf32> to vector<8x1x8x256xf32>
    %4 = vector.shape_cast %3 : vector<8x1x8x256xf32> to vector<8x8x256xf32>
    %5 = arith.maximumf %2, %4 : vector<8x8x256xf32>
    %6 = vector.extract_strided_slice %5 {offsets = [0, 0, 0], sizes = [8, 8, 128], strides = [1, 1, 1]} : vector<8x8x256xf32> to vector<8x8x128xf32>
    %7 = vector.extract_strided_slice %5 {offsets = [0, 0, 128], sizes = [8, 8, 128], strides = [1, 1, 1]} : vector<8x8x256xf32> to vector<8x8x128xf32>
    %8 = arith.maximumf %6, %7 : vector<8x8x128xf32>
    %cst = arith.constant 0.000000e+00 : f32
    %9 = vector.broadcast %cst : f32 to vector<10x10x128xf32>
    %c0_3 = arith.constant 0 : index
    %c0_4 = arith.constant 0 : index
    %c0_5 = arith.constant 0 : index
    %10 = vector.load %arg5[%c0_3, %c0_4, %c0_5] : memref<10x10x128xf32, #tpu.memory_space<vmem>>, vector<10x10x128xf32>
    tpu.vector_store %arg5[%c0_3, %c0_4, %c0_5], %9 {strides = array<i32>} : memref<10x10x128xf32, #tpu.memory_space<vmem>>, vector<10x10x128xf32>,
    %c1 = arith.constant 1 : index
    %c1_6 = arith.constant 1 : index
    %c0_7 = arith.constant 0 : index
    %11 = vector.load %arg5[%c1, %c1_6, %c0_7] : memref<10x10x128xf32, #tpu.memory_space<vmem>>, vector<8x8x128xf32>
    tpu.vector_store %arg5[%c1, %c1_6, %c0_7], %8 {strides = array<i32>} : memref<10x10x128xf32, #tpu.memory_space<vmem>>, vector<8x8x128xf32>,
    %c0_8 = arith.constant 0 : index
    %c0_9 = arith.constant 0 : index
    %c0_10 = arith.constant 0 : index
    %12 = vector.load %arg5[%c0_8, %c0_9, %c0_10] : memref<10x10x128xf32, #tpu.memory_space<vmem>>, vector<8x8x128xf32>
    %13 = vector.shape_cast %12 : vector<8x8x128xf32> to vector<64x128xf32>
    %c0_11 = arith.constant 0 : index
    %c0_12 = arith.constant 0 : index
    %14 = vector.load %arg6[%c0_11, %c0_12] : memref<64x1152xf32, #tpu.memory_space<vmem>>, vector<64x128xf32>
    tpu.vector_store %arg6[%c0_11, %c0_12], %13 {strides = array<i32>} : memref<64x1152xf32, #tpu.memory_space<vmem>>, vector<64x128xf32>,
    %c0_13 = arith.constant 0 : index
    %c1_14 = arith.constant 1 : index
    %c0_15 = arith.constant 0 : index
    %15 = vector.load %arg5[%c0_13, %c1_14, %c0_15] : memref<10x10x128xf32, #tpu.memory_space<vmem>>, vector<8x8x128xf32>
    %16 = vector.shape_cast %15 : vector<8x8x128xf32> to vector<64x128xf32>
    %c0_16 = arith.constant 0 : index
    %c128 = arith.constant 128 : index
    %17 = vector.load %arg6[%c0_16, %c128] : memref<64x1152xf32, #tpu.memory_space<vmem>>, vector<64x128xf32>
    tpu.vector_store %arg6[%c0_16, %c128], %16 {strides = array<i32>} : memref<64x1152xf32, #tpu.memory_space<vmem>>, vector<64x128xf32>,
    %c0_17 = arith.constant 0 : index
    %c2 = arith.constant 2 : index
    %c0_18 = arith.constant 0 : index
    %18 = vector.load %arg5[%c0_17, %c2, %c0_18] : memref<10x10x128xf32, #tpu.memory_space<vmem>>, vector<8x8x128xf32>
    %19 = vector.shape_cast %18 : vector<8x8x128xf32> to vector<64x128xf32>
    %c0_19 = arith.constant 0 : index
    %c256 = arith.constant 256 : index
    %20 = vector.load %arg6[%c0_19, %c256] : memref<64x1152xf32, #tpu.memory_space<vmem>>, vector<64x128xf32>
    tpu.vector_store %arg6[%c0_19, %c256], %19 {strides = array<i32>} : memref<64x1152xf32, #tpu.memory_space<vmem>>, vector<64x128xf32>,
    %c1_20 = arith.constant 1 : index
    %c0_21 = arith.constant 0 : index
    %c0_22 = arith.constant 0 : index
    %21 = vector.load %arg5[%c1_20, %c0_21, %c0_22] : memref<10x10x128xf32, #tpu.memory_space<vmem>>, vector<8x8x128xf32>
    %22 = vector.shape_cast %21 : vector<8x8x128xf32> to vector<64x128xf32>
    %c0_23 = arith.constant 0 : index
    %c384 = arith.constant 384 : index
    %23 = vector.load %arg6[%c0_23, %c384] : memref<64x1152xf32, #tpu.memory_space<vmem>>, vector<64x128xf32>
    tpu.vector_store %arg6[%c0_23, %c384], %22 {strides = array<i32>} : memref<64x1152xf32, #tpu.memory_space<vmem>>, vector<64x128xf32>,
    %c1_24 = arith.constant 1 : index
    %c1_25 = arith.constant 1 : index
    %c0_26 = arith.constant 0 : index
    %24 = vector.load %arg5[%c1_24, %c1_25, %c0_26] : memref<10x10x128xf32, #tpu.memory_space<vmem>>, vector<8x8x128xf32>
    %25 = vector.shape_cast %24 : vector<8x8x128xf32> to vector<64x128xf32>
    %c0_27 = arith.constant 0 : index
    %c512 = arith.constant 512 : index
    %26 = vector.load %arg6[%c0_27, %c512] : memref<64x1152xf32, #tpu.memory_space<vmem>>, vector<64x128xf32>
    tpu.vector_store %arg6[%c0_27, %c512], %25 {strides = array<i32>} : memref<64x1152xf32, #tpu.memory_space<vmem>>, vector<64x128xf32>,
    %c1_28 = arith.constant 1 : index
    %c2_29 = arith.constant 2 : index
    %c0_30 = arith.constant 0 : index
    %27 = vector.load %arg5[%c1_28, %c2_29, %c0_30] : memref<10x10x128xf32, #tpu.memory_space<vmem>>, vector<8x8x128xf32>
    %28 = vector.shape_cast %27 : vector<8x8x128xf32> to vector<64x128xf32>
    %c0_31 = arith.constant 0 : index
    %c640 = arith.constant 640 : index
    %29 = vector.load %arg6[%c0_31, %c640] : memref<64x1152xf32, #tpu.memory_space<vmem>>, vector<64x128xf32>
    tpu.vector_store %arg6[%c0_31, %c640], %28 {strides = array<i32>} : memref<64x1152xf32, #tpu.memory_space<vmem>>, vector<64x128xf32>,
    %c2_32 = arith.constant 2 : index
    %c0_33 = arith.constant 0 : index
    %c0_34 = arith.constant 0 : index
    %30 = vector.load %arg5[%c2_32, %c0_33, %c0_34] : memref<10x10x128xf32, #tpu.memory_space<vmem>>, vector<8x8x128xf32>
    %31 = vector.shape_cast %30 : vector<8x8x128xf32> to vector<64x128xf32>
    %c0_35 = arith.constant 0 : index
    %c768 = arith.constant 768 : index
    %32 = vector.load %arg6[%c0_35, %c768] : memref<64x1152xf32, #tpu.memory_space<vmem>>, vector<64x128xf32>
    tpu.vector_store %arg6[%c0_35, %c768], %31 {strides = array<i32>} : memref<64x1152xf32, #tpu.memory_space<vmem>>, vector<64x128xf32>,
    %c2_36 = arith.constant 2 : index
    %c1_37 = arith.constant 1 : index
    %c0_38 = arith.constant 0 : index
    %33 = vector.load %arg5[%c2_36, %c1_37, %c0_38] : memref<10x10x128xf32, #tpu.memory_space<vmem>>, vector<8x8x128xf32>
    %34 = vector.shape_cast %33 : vector<8x8x128xf32> to vector<64x128xf32>
    %c0_39 = arith.constant 0 : index
    %c896 = arith.constant 896 : index
    %35 = vector.load %arg6[%c0_39, %c896] : memref<64x1152xf32, #tpu.memory_space<vmem>>, vector<64x128xf32>
    tpu.vector_store %arg6[%c0_39, %c896], %34 {strides = array<i32>} : memref<64x1152xf32, #tpu.memory_space<vmem>>, vector<64x128xf32>,
    %c2_40 = arith.constant 2 : index
    %c2_41 = arith.constant 2 : index
    %c0_42 = arith.constant 0 : index
    %36 = vector.load %arg5[%c2_40, %c2_41, %c0_42] : memref<10x10x128xf32, #tpu.memory_space<vmem>>, vector<8x8x128xf32>
    %37 = vector.shape_cast %36 : vector<8x8x128xf32> to vector<64x128xf32>
    %c0_43 = arith.constant 0 : index
    %c1024 = arith.constant 1024 : index
    %38 = vector.load %arg6[%c0_43, %c1024] : memref<64x1152xf32, #tpu.memory_space<vmem>>, vector<64x128xf32>
    tpu.vector_store %arg6[%c0_43, %c1024], %37 {strides = array<i32>} : memref<64x1152xf32, #tpu.memory_space<vmem>>, vector<64x128xf32>,
    %c0_44 = arith.constant 0 : index
    %c0_45 = arith.constant 0 : index
    %39 = vector.load %arg6[%c0_44, %c0_45] : memref<64x1152xf32, #tpu.memory_space<vmem>>, vector<64x1152xf32>
    %c0_46 = arith.constant 0 : index
    %c0_47 = arith.constant 0 : index
    %40 = vector.load %arg2[%c0_46, %c0_47] : memref<1152x128xf32, #tpu.memory_space<vmem>>, vector<1152x128xf32>
    %cst_48 = arith.constant dense<0.000000e+00> : vector<64x128xf32>
    %41 = tpu.matmul %39, %40, %cst_48 {dimension_numbers = #tpu.dot_dimension_numbers<[1], [0], [0], [1], [0, 0, 1, 1], [], []>} : vector<64x1152xf32>, vector<1152x128xf32>, vector<64x128xf32> -> vector<64x128xf32>
    %cst_49 = arith.constant dense<0.000000e+00> : vector<128xf32>
    %42 = vector.multi_reduction <add>, %41, %cst_49 [0] : vector<64x128xf32> to vector<128xf32>
    %43 = vector.shape_cast %42 : vector<128xf32> to vector<1x128xf32>
    %cst_50 = arith.constant 1.562500e-02 : f32
    %44 = vector.broadcast %cst_50 : f32 to vector<1x128xf32>
    %45 = arith.mulf %43, %44 : vector<1x128xf32>
    %46 = vector.broadcast %45 : vector<1x128xf32> to vector<64x128xf32>
    %47 = arith.subf %41, %46 : vector<64x128xf32>
    %c0_51 = arith.constant 0 : index
    %c0_52 = arith.constant 0 : index
    %c0_53 = arith.constant 0 : index
    %48 = vector.load %arg4[%c0_51, %c0_52, %c0_53] : memref<1x2x128xf32, #tpu.memory_space<vmem>>, vector<1x1x128xf32>
    %49 = vector.shape_cast %48 : vector<1x1x128xf32> to vector<1x128xf32>
    %50 = vector.shape_cast %43 : vector<1x128xf32> to vector<1x1x128xf32>
    tpu.vector_store %arg4[%c0_51, %c0_52, %c0_53], %50 {strides = array<i32>} : memref<1x2x128xf32, #tpu.memory_space<vmem>>, vector<1x1x128xf32>,
    %51 = arith.mulf %47, %47 : vector<64x128xf32>
    %cst_54 = arith.constant dense<0.000000e+00> : vector<128xf32>
    %52 = vector.multi_reduction <add>, %51, %cst_54 [0] : vector<64x128xf32> to vector<128xf32>
    %53 = vector.shape_cast %52 : vector<128xf32> to vector<1x128xf32>
    %c0_55 = arith.constant 0 : index
    %c1_56 = arith.constant 1 : index
    %c0_57 = arith.constant 0 : index
    %54 = vector.load %arg4[%c0_55, %c1_56, %c0_57] : memref<1x2x128xf32, #tpu.memory_space<vmem>>, vector<1x1x128xf32>
    %55 = vector.shape_cast %54 : vector<1x1x128xf32> to vector<1x128xf32>
    %56 = vector.shape_cast %53 : vector<1x128xf32> to vector<1x1x128xf32>
    tpu.vector_store %arg4[%c0_55, %c1_56, %c0_57], %56 {strides = array<i32>} : memref<1x2x128xf32, #tpu.memory_space<vmem>>, vector<1x1x128xf32>,
    %57 = vector.shape_cast %41 : vector<64x128xf32> to vector<8x8x128xf32>
    %c0_58 = arith.constant 0 : index
    %c0_59 = arith.constant 0 : index
    %c0_60 = arith.constant 0 : index
    %58 = vector.load %arg3[%c0_58, %c0_59, %c0_60] : memref<8x8x128xf32, #tpu.memory_space<vmem>>, vector<8x8x128xf32>
    tpu.vector_store %arg3[%c0_58, %c0_59, %c0_60], %57 {strides = array<i32>} : memref<8x8x128xf32, #tpu.memory_space<vmem>>, vector<8x8x128xf32>,
    return
  }
  func.func @transform_0(%arg0: i32) -> (i32, i32, i32, i32) {
    %c0_i32 = arith.constant 0 : i32
    %c0_i32_0 = arith.constant 0 : i32
    %c0_i32_1 = arith.constant 0 : i32
    %c0_i32_2 = arith.constant 0 : i32
    return %arg0, %c0_i32, %c0_i32_0, %c0_i32_1 : i32, i32, i32, i32
  }
  func.func @transform_1(%arg0: i32) -> (i32, i32) {
    %c0_i32 = arith.constant 0 : i32
    %c0_i32_0 = arith.constant 0 : i32
    %c0_i32_1 = arith.constant 0 : i32
    return %c0_i32, %c0_i32_0 : i32, i32
  }
  func.func @transform_2(%arg0: i32) -> (i32, i32, i32) {
    %c0_i32 = arith.constant 0 : i32
    %c0_i32_0 = arith.constant 0 : i32
    %c0_i32_1 = arith.constant 0 : i32
    return %arg0, %c0_i32, %c0_i32_0 : i32, i32, i32
  }
  func.func @transform_3(%arg0: i32) -> (i32, i32, i32) {
    %c0_i32 = arith.constant 0 : i32
    %c0_i32_0 = arith.constant 0 : i32
    %c0_i32_1 = arith.constant 0 : i32
    return %arg0, %c0_i32, %c0_i32_0 : i32, i32, i32
  }
}

module attributes {stable_mosaic.version = 11 : i64} {
  func.func @_bn2_relu_kernel(%arg0: i32, %arg1: memref<8x8x128xf32, #tpu.memory_space<vmem>>, %arg2: memref<1x128xf32, #tpu.memory_space<vmem>>, %arg3: memref<1x128xf32, #tpu.memory_space<vmem>>, %arg4: memref<8x8x128xf32, #tpu.memory_space<vmem>>) attributes {dimension_semantics = [#tpu.dimension_semantics<parallel>], iteration_bounds = array<i64: 2>, scalar_prefetch = 0 : i64, scratch_operands = 0 : i64, tpu.core_type = #tpu.core_type<tc>, window_params = [{transform_indices = @transform_0, window_bounds = array<i64: 8, 8, 128>}, {pipeline_mode = #tpu.pipeline_mode<synchronous>, transform_indices = @transform_1, window_bounds = array<i64: 1, 128>}, {pipeline_mode = #tpu.pipeline_mode<synchronous>, transform_indices = @transform_2, window_bounds = array<i64: 1, 128>}, {transform_indices = @transform_3, window_bounds = array<i64: 8, 8, 128>}]} {
    %c0 = arith.constant 0 : index
    %c0_0 = arith.constant 0 : index
    %c0_1 = arith.constant 0 : index
    %0 = vector.load %arg1[%c0, %c0_0, %c0_1] : memref<8x8x128xf32, #tpu.memory_space<vmem>>, vector<8x8x128xf32>
    %c0_2 = arith.constant 0 : index
    %c0_3 = arith.constant 0 : index
    %1 = vector.load %arg2[%c0_2, %c0_3] : memref<1x128xf32, #tpu.memory_space<vmem>>, vector<1x128xf32>
    %2 = vector.shape_cast %1 : vector<1x128xf32> to vector<128xf32>
    %3 = vector.shape_cast %2 : vector<128xf32> to vector<1x1x128xf32>
    %4 = vector.broadcast %3 : vector<1x1x128xf32> to vector<8x8x128xf32>
    %5 = arith.mulf %0, %4 : vector<8x8x128xf32>
    %c0_4 = arith.constant 0 : index
    %c0_5 = arith.constant 0 : index
    %6 = vector.load %arg3[%c0_4, %c0_5] : memref<1x128xf32, #tpu.memory_space<vmem>>, vector<1x128xf32>
    %7 = vector.shape_cast %6 : vector<1x128xf32> to vector<128xf32>
    %8 = vector.shape_cast %7 : vector<128xf32> to vector<1x1x128xf32>
    %9 = vector.broadcast %8 : vector<1x1x128xf32> to vector<8x8x128xf32>
    %10 = arith.addf %5, %9 : vector<8x8x128xf32>
    %cst = arith.constant 0.000000e+00 : f32
    %11 = vector.broadcast %cst : f32 to vector<8x8x128xf32>
    %12 = arith.maximumf %10, %11 : vector<8x8x128xf32>
    %c0_6 = arith.constant 0 : index
    %c0_7 = arith.constant 0 : index
    %c0_8 = arith.constant 0 : index
    %13 = vector.load %arg4[%c0_6, %c0_7, %c0_8] : memref<8x8x128xf32, #tpu.memory_space<vmem>>, vector<8x8x128xf32>
    tpu.vector_store %arg4[%c0_6, %c0_7, %c0_8], %12 {strides = array<i32>} : memref<8x8x128xf32, #tpu.memory_space<vmem>>, vector<8x8x128xf32>,
    return
  }
  func.func @transform_0(%arg0: i32) -> (i32, i32, i32) {
    %c0_i32 = arith.constant 0 : i32
    %c0_i32_0 = arith.constant 0 : i32
    %c0_i32_1 = arith.constant 0 : i32
    return %arg0, %c0_i32, %c0_i32_0 : i32, i32, i32
  }
  func.func @transform_1(%arg0: i32) -> (i32, i32) {
    %c0_i32 = arith.constant 0 : i32
    %c0_i32_0 = arith.constant 0 : i32
    %c0_i32_1 = arith.constant 0 : i32
    return %c0_i32, %c0_i32_0 : i32, i32
  }
  func.func @transform_2(%arg0: i32) -> (i32, i32) {
    %c0_i32 = arith.constant 0 : i32
    %c0_i32_0 = arith.constant 0 : i32
    %c0_i32_1 = arith.constant 0 : i32
    return %c0_i32, %c0_i32_0 : i32, i32
  }
  func.func @transform_3(%arg0: i32) -> (i32, i32, i32) {
    %c0_i32 = arith.constant 0 : i32
    %c0_i32_0 = arith.constant 0 : i32
    %c0_i32_1 = arith.constant 0 : i32
    return %arg0, %c0_i32, %c0_i32_0 : i32, i32, i32
  }
}

</mosaic_0001>

<llo_original>
// kernel: down_forward.5
$region0: #{down_forward.5}
  #allocation0 [shape = 'u32[]', space=smem, size = 0x4, offset = 0x4, fixed_abs, tag = 'smem constant byte address 0x4 - core index']
  #allocation1 [shape = 'u32[144,128]{1,0:T(1,128)}', space=vmem, size = 0x12000, scoped, tag = 'internal scratch']
  %s0 = inlined_call_operand.vmem [shape: f32[16,8,128], index: 0, kind: input, shape index: {}]
  %s1 = inlined_call_operand.vmem [shape: f32[1,128], index: 1, kind: input, shape index: {}]
  %s2 = inlined_call_operand.vmem [shape: f32[1,128], index: 2, kind: input, shape index: {}]
  %s3 = inlined_call_operand.vmem [shape: f32[16,8,128], index: 3, kind: output, shape index: {}]
  %s4 = sld [smem:[#allocation0]]
  $region45: #{down_forward.5} parent=0
    _
  %s6 = ssub.s32 1, %s4
  %s7 = scalar_select 0, %s6, %s4
  loop: start=0, step=1, limit=4
  $region2: #{down_forward.5} parent=0 // loop_pre_header
    _
  $region3: #{down_forward.5} parent=0 // loop_header
    %s9 = sphi 0, %s13
    %p10 = scmp.ge.s32.totalorder %s9, 4
    %s19 = sphi 0, %s21
    %s22 = sphi 0, %s19
    %s23 = sphi 0, %s22
    %s39 = sphi 0, %s23
    %s43 = sphi 0, %s43
    %s45 = sphi 0, %s43
    %s46 = sphi 0, %s45
    %s60 = sphi 0, %s46
    %s64 = sphi 0, %s64
    %s66 = sphi 0, %s64
    %s67 = sphi 0, %s66
    %s81 = sphi 0, %s67
    %s87 = sphi 0, %s89
    %s90 = sphi 0, %s87
    %s91 = sphi 0, %s90
    %s107 = sphi 0, %s91
  $region4: #{down_forward.5} parent=0 // loop_header_branch
    %12 = sbr.rel (%p10) target = $region8
  $region5: #{down_forward.5} parent=0 // loop_body
    %s14 = ssub.s32 %s9, 1
    %s15 = ssub.s32 %s9, 2
    %s16 = sadd.s32 %s9, 1
    %s17 = ssub.s32 %s9, %s16
    %p18 = scmp.eq.s32.totalorder %s17, 0
    %s20 = sadd.s32 %s19, 1
    %s21 = scalar_select %p18, %s19, %s20
    %p24 = pneg %p18
    %p25 = scmp.eq.s32.totalorder %s9, 1
    %p26 = por %p24, %p25
    %p27 = scmp.ne.s32.totalorder %s19, %s22
    %p28 = scmp.eq.s32.totalorder %s9, 0
    %p29 = por %p27, %p28
    %p30 = scmp.ne.s32.totalorder %s19, %s22
    %p31 = scmp.eq.s32.totalorder %s14, 1
    %p32 = por %p30, %p31
    %p33 = scmp.ne.s32.totalorder %s22, %s23
    %p34 = scmp.eq.s32.totalorder %s14, 0
    %p35 = por %p33, %p34
    %p36 = scmp.ne.s32.totalorder %s22, %s23
    %p37 = scmp.eq.s32.totalorder %s15, 1
    %p38 = por %p36, %p37
    %p40 = scmp.ne.s32.totalorder %s23, %s39
    %p41 = scmp.eq.s32.totalorder %s15, 0
    %p42 = por %p40, %p41
    %s44 = sadd.s32 %s43, 1
    %p47 = scmp.eq.s32.totalorder %s9, 1
    %p48 = scmp.ne.s32.totalorder %s43, %s45
    %p49 = scmp.eq.s32.totalorder %s9, 0
    %p50 = por %p48, %p49
    %p51 = scmp.ne.s32.totalorder %s43, %s45
    %p52 = scmp.eq.s32.totalorder %s14, 1
    %p53 = por %p51, %p52
    %p54 = scmp.ne.s32.totalorder %s45, %s46
    %p55 = scmp.eq.s32.totalorder %s14, 0
    %p56 = por %p54, %p55
    %p57 = scmp.ne.s32.totalorder %s45, %s46
    %p58 = scmp.eq.s32.totalorder %s15, 1
    %p59 = por %p57, %p58
    %p61 = scmp.ne.s32.totalorder %s46, %s60
    %p62 = scmp.eq.s32.totalorder %s15, 0
    %p63 = por %p61, %p62
    %s65 = sadd.s32 %s64, 1
    %p68 = scmp.eq.s32.totalorder %s9, 1
    %p69 = scmp.ne.s32.totalorder %s64, %s66
    %p70 = scmp.eq.s32.totalorder %s9, 0
    %p71 = por %p69, %p70
    %p72 = scmp.ne.s32.totalorder %s64, %s66
    %p73 = scmp.eq.s32.totalorder %s14, 1
    %p74 = por %p72, %p73
    %p75 = scmp.ne.s32.totalorder %s66, %s67
    %p76 = scmp.eq.s32.totalorder %s14, 0
    %p77 = por %p75, %p76
    %p78 = scmp.ne.s32.totalorder %s66, %s67
    %p79 = scmp.eq.s32.totalorder %s15, 1
    %p80 = por %p78, %p79
    %p82 = scmp.ne.s32.totalorder %s67, %s81
    %p83 = scmp.eq.s32.totalorder %s15, 0
    %p84 = por %p82, %p83
    %s85 = ssub.s32 %s9, %s16
    %p86 = scmp.eq.s32.totalorder %s85, 0
    %s88 = sadd.s32 %s87, 1
    %s89 = scalar_select %p86, %s87, %s88
    %p92 = pneg %p86
    %p93 = scmp.eq.s32.totalorder %s9, 1
    %p94 = por %p92, %p93
    %p95 = scmp.ne.s32.totalorder %s87, %s90
    %p96 = scmp.eq.s32.totalorder %s9, 0
    %p97 = por %p95, %p96
    %p98 = scmp.ne.s32.totalorder %s87, %s90
    %p99 = scmp.eq.s32.totalorder %s14, 1
    %p100 = por %p98, %p99
    %p101 = scmp.ne.s32.totalorder %s90, %s91
    %p102 = scmp.eq.s32.totalorder %s14, 0
    %p103 = por %p101, %p102
    %p104 = scmp.ne.s32.totalorder %s90, %s91
    %p105 = scmp.eq.s32.totalorder %s15, 1
    %p106 = por %p104, %p105
    %p108 = scmp.ne.s32.totalorder %s91, %s107
    %p109 = scmp.eq.s32.totalorder %s15, 0
    %p110 = por %p108, %p109
    %p111 = scmp.le.s32.totalorder 1, %s9
    %p112 = scmp.lt.s32.totalorder %s9, 3
    %p113 = pnand %p111, %p112
    %p114 = pneg %p113
    // Predicated region
    $region9: #{down_forward.5} parent=5 // pred_check
      _
    $region10: #{down_forward.5} parent=5 // pred_check_branch
      %116 = sbr.rel (%p113) target = $region12
    $region11: #{down_forward.5} parent=5 // pred_region
      %s117 = ssub.s32 %s9, 1
      // Predicated region
      $region13: #{down_forward.5} parent=11 // pred_check
        %p118 = pneg %p56
      $region14: #{down_forward.5} parent=11 // pred_check_branch
        %120 = sbr.rel (%p118) target = $region16
      $region15: #{down_forward.5} parent=11 // pred_region
        _
      $region16: #{down_forward.5} parent=11 // pred_fallthru
        _
      // Predicated region
      $region17: #{down_forward.5} parent=11 // pred_check
        %p121 = pneg %p77
      $region18: #{down_forward.5} parent=11 // pred_check_branch
        %123 = sbr.rel (%p121) target = $region20
      $region19: #{down_forward.5} parent=11 // pred_region
        _
      $region20: #{down_forward.5} parent=11 // pred_fallthru
        _
    $region12: #{down_forward.5} parent=5 // pred_fallthru
      _
    %p124 = scmp.lt.s32.totalorder %s9, 2
    // Predicated region
    $region21: #{down_forward.5} parent=5 // pred_check
      %p125 = pneg %p124
    $region22: #{down_forward.5} parent=5 // pred_check_branch
      %127 = sbr.rel (%p125) target = $region24
    $region23: #{down_forward.5} parent=5 // pred_region
      // Predicated region
      $region25: #{down_forward.5} parent=23 // pred_check
        %p128 = pneg %p29
      $region26: #{down_forward.5} parent=23 // pred_check_branch
        %130 = sbr.rel (%p128) target = $region28
      $region27: #{down_forward.5} parent=23 // pred_region
        %s131 = smul.u32 8, %s9
        %p132 = scmp.lt.s32.totalorder %s131, 15
        %s133 = scalar_select %p132, %s131, 15
        %s134 = smul.addr %s133, 8
        %s135 = scalar_lea.vmem %s0, %s134
        %s136 = smul.u32 8, %s9
      $region28: #{down_forward.5} parent=23 // pred_fallthru
        _
    $region24: #{down_forward.5} parent=5 // pred_fallthru
      _
    %p137 = scmp.le.s32.totalorder 1, %s9
    %p138 = scmp.lt.s32.totalorder %s9, 3
    %p139 = pnand %p137, %p138
    %p140 = pneg %p139
    // Predicated region
    $region29: #{down_forward.5} parent=5 // pred_check
      _
    $region30: #{down_forward.5} parent=5 // pred_check_branch
      %142 = sbr.rel (%p139) target = $region32
    $region31: #{down_forward.5} parent=5 // pred_region
      %s143 = ssub.s32 %s9, 1
      %s144 = smul.u32 8, %s14
      %p145 = scmp.lt.s32.totalorder %s144, 15
      %s146 = scalar_select %p145, %s144, 15
      %s147 = smul.addr %s146, 8
      %s148 = scalar_lea.vmem %s0, %s147
      %p149 = pneg %p35
      %p150 = pneg %p32
      %p151 = pneg %p56
      %p152 = pneg %p53
      %p153 = pneg %p77
      %p154 = pneg %p74
      %p155 = pneg %p103
      %p156 = pneg %p100
      %s157 = smul.u32 8, %s14
      %p158 = scmp.lt.s32.totalorder %s157, 15
      %s159 = scalar_select %p158, %s157, 15
      %s160 = smul.addr %s159, 8
      %s161 = scalar_lea.vmem %s3, %s160
      %s162 = smul.u32 8, %s14
      %p163 = scmp.lt.s32.totalorder %s162, 15
      %s164 = scalar_select %p163, %s162, 15
      %s165 = smul.addr %s164, 8
      %s166 = scalar_lea.vmem %s0, %s165
      %s167 = smul.u32 8, %s14
      %s168 = smul.u32 8, %s14
      %p169 = scmp.lt.s32.totalorder %s168, 15
      %s170 = scalar_select %p169, %s168, 15
      %s171 = smul.addr %s170, 8
      %s172 = scalar_lea.vmem %s3, %s171
      %s173 = smul.u32 8, %s14
      %v174 = vld [vmem:[%s166] sm:$0xff]
      %v175 = vld [vmem:[%s166 + $0x8] sm:$0xff]
      %v176 = vld [vmem:[%s166 + $0x10] sm:$0xff]
      %v177 = vld [vmem:[%s166 + $0x18] sm:$0xff]
      %v178 = vld [vmem:[%s166 + $0x20] sm:$0xff]
      %v179 = vld [vmem:[%s166 + $0x28] sm:$0xff]
      %v180 = vld [vmem:[%s166 + $0x30] sm:$0xff]
      %v181 = vld [vmem:[%s166 + $0x38] sm:$0xff]
      %v182 = vld [vmem:[%s1] sm:$0x1]
      %v184 = vlaneseq
      %v185 = vshrl.u32 %v184, 7
      %v186 = vsub.s32 0, %v185
      %v187 = vrot.slane %v182, %v186
      %v189 = vmul.f32 %v174, %v187
      %v190 = vmul.f32 %v175, %v187
      %v191 = vmul.f32 %v176, %v187
      %v192 = vmul.f32 %v177, %v187
      %v193 = vmul.f32 %v178, %v187
      %v194 = vmul.f32 %v179, %v187
      %v195 = vmul.f32 %v180, %v187
      %v196 = vmul.f32 %v181, %v187
      %v197 = vld [vmem:[%s2] sm:$0x1]
      %v199 = vlaneseq
      %v200 = vshrl.u32 %v199, 7
      %v201 = vsub.s32 0, %v200
      %v202 = vrot.slane %v197, %v201
      %v204 = vadd.f32 %v189, %v202
      %v205 = vadd.f32 %v190, %v202
      %v206 = vadd.f32 %v191, %v202
      %v207 = vadd.f32 %v192, %v202
      %v208 = vadd.f32 %v193, %v202
      %v209 = vadd.f32 %v194, %v202
      %v210 = vadd.f32 %v195, %v202
      %v211 = vadd.f32 %v196, %v202
      %v212 = vmax.f32 %v204, 0.0
      %v213 = vmax.f32 %v205, 0.0
      %v214 = vmax.f32 %v206, 0.0
      %v215 = vmax.f32 %v207, 0.0
      %v216 = vmax.f32 %v208, 0.0
      %v217 = vmax.f32 %v209, 0.0
      %v218 = vmax.f32 %v210, 0.0
      %v219 = vmax.f32 %v211, 0.0
      %220 = vst [vmem:[%s172] sm:$0xff] %v212
      %221 = vst [vmem:[%s172 + $0x8] sm:$0xff] %v213
      %222 = vst [vmem:[%s172 + $0x10] sm:$0xff] %v214
      %223 = vst [vmem:[%s172 + $0x18] sm:$0xff] %v215
      %224 = vst [vmem:[%s172 + $0x20] sm:$0xff] %v216
      %225 = vst [vmem:[%s172 + $0x28] sm:$0xff] %v217
      %226 = vst [vmem:[%s172 + $0x30] sm:$0xff] %v218
      %227 = vst [vmem:[%s172 + $0x38] sm:$0xff] %v219
      %s228 = smul.u32 8, %s14
      %p229 = scmp.lt.s32.totalorder %s228, 15
      %s230 = scalar_select %p229, %s228, 15
      %s231 = smul.addr %s230, 8
      %s232 = scalar_lea.vmem %s3, %s231
      // Predicated region
      $region33: #{down_forward.5} parent=31 // pred_check
        %p233 = pneg %p100
      $region34: #{down_forward.5} parent=31 // pred_check_branch
        %235 = sbr.rel (%p233) target = $region36
      $region35: #{down_forward.5} parent=31 // pred_region
        %s236 = smul.u32 8, %s14
      $region36: #{down_forward.5} parent=31 // pred_fallthru
        _
    $region32: #{down_forward.5} parent=5 // pred_fallthru
      _
    %p237 = scmp.le.s32.totalorder 2, %s9
    // Predicated region
    $region37: #{down_forward.5} parent=5 // pred_check
      %p238 = pneg %p237
    $region38: #{down_forward.5} parent=5 // pred_check_branch
      %240 = sbr.rel (%p238) target = $region40
    $region39: #{down_forward.5} parent=5 // pred_region
      %s241 = ssub.s32 %s9, 2
      // Predicated region
      $region41: #{down_forward.5} parent=39 // pred_check
        %p242 = pneg %p106
      $region42: #{down_forward.5} parent=39 // pred_check_branch
        %244 = sbr.rel (%p242) target = $region44
      $region43: #{down_forward.5} parent=39 // pred_region
        %s245 = smul.u32 8, %s15
        %p246 = scmp.lt.s32.totalorder %s245, 15
        %s247 = scalar_select %p246, %s245, 15
        %s248 = smul.addr %s247, 8
        %s249 = scalar_lea.vmem %s3, %s248
      $region44: #{down_forward.5} parent=39 // pred_fallthru
        _
    $region40: #{down_forward.5} parent=5 // pred_fallthru
      _
  $region6: #{down_forward.5} parent=0 // loop_footer
    %s13 = sadd.s32 1, %s9
  $region7: #{down_forward.5} parent=0 // loop_footer_branch
    %8 = sbr.rel target = $region3
  $region8: #{down_forward.5} parent=0 // loop_exit
    _

// kernel: down_forward.3
$region0: #{down_forward.3}
  #allocation0 [shape = 'u32[]', space=smem, size = 0x4, offset = 0x4, fixed_abs, tag = 'smem constant byte address 0x4 - core index']
  #allocation1 [shape = 'u32[144,128]{1,0:T(1,128)}', space=vmem, size = 0x12000, scoped, tag = 'internal scratch']
  #allocation2 [shape = 'f32[10,10,128]{2,1,0:T(8,128)}', space=vmem, size = 0x14000, scoped, tag = 'scratch operand']
  #allocation3 [shape = 'f32[64,1152]{1,0:T(8,128)}', space=vmem, size = 0x48000, scoped, tag = 'scratch operand']
  %s0 = inlined_call_operand.vmem [shape: f32[16,2,8,256], index: 0, kind: input, shape index: {}]
  %s1 = inlined_call_operand.vmem [shape: f32[1152,128], index: 1, kind: input, shape index: {}]
  %s2 = inlined_call_operand.vmem [shape: f32[16,8,128], index: 2, kind: output, shape index: {0}]
  %s3 = inlined_call_operand.vmem [shape: f32[2,2,128], index: 3, kind: output, shape index: {1}]
  %4 = xla_tuple %s2, %s3
  %s5 = sld [smem:[#allocation0]]
  $region49: #{down_forward.3} parent=0
    _
  %s7 = ssub.s32 1, %s5
  %s8 = scalar_select 0, %s7, %s5
  loop: start=0, step=1, limit=4
  $region2: #{down_forward.3} parent=0 // loop_pre_header
    _
  $region3: #{down_forward.3} parent=0 // loop_header
    %s10 = sphi 0, %s14
    %p11 = scmp.ge.s32.totalorder %s10, 4
    %s20 = sphi 0, %s22
    %s23 = sphi 0, %s20
    %s24 = sphi 0, %s23
    %s40 = sphi 0, %s24
    %s44 = sphi 0, %s44
    %s46 = sphi 0, %s44
    %s47 = sphi 0, %s46
    %s61 = sphi 0, %s47
    %s67 = sphi 0, %s69
    %s70 = sphi 0, %s67
    %s71 = sphi 0, %s70
    %s87 = sphi 0, %s71
    %s93 = sphi 0, %s95
    %s96 = sphi 0, %s93
    %s97 = sphi 0, %s96
    %s113 = sphi 0, %s97
  $region4: #{down_forward.3} parent=0 // loop_header_branch
    %13 = sbr.rel (%p11) target = $region8
  $region5: #{down_forward.3} parent=0 // loop_body
    %s15 = ssub.s32 %s10, 1
    %s16 = ssub.s32 %s10, 2
    %s17 = sadd.s32 %s10, 1
    %s18 = ssub.s32 %s10, %s17
    %p19 = scmp.eq.s32.totalorder %s18, 0
    %s21 = sadd.s32 %s20, 1
    %s22 = scalar_select %p19, %s20, %s21
    %p25 = pneg %p19
    %p26 = scmp.eq.s32.totalorder %s10, 1
    %p27 = por %p25, %p26
    %p28 = scmp.ne.s32.totalorder %s20, %s23
    %p29 = scmp.eq.s32.totalorder %s10, 0
    %p30 = por %p28, %p29
    %p31 = scmp.ne.s32.totalorder %s20, %s23
    %p32 = scmp.eq.s32.totalorder %s15, 1
    %p33 = por %p31, %p32
    %p34 = scmp.ne.s32.totalorder %s23, %s24
    %p35 = scmp.eq.s32.totalorder %s15, 0
    %p36 = por %p34, %p35
    %p37 = scmp.ne.s32.totalorder %s23, %s24
    %p38 = scmp.eq.s32.totalorder %s16, 1
    %p39 = por %p37, %p38
    %p41 = scmp.ne.s32.totalorder %s24, %s40
    %p42 = scmp.eq.s32.totalorder %s16, 0
    %p43 = por %p41, %p42
    %s45 = sadd.s32 %s44, 1
    %p48 = scmp.eq.s32.totalorder %s10, 1
    %p49 = scmp.ne.s32.totalorder %s44, %s46
    %p50 = scmp.eq.s32.totalorder %s10, 0
    %p51 = por %p49, %p50
    %p52 = scmp.ne.s32.totalorder %s44, %s46
    %p53 = scmp.eq.s32.totalorder %s15, 1
    %p54 = por %p52, %p53
    %p55 = scmp.ne.s32.totalorder %s46, %s47
    %p56 = scmp.eq.s32.totalorder %s15, 0
    %p57 = por %p55, %p56
    %p58 = scmp.ne.s32.totalorder %s46, %s47
    %p59 = scmp.eq.s32.totalorder %s16, 1
    %p60 = por %p58, %p59
    %p62 = scmp.ne.s32.totalorder %s47, %s61
    %p63 = scmp.eq.s32.totalorder %s16, 0
    %p64 = por %p62, %p63
    %s65 = ssub.s32 %s10, %s17
    %p66 = scmp.eq.s32.totalorder %s65, 0
    %s68 = sadd.s32 %s67, 1
    %s69 = scalar_select %p66, %s67, %s68
    %p72 = pneg %p66
    %p73 = scmp.eq.s32.totalorder %s10, 1
    %p74 = por %p72, %p73
    %p75 = scmp.ne.s32.totalorder %s67, %s70
    %p76 = scmp.eq.s32.totalorder %s10, 0
    %p77 = por %p75, %p76
    %p78 = scmp.ne.s32.totalorder %s67, %s70
    %p79 = scmp.eq.s32.totalorder %s15, 1
    %p80 = por %p78, %p79
    %p81 = scmp.ne.s32.totalorder %s70, %s71
    %p82 = scmp.eq.s32.totalorder %s15, 0
    %p83 = por %p81, %p82
    %p84 = scmp.ne.s32.totalorder %s70, %s71
    %p85 = scmp.eq.s32.totalorder %s16, 1
    %p86 = por %p84, %p85
    %p88 = scmp.ne.s32.totalorder %s71, %s87
    %p89 = scmp.eq.s32.totalorder %s16, 0
    %p90 = por %p88, %p89
    %s91 = ssub.s32 %s10, %s17
    %p92 = scmp.eq.s32.totalorder %s91, 0
    %s94 = sadd.s32 %s93, 1
    %s95 = scalar_select %p92, %s93, %s94
    %p98 = pneg %p92
    %p99 = scmp.eq.s32.totalorder %s10, 1
    %p100 = por %p98, %p99
    %p101 = scmp.ne.s32.totalorder %s93, %s96
    %p102 = scmp.eq.s32.totalorder %s10, 0
    %p103 = por %p101, %p102
    %p104 = scmp.ne.s32.totalorder %s93, %s96
    %p105 = scmp.eq.s32.totalorder %s15, 1
    %p106 = por %p104, %p105
    %p107 = scmp.ne.s32.totalorder %s96, %s97
    %p108 = scmp.eq.s32.totalorder %s15, 0
    %p109 = por %p107, %p108
    %p110 = scmp.ne.s32.totalorder %s96, %s97
    %p111 = scmp.eq.s32.totalorder %s16, 1
    %p112 = por %p110, %p111
    %p114 = scmp.ne.s32.totalorder %s97, %s113
    %p115 = scmp.eq.s32.totalorder %s16, 0
    %p116 = por %p114, %p115
    %p117 = scmp.le.s32.totalorder 1, %s10
    %p118 = scmp.lt.s32.totalorder %s10, 3
    %p119 = pnand %p117, %p118
    %p120 = pneg %p119
    // Predicated region
    $region9: #{down_forward.3} parent=5 // pred_check
      _
    $region10: #{down_forward.3} parent=5 // pred_check_branch
      %122 = sbr.rel (%p119) target = $region12
    $region11: #{down_forward.3} parent=5 // pred_region
      %s123 = ssub.s32 %s10, 1
      // Predicated region
      $region13: #{down_forward.3} parent=11 // pred_check
        %p124 = pneg %p57
      $region14: #{down_forward.3} parent=11 // pred_check_branch
        %126 = sbr.rel (%p124) target = $region16
      $region15: #{down_forward.3} parent=11 // pred_region
        _
      $region16: #{down_forward.3} parent=11 // pred_fallthru
        _
    $region12: #{down_forward.3} parent=5 // pred_fallthru
      _
    %p127 = scmp.lt.s32.totalorder %s10, 2
    // Predicated region
    $region17: #{down_forward.3} parent=5 // pred_check
      %p128 = pneg %p127
    $region18: #{down_forward.3} parent=5 // pred_check_branch
      %130 = sbr.rel (%p128) target = $region20
    $region19: #{down_forward.3} parent=5 // pred_region
      // Predicated region
      $region21: #{down_forward.3} parent=19 // pred_check
        %p131 = pneg %p30
      $region22: #{down_forward.3} parent=19 // pred_check_branch
        %133 = sbr.rel (%p131) target = $region24
      $region23: #{down_forward.3} parent=19 // pred_region
        %s134 = smul.u32 8, %s10
        %p135 = scmp.lt.s32.totalorder %s134, 15
        %s136 = scalar_select %p135, %s134, 15
        %s137 = smul.addr %s136, 4
        %s138 = smul.addr %s137, 8
        %s139 = scalar_lea.vmem %s0, %s138
        %s140 = smul.u32 8, %s10
      $region24: #{down_forward.3} parent=19 // pred_fallthru
        _
    $region20: #{down_forward.3} parent=5 // pred_fallthru
      _
    %p141 = scmp.le.s32.totalorder 1, %s10
    %p142 = scmp.lt.s32.totalorder %s10, 3
    %p143 = pnand %p141, %p142
    %p144 = pneg %p143
    // Predicated region
    $region25: #{down_forward.3} parent=5 // pred_check
      _
    $region26: #{down_forward.3} parent=5 // pred_check_branch
      %146 = sbr.rel (%p143) target = $region28
    $region27: #{down_forward.3} parent=5 // pred_region
      %s147 = ssub.s32 %s10, 1
      %s148 = smul.u32 8, %s15
      %p149 = scmp.lt.s32.totalorder %s148, 15
      %s150 = scalar_select %p149, %s148, 15
      %s151 = smul.addr %s150, 4
      %s152 = smul.addr %s151, 8
      %s153 = scalar_lea.vmem %s0, %s152
      %p154 = pneg %p36
      %p155 = pneg %p33
      %p156 = pneg %p57
      %p157 = pneg %p54
      %p158 = pneg %p83
      %p159 = pneg %p80
      %s160 = smul.u32 8, %s15
      %p161 = scmp.lt.s32.totalorder %s160, 15
      %s162 = scalar_select %p161, %s160, 15
      %s163 = smul.addr %s162, 8
      %s164 = scalar_lea.vmem %s2, %s163
      %p165 = pneg %p109
      %p166 = pneg %p106
      %p167 = scmp.lt.s32.totalorder %s15, 1
      %s168 = scalar_select %p167, %s15, 1
      %s169 = smul.addr %s168, 2
      %s170 = scalar_lea.vmem %s3, %s169
      %s171 = smul.u32 8, %s15
      %p172 = scmp.lt.s32.totalorder %s171, 15
      %s173 = scalar_select %p172, %s171, 15
      %s174 = smul.addr %s173, 4
      %s175 = smul.addr %s174, 8
      %s176 = scalar_lea.vmem %s0, %s175
      %s177 = smul.u32 8, %s15
      %s178 = smul.u32 8, %s15
      %p179 = scmp.lt.s32.totalorder %s178, 15
      %s180 = scalar_select %p179, %s178, 15
      %s181 = smul.addr %s180, 8
      %s182 = scalar_lea.vmem %s2, %s181
      %s183 = smul.u32 8, %s15
      %p184 = scmp.lt.s32.totalorder %s15, 1
      %s185 = scalar_select %p184, %s15, 1
      %s186 = smul.addr %s185, 2
      %s187 = scalar_lea.vmem %s3, %s186
      %v188 = vld [vmem:[%s176] sm:$0xff]
      %v189 = vld [vmem:[%s176 + $0x8] sm:$0xff]
      %v190 = vld [vmem:[%s176 + $0x10] sm:$0xff]
      %v191 = vld [vmem:[%s176 + $0x18] sm:$0xff]
      %v192 = vld [vmem:[%s176 + $0x20] sm:$0xff]
      %v193 = vld [vmem:[%s176 + $0x28] sm:$0xff]
      %v194 = vld [vmem:[%s176 + $0x30] sm:$0xff]
      %v195 = vld [vmem:[%s176 + $0x38] sm:$0xff]
      %v196 = vld [vmem:[%s176 + $0x40] sm:$0xff]
      %v197 = vld [vmem:[%s176 + $0x48] sm:$0xff]
      %v198 = vld [vmem:[%s176 + $0x50] sm:$0xff]
      %v199 = vld [vmem:[%s176 + $0x58] sm:$0xff]
      %v200 = vld [vmem:[%s176 + $0x60] sm:$0xff]
      %v201 = vld [vmem:[%s176 + $0x68] sm:$0xff]
      %v202 = vld [vmem:[%s176 + $0x70] sm:$0xff]
      %v203 = vld [vmem:[%s176 + $0x78] sm:$0xff]
      %v204 = vld [vmem:[%s176 + $0x80] sm:$0xff]
      %v205 = vld [vmem:[%s176 + $0x88] sm:$0xff]
      %v206 = vld [vmem:[%s176 + $0x90] sm:$0xff]
      %v207 = vld [vmem:[%s176 + $0x98] sm:$0xff]
      %v208 = vld [vmem:[%s176 + $0xa0] sm:$0xff]
      %v209 = vld [vmem:[%s176 + $0xa8] sm:$0xff]
      %v210 = vld [vmem:[%s176 + $0xb0] sm:$0xff]
      %v211 = vld [vmem:[%s176 + $0xb8] sm:$0xff]
      %v212 = vld [vmem:[%s176 + $0xc0] sm:$0xff]
      %v213 = vld [vmem:[%s176 + $0xc8] sm:$0xff]
      %v214 = vld [vmem:[%s176 + $0xd0] sm:$0xff]
      %v215 = vld [vmem:[%s176 + $0xd8] sm:$0xff]
      %v216 = vld [vmem:[%s176 + $0xe0] sm:$0xff]
      %v217 = vld [vmem:[%s176 + $0xe8] sm:$0xff]
      %v218 = vld [vmem:[%s176 + $0xf0] sm:$0xff]
      %v219 = vld [vmem:[%s176 + $0xf8] sm:$0xff]
      %v220 = vmax.f32 %v188, %v190
      %v221 = vmax.f32 %v189, %v191
      %v222 = vmax.f32 %v192, %v194
      %v223 = vmax.f32 %v193, %v195
      %v224 = vmax.f32 %v196, %v198
      %v225 = vmax.f32 %v197, %v199
      %v226 = vmax.f32 %v200, %v202
      %v227 = vmax.f32 %v201, %v203
      %v228 = vmax.f32 %v204, %v206
      %v229 = vmax.f32 %v205, %v207
      %v230 = vmax.f32 %v208, %v210
      %v231 = vmax.f32 %v209, %v211
      %v232 = vmax.f32 %v212, %v214
      %v233 = vmax.f32 %v213, %v215
      %v234 = vmax.f32 %v216, %v218
      %v235 = vmax.f32 %v217, %v219
      %v236 = vmax.f32 %v220, %v221
      %v237 = vmax.f32 %v222, %v223
      %v238 = vmax.f32 %v224, %v225
      %v239 = vmax.f32 %v226, %v227
      %v240 = vmax.f32 %v228, %v229
      %v241 = vmax.f32 %v230, %v231
      %v242 = vmax.f32 %v232, %v233
      %v243 = vmax.f32 %v234, %v235
      %244 = vst [vmem:[#allocation2] sm:$0xff] 0.0
      %245 = vst [vmem:[#allocation2 + $0x8] sm:$0x3] 0.0
      %246 = vst [vmem:[#allocation2 + $0x10] sm:$0xff] 0.0
      %247 = vst [vmem:[#allocation2 + $0x18] sm:$0x3] 0.0
      %248 = vst [vmem:[#allocation2 + $0x20] sm:$0xff] 0.0
      %249 = vst [vmem:[#allocation2 + $0x28] sm:$0x3] 0.0
      %250 = vst [vmem:[#allocation2 + $0x30] sm:$0xff] 0.0
      %251 = vst [vmem:[#allocation2 + $0x38] sm:$0x3] 0.0
      %252 = vst [vmem:[#allocation2 + $0x40] sm:$0xff] 0.0
      %253 = vst [vmem:[#allocation2 + $0x48] sm:$0x3] 0.0
      %254 = vst [vmem:[#allocation2 + $0x50] sm:$0xff] 0.0
      %255 = vst [vmem:[#allocation2 + $0x58] sm:$0x3] 0.0
      %256 = vst [vmem:[#allocation2 + $0x60] sm:$0xff] 0.0
      %257 = vst [vmem:[#allocation2 + $0x68] sm:$0x3] 0.0
      %258 = vst [vmem:[#allocation2 + $0x70] sm:$0xff] 0.0
      %259 = vst [vmem:[#allocation2 + $0x78] sm:$0x3] 0.0
      %260 = vst [vmem:[#allocation2 + $0x80] sm:$0xff] 0.0
      %261 = vst [vmem:[#allocation2 + $0x88] sm:$0x3] 0.0
      %262 = vst [vmem:[#allocation2 + $0x90] sm:$0xff] 0.0
      %263 = vst [vmem:[#allocation2 + $0x98] sm:$0x3] 0.0
      %s264 = scalar_lea.vmem [#allocation2], 16
      %265 = vst [vmem:[%s264 + $0x1] sm:$0xff] %v236
      %266 = vst [vmem:[%s264 + $0x11] sm:$0xff] %v237
      %267 = vst [vmem:[%s264 + $0x21] sm:$0xff] %v238
      %268 = vst [vmem:[%s264 + $0x31] sm:$0xff] %v239
      %269 = vst [vmem:[%s264 + $0x41] sm:$0xff] %v240
      %270 = vst [vmem:[%s264 + $0x51] sm:$0xff] %v241
      %271 = vst [vmem:[%s264 + $0x61] sm:$0xff] %v242
      %272 = vst [vmem:[%s264 + $0x71] sm:$0xff] %v243
      %v273 = vld [vmem:[#allocation2] sm:$0xff]
      %v274 = vld [vmem:[#allocation2 + $0x10] sm:$0xff]
      %v275 = vld [vmem:[#allocation2 + $0x20] sm:$0xff]
      %v276 = vld [vmem:[#allocation2 + $0x30] sm:$0xff]
      %v277 = vld [vmem:[#allocation2 + $0x40] sm:$0xff]
      %v278 = vld [vmem:[#allocation2 + $0x50] sm:$0xff]
      %v279 = vld [vmem:[#allocation2 + $0x60] sm:$0xff]
      %v280 = vld [vmem:[#allocation2 + $0x70] sm:$0xff]
      %281 = vst [vmem:[#allocation3] sm:$0xff] %v273
      %282 = vst [vmem:[#allocation3 + $0x48] sm:$0xff] %v274
      %283 = vst [vmem:[#allocation3 + $0x90] sm:$0xff] %v275
      %284 = vst [vmem:[#allocation3 + $0xd8] sm:$0xff] %v276
      %285 = vst [vmem:[#allocation3 + $0x120] sm:$0xff] %v277
      %286 = vst [vmem:[#allocation3 + $0x168] sm:$0xff] %v278
      %287 = vst [vmem:[#allocation3 + $0x1b0] sm:$0xff] %v279
      %288 = vst [vmem:[#allocation3 + $0x1f8] sm:$0xff] %v280
      %v289 = vld [vmem:[#allocation2 + $0x1] sm:$0xff]
      %v290 = vld [vmem:[#allocation2 + $0x11] sm:$0xff]
      %v291 = vld [vmem:[#allocation2 + $0x21] sm:$0xff]
      %v292 = vld [vmem:[#allocation2 + $0x31] sm:$0xff]
      %v293 = vld [vmem:[#allocation2 + $0x41] sm:$0xff]
      %v294 = vld [vmem:[#allocation2 + $0x51] sm:$0xff]
      %v295 = vld [vmem:[#allocation2 + $0x61] sm:$0xff]
      %v296 = vld [vmem:[#allocation2 + $0x71] sm:$0xff]
      %297 = vst [vmem:[#allocation3 + $0x8] sm:$0xff] %v289
      %298 = vst [vmem:[#allocation3 + $0x50] sm:$0xff] %v290
      %299 = vst [vmem:[#allocation3 + $0x98] sm:$0xff] %v291
      %300 = vst [vmem:[#allocation3 + $0xe0] sm:$0xff] %v292
      %301 = vst [vmem:[#allocation3 + $0x128] sm:$0xff] %v293
      %302 = vst [vmem:[#allocation3 + $0x170] sm:$0xff] %v294
      %303 = vst [vmem:[#allocation3 + $0x1b8] sm:$0xff] %v295
      %304 = vst [vmem:[#allocation3 + $0x200] sm:$0xff] %v296
      %v305 = vld [vmem:[#allocation2 + $0x2] sm:$0xff]
      %v306 = vld [vmem:[#allocation2 + $0x12] sm:$0xff]
      %v307 = vld [vmem:[#allocation2 + $0x22] sm:$0xff]
      %v308 = vld [vmem:[#allocation2 + $0x32] sm:$0xff]
      %v309 = vld [vmem:[#allocation2 + $0x42] sm:$0xff]
      %v310 = vld [vmem:[#allocation2 + $0x52] sm:$0xff]
      %v311 = vld [vmem:[#allocation2 + $0x62] sm:$0xff]
      %v312 = vld [vmem:[#allocation2 + $0x72] sm:$0xff]
      %313 = vst [vmem:[#allocation3 + $0x10] sm:$0xff] %v305
      %314 = vst [vmem:[#allocation3 + $0x58] sm:$0xff] %v306
      %315 = vst [vmem:[#allocation3 + $0xa0] sm:$0xff] %v307
      %316 = vst [vmem:[#allocation3 + $0xe8] sm:$0xff] %v308
      %317 = vst [vmem:[#allocation3 + $0x130] sm:$0xff] %v309
      %318 = vst [vmem:[#allocation3 + $0x178] sm:$0xff] %v310
      %319 = vst [vmem:[#allocation3 + $0x1c0] sm:$0xff] %v311
      %320 = vst [vmem:[#allocation3 + $0x208] sm:$0xff] %v312
      %v321 = vld [vmem:[%s264] sm:$0xff]
      %v322 = vld [vmem:[%s264 + $0x10] sm:$0xff]
      %v323 = vld [vmem:[%s264 + $0x20] sm:$0xff]
      %v324 = vld [vmem:[%s264 + $0x30] sm:$0xff]
      %v325 = vld [vmem:[%s264 + $0x40] sm:$0xff]
      %v326 = vld [vmem:[%s264 + $0x50] sm:$0xff]
      %v327 = vld [vmem:[%s264 + $0x60] sm:$0xff]
      %v328 = vld [vmem:[%s264 + $0x70] sm:$0xff]
      %329 = vst [vmem:[#allocation3 + $0x18] sm:$0xff] %v321
      %330 = vst [vmem:[#allocation3 + $0x60] sm:$0xff] %v322
      %331 = vst [vmem:[#allocation3 + $0xa8] sm:$0xff] %v323
      %332 = vst [vmem:[#allocation3 + $0xf0] sm:$0xff] %v324
      %333 = vst [vmem:[#allocation3 + $0x138] sm:$0xff] %v325
      %334 = vst [vmem:[#allocation3 + $0x180] sm:$0xff] %v326
      %335 = vst [vmem:[#allocation3 + $0x1c8] sm:$0xff] %v327
      %336 = vst [vmem:[#allocation3 + $0x210] sm:$0xff] %v328
      %v337 = vld [vmem:[%s264 + $0x1] sm:$0xff]
      %v338 = vld [vmem:[%s264 + $0x11] sm:$0xff]
      %v339 = vld [vmem:[%s264 + $0x21] sm:$0xff]
      %v340 = vld [vmem:[%s264 + $0x31] sm:$0xff]
      %v341 = vld [vmem:[%s264 + $0x41] sm:$0xff]
      %v342 = vld [vmem:[%s264 + $0x51] sm:$0xff]
      %v343 = vld [vmem:[%s264 + $0x61] sm:$0xff]
      %v344 = vld [vmem:[%s264 + $0x71] sm:$0xff]
      %345 = vst [vmem:[#allocation3 + $0x20] sm:$0xff] %v337
      %346 = vst [vmem:[#allocation3 + $0x68] sm:$0xff] %v338
      %347 = vst [vmem:[#allocation3 + $0xb0] sm:$0xff] %v339
      %348 = vst [vmem:[#allocation3 + $0xf8] sm:$0xff] %v340
      %349 = vst [vmem:[#allocation3 + $0x140] sm:$0xff] %v341
      %350 = vst [vmem:[#allocation3 + $0x188] sm:$0xff] %v342
      %351 = vst [vmem:[#allocation3 + $0x1d0] sm:$0xff] %v343
      %352 = vst [vmem:[#allocation3 + $0x218] sm:$0xff] %v344
      %v353 = vld [vmem:[%s264 + $0x2] sm:$0xff]
      %v354 = vld [vmem:[%s264 + $0x12] sm:$0xff]
      %v355 = vld [vmem:[%s264 + $0x22] sm:$0xff]
      %v356 = vld [vmem:[%s264 + $0x32] sm:$0xff]
      %v357 = vld [vmem:[%s264 + $0x42] sm:$0xff]
      %v358 = vld [vmem:[%s264 + $0x52] sm:$0xff]
      %v359 = vld [vmem:[%s264 + $0x62] sm:$0xff]
      %v360 = vld [vmem:[%s264 + $0x72] sm:$0xff]
      %361 = vst [vmem:[#allocation3 + $0x28] sm:$0xff] %v353
      %362 = vst [vmem:[#allocation3 + $0x70] sm:$0xff] %v354
      %363 = vst [vmem:[#allocation3 + $0xb8] sm:$0xff] %v355
      %364 = vst [vmem:[#allocation3 + $0x100] sm:$0xff] %v356
      %365 = vst [vmem:[#allocation3 + $0x148] sm:$0xff] %v357
      %366 = vst [vmem:[#allocation3 + $0x190] sm:$0xff] %v358
      %367 = vst [vmem:[#allocation3 + $0x1d8] sm:$0xff] %v359
      %368 = vst [vmem:[#allocation3 + $0x220] sm:$0xff] %v360
      %s369 = scalar_lea.vmem [#allocation2], 32
      %v370 = vld [vmem:[%s369] sm:$0xff]
      %v371 = vld [vmem:[%s369 + $0x10] sm:$0xff]
      %v372 = vld [vmem:[%s369 + $0x20] sm:$0xff]
      %v373 = vld [vmem:[%s369 + $0x30] sm:$0xff]
      %v374 = vld [vmem:[%s369 + $0x40] sm:$0xff]
      %v375 = vld [vmem:[%s369 + $0x50] sm:$0xff]
      %v376 = vld [vmem:[%s369 + $0x60] sm:$0xff]
      %v377 = vld [vmem:[%s369 + $0x70] sm:$0xff]
      %378 = vst [vmem:[#allocation3 + $0x30] sm:$0xff] %v370
      %379 = vst [vmem:[#allocation3 + $0x78] sm:$0xff] %v371
      %380 = vst [vmem:[#allocation3 + $0xc0] sm:$0xff] %v372
      %381 = vst [vmem:[#allocation3 + $0x108] sm:$0xff] %v373
      %382 = vst [vmem:[#allocation3 + $0x150] sm:$0xff] %v374
      %383 = vst [vmem:[#allocation3 + $0x198] sm:$0xff] %v375
      %384 = vst [vmem:[#allocation3 + $0x1e0] sm:$0xff] %v376
      %385 = vst [vmem:[#allocation3 + $0x228] sm:$0xff] %v377
      %v386 = vld [vmem:[%s369 + $0x1] sm:$0xff]
      %v387 = vld [vmem:[%s369 + $0x11] sm:$0xff]
      %v388 = vld [vmem:[%s369 + $0x21] sm:$0xff]
      %v389 = vld [vmem:[%s369 + $0x31] sm:$0xff]
      %v390 = vld [vmem:[%s369 + $0x41] sm:$0xff]
      %v391 = vld [vmem:[%s369 + $0x51] sm:$0xff]
      %v392 = vld [vmem:[%s369 + $0x61] sm:$0xff]
      %v393 = vld [vmem:[%s369 + $0x71] sm:$0xff]
      %394 = vst [vmem:[#allocation3 + $0x38] sm:$0xff] %v386
      %395 = vst [vmem:[#allocation3 + $0x80] sm:$0xff] %v387
      %396 = vst [vmem:[#allocation3 + $0xc8] sm:$0xff] %v388
      %397 = vst [vmem:[#allocation3 + $0x110] sm:$0xff] %v389
      %398 = vst [vmem:[#allocation3 + $0x158] sm:$0xff] %v390
      %399 = vst [vmem:[#allocation3 + $0x1a0] sm:$0xff] %v391
      %400 = vst [vmem:[#allocation3 + $0x1e8] sm:$0xff] %v392
      %401 = vst [vmem:[#allocation3 + $0x230] sm:$0xff] %v393
      %v402 = vld [vmem:[%s369 + $0x2] sm:$0xff]
      %v403 = vld [vmem:[%s369 + $0x12] sm:$0xff]
      %v404 = vld [vmem:[%s369 + $0x22] sm:$0xff]
      %v405 = vld [vmem:[%s369 + $0x32] sm:$0xff]
      %v406 = vld [vmem:[%s369 + $0x42] sm:$0xff]
      %v407 = vld [vmem:[%s369 + $0x52] sm:$0xff]
      %v408 = vld [vmem:[%s369 + $0x62] sm:$0xff]
      %v409 = vld [vmem:[%s369 + $0x72] sm:$0xff]
      %410 = vst [vmem:[#allocation3 + $0x40] sm:$0xff] %v402
      %411 = vst [vmem:[#allocation3 + $0x88] sm:$0xff] %v403
      %412 = vst [vmem:[#allocation3 + $0xd0] sm:$0xff] %v404
      %413 = vst [vmem:[#allocation3 + $0x118] sm:$0xff] %v405
      %414 = vst [vmem:[#allocation3 + $0x160] sm:$0xff] %v406
      %415 = vst [vmem:[#allocation3 + $0x1a8] sm:$0xff] %v407
      %416 = vst [vmem:[#allocation3 + $0x1f0] sm:$0xff] %v408
      %417 = vst [vmem:[#allocation3 + $0x238] sm:$0xff] %v409
      %v418 = vld [vmem:[#allocation3] sm:$0xff]
      %v419 = vld [vmem:[#allocation3 + $0x8] sm:$0xff]
      %v420 = vld [vmem:[#allocation3 + $0x10] sm:$0xff]
      %v421 = vld [vmem:[#allocation3 + $0x18] sm:$0xff]
      %v422 = vld [vmem:[#allocation3 + $0x20] sm:$0xff]
      %v423 = vld [vmem:[#allocation3 + $0x28] sm:$0xff]
      %v424 = vld [vmem:[#allocation3 + $0x30] sm:$0xff]
      %v425 = vld [vmem:[#allocation3 + $0x38] sm:$0xff]
      %v426 = vld [vmem:[#allocation3 + $0x40] sm:$0xff]
      %v427 = vld [vmem:[#allocation3 + $0x48] sm:$0xff]
      %v428 = vld [vmem:[#allocation3 + $0x50] sm:$0xff]
      %v429 = vld [vmem:[#allocation3 + $0x58] sm:$0xff]
      %v430 = vld [vmem:[#allocation3 + $0x60] sm:$0xff]
      %v431 = vld [vmem:[#allocation3 + $0x68] sm:$0xff]
      %v432 = vld [vmem:[#allocation3 + $0x70] sm:$0xff]
      %v433 = vld [vmem:[#allocation3 + $0x78] sm:$0xff]
      %v434 = vld [vmem:[#allocation3 + $0x80] sm:$0xff]
      %v435 = vld [vmem:[#allocation3 + $0x88] sm:$0xff]
      %v436 = vld [vmem:[#allocation3 + $0x90] sm:$0xff]
      %v437 = vld [vmem:[#allocation3 + $0x98] sm:$0xff]
      %v438 = vld [vmem:[#allocation3 + $0xa0] sm:$0xff]
      %v439 = vld [vmem:[#allocation3 + $0xa8] sm:$0xff]
      %v440 = vld [vmem:[#allocation3 + $0xb0] sm:$0xff]
      %v441 = vld [vmem:[#allocation3 + $0xb8] sm:$0xff]
      %v442 = vld [vmem:[#allocation3 + $0xc0] sm:$0xff]
      %v443 = vld [vmem:[#allocation3 + $0xc8] sm:$0xff]
      %v444 = vld [vmem:[#allocation3 + $0xd0] sm:$0xff]
      %v445 = vld [vmem:[#allocation3 + $0xd8] sm:$0xff]
      %v446 = vld [vmem:[#allocation3 + $0xe0] sm:$0xff]
      %v447 = vld [vmem:[#allocation3 + $0xe8] sm:$0xff]
      %v448 = vld [vmem:[#allocation3 + $0xf0] sm:$0xff]
      %v449 = vld [vmem:[#allocation3 + $0xf8] sm:$0xff]
      %v450 = vld [vmem:[#allocation3 + $0x100] sm:$0xff]
      %v451 = vld [vmem:[#allocation3 + $0x108] sm:$0xff]
      %v452 = vld [vmem:[#allocation3 + $0x110] sm:$0xff]
      %v453 = vld [vmem:[#allocation3 + $0x118] sm:$0xff]
      %v454 = vld [vmem:[#allocation3 + $0x120] sm:$0xff]
      %v455 = vld [vmem:[#allocation3 + $0x128] sm:$0xff]
      %v456 = vld [vmem:[#allocation3 + $0x130] sm:$0xff]
      %v457 = vld [vmem:[#allocation3 + $0x138] sm:$0xff]
      %v458 = vld [vmem:[#allocation3 + $0x140] sm:$0xff]
      %v459 = vld [vmem:[#allocation3 + $0x148] sm:$0xff]
      %v460 = vld [vmem:[#allocation3 + $0x150] sm:$0xff]
      %v461 = vld [vmem:[#allocation3 + $0x158] sm:$0xff]
      %v462 = vld [vmem:[#allocation3 + $0x160] sm:$0xff]
      %v463 = vld [vmem:[#allocation3 + $0x168] sm:$0xff]
      %v464 = vld [vmem:[#allocation3 + $0x170] sm:$0xff]
      %v465 = vld [vmem:[#allocation3 + $0x178] sm:$0xff]
      %v466 = vld [vmem:[#allocation3 + $0x180] sm:$0xff]
      %v467 = vld [vmem:[#allocation3 + $0x188] sm:$0xff]
      %v468 = vld [vmem:[#allocation3 + $0x190] sm:$0xff]
      %v469 = vld [vmem:[#allocation3 + $0x198] sm:$0xff]
      %v470 = vld [vmem:[#allocation3 + $0x1a0] sm:$0xff]
      %v471 = vld [vmem:[#allocation3 + $0x1a8] sm:$0xff]
      %v472 = vld [vmem:[#allocation3 + $0x1b0] sm:$0xff]
      %v473 = vld [vmem:[#allocation3 + $0x1b8] sm:$0xff]
      %v474 = vld [vmem:[#allocation3 + $0x1c0] sm:$0xff]
      %v475 = vld [vmem:[#allocation3 + $0x1c8] sm:$0xff]
      %v476 = vld [vmem:[#allocation3 + $0x1d0] sm:$0xff]
      %v477 = vld [vmem:[#allocation3 + $0x1d8] sm:$0xff]
      %v478 = vld [vmem:[#allocation3 + $0x1e0] sm:$0xff]
      %v479 = vld [vmem:[#allocation3 + $0x1e8] sm:$0xff]
      %v480 = vld [vmem:[#allocation3 + $0x1f0] sm:$0xff]
      %v481 = vld [vmem:[#allocation3 + $0x1f8] sm:$0xff]
      %v482 = vld [vmem:[#allocation3 + $0x200] sm:$0xff]
      %v483 = vld [vmem:[#allocation3 + $0x208] sm:$0xff]
      %v484 = vld [vmem:[#allocation3 + $0x210] sm:$0xff]
      %v485 = vld [vmem:[#allocation3 + $0x218] sm:$0xff]
      %v486 = vld [vmem:[#allocation3 + $0x220] sm:$0xff]
      %v487 = vld [vmem:[#allocation3 + $0x228] sm:$0xff]
      %v488 = vld [vmem:[#allocation3 + $0x230] sm:$0xff]
      %v489 = vld [vmem:[#allocation3 + $0x238] sm:$0xff]
      %v490 = vld [vmem:[%s1] sm:$0xff]
      %v491 = vld [vmem:[%s1 + $0x8] sm:$0xff]
      %v492 = vld [vmem:[%s1 + $0x10] sm:$0xff]
      %v493 = vld [vmem:[%s1 + $0x18] sm:$0xff]
      %v494 = vld [vmem:[%s1 + $0x20] sm:$0xff]
      %v495 = vld [vmem:[%s1 + $0x28] sm:$0xff]
      %v496 = vld [vmem:[%s1 + $0x30] sm:$0xff]
      %v497 = vld [vmem:[%s1 + $0x38] sm:$0xff]
      %v498 = vld [vmem:[%s1 + $0x40] sm:$0xff]
      %v499 = vld [vmem:[%s1 + $0x48] sm:$0xff]
      %v500 = vld [vmem:[%s1 + $0x50] sm:$0xff]
      %v501 = vld [vmem:[%s1 + $0x58] sm:$0xff]
      %v502 = vld [vmem:[%s1 + $0x60] sm:$0xff]
      %v503 = vld [vmem:[%s1 + $0x68] sm:$0xff]
      %v504 = vld [vmem:[%s1 + $0x70] sm:$0xff]
      %v505 = vld [vmem:[%s1 + $0x78] sm:$0xff]
      %v506 = vld [vmem:[%s1 + $0x80] sm:$0xff]
      %v507 = vld [vmem:[%s1 + $0x88] sm:$0xff]
      %v508 = vld [vmem:[%s1 + $0x90] sm:$0xff]
      %v509 = vld [vmem:[%s1 + $0x98] sm:$0xff]
      %v510 = vld [vmem:[%s1 + $0xa0] sm:$0xff]
      %v511 = vld [vmem:[%s1 + $0xa8] sm:$0xff]
      %v512 = vld [vmem:[%s1 + $0xb0] sm:$0xff]
      %v513 = vld [vmem:[%s1 + $0xb8] sm:$0xff]
      %v514 = vld [vmem:[%s1 + $0xc0] sm:$0xff]
      %v515 = vld [vmem:[%s1 + $0xc8] sm:$0xff]
      %v516 = vld [vmem:[%s1 + $0xd0] sm:$0xff]
      %v517 = vld [vmem:[%s1 + $0xd8] sm:$0xff]
      %v518 = vld [vmem:[%s1 + $0xe0] sm:$0xff]
      %v519 = vld [vmem:[%s1 + $0xe8] sm:$0xff]
      %v520 = vld [vmem:[%s1 + $0xf0] sm:$0xff]
      %v521 = vld [vmem:[%s1 + $0xf8] sm:$0xff]
      %v522 = vld [vmem:[%s1 + $0x100] sm:$0xff]
      %v523 = vld [vmem:[%s1 + $0x108] sm:$0xff]
      %v524 = vld [vmem:[%s1 + $0x110] sm:$0xff]
      %v525 = vld [vmem:[%s1 + $0x118] sm:$0xff]
      %v526 = vld [vmem:[%s1 + $0x120] sm:$0xff]
      %v527 = vld [vmem:[%s1 + $0x128] sm:$0xff]
      %v528 = vld [vmem:[%s1 + $0x130] sm:$0xff]
      %v529 = vld [vmem:[%s1 + $0x138] sm:$0xff]
      %v530 = vld [vmem:[%s1 + $0x140] sm:$0xff]
      %v531 = vld [vmem:[%s1 + $0x148] sm:$0xff]
      %v532 = vld [vmem:[%s1 + $0x150] sm:$0xff]
      %v533 = vld [vmem:[%s1 + $0x158] sm:$0xff]
      %v534 = vld [vmem:[%s1 + $0x160] sm:$0xff]
      %v535 = vld [vmem:[%s1 + $0x168] sm:$0xff]
      %v536 = vld [vmem:[%s1 + $0x170] sm:$0xff]
      %v537 = vld [vmem:[%s1 + $0x178] sm:$0xff]
      %v538 = vld [vmem:[%s1 + $0x180] sm:$0xff]
      %v539 = vld [vmem:[%s1 + $0x188] sm:$0xff]
      %v540 = vld [vmem:[%s1 + $0x190] sm:$0xff]
      %v541 = vld [vmem:[%s1 + $0x198] sm:$0xff]
      %v542 = vld [vmem:[%s1 + $0x1a0] sm:$0xff]
      %v543 = vld [vmem:[%s1 + $0x1a8] sm:$0xff]
      %v544 = vld [vmem:[%s1 + $0x1b0] sm:$0xff]
      %v545 = vld [vmem:[%s1 + $0x1b8] sm:$0xff]
      %v546 = vld [vmem:[%s1 + $0x1c0] sm:$0xff]
      %v547 = vld [vmem:[%s1 + $0x1c8] sm:$0xff]
      %v548 = vld [vmem:[%s1 + $0x1d0] sm:$0xff]
      %v549 = vld [vmem:[%s1 + $0x1d8] sm:$0xff]
      %v550 = vld [vmem:[%s1 + $0x1e0] sm:$0xff]
      %v551 = vld [vmem:[%s1 + $0x1e8] sm:$0xff]
      %v552 = vld [vmem:[%s1 + $0x1f0] sm:$0xff]
      %v553 = vld [vmem:[%s1 + $0x1f8] sm:$0xff]
      %v554 = vld [vmem:[%s1 + $0x200] sm:$0xff]
      %v555 = vld [vmem:[%s1 + $0x208] sm:$0xff]
      %v556 = vld [vmem:[%s1 + $0x210] sm:$0xff]
      %v557 = vld [vmem:[%s1 + $0x218] sm:$0xff]
      %v558 = vld [vmem:[%s1 + $0x220] sm:$0xff]
      %v559 = vld [vmem:[%s1 + $0x228] sm:$0xff]
      %v560 = vld [vmem:[%s1 + $0x230] sm:$0xff]
      %v561 = vld [vmem:[%s1 + $0x238] sm:$0xff]
      %v562 = vld [vmem:[%s1 + $0x240] sm:$0xff]
      %v563 = vld [vmem:[%s1 + $0x248] sm:$0xff]
      %v564 = vld [vmem:[%s1 + $0x250] sm:$0xff]
      %v565 = vld [vmem:[%s1 + $0x258] sm:$0xff]
      %v566 = vld [vmem:[%s1 + $0x260] sm:$0xff]
      %v567 = vld [vmem:[%s1 + $0x268] sm:$0xff]
      %v568 = vld [vmem:[%s1 + $0x270] sm:$0xff]
      %v569 = vld [vmem:[%s1 + $0x278] sm:$0xff]
      %v570 = vld [vmem:[%s1 + $0x280] sm:$0xff]
      %v571 = vld [vmem:[%s1 + $0x288] sm:$0xff]
      %v572 = vld [vmem:[%s1 + $0x290] sm:$0xff]
      %v573 = vld [vmem:[%s1 + $0x298] sm:$0xff]
      %v574 = vld [vmem:[%s1 + $0x2a0] sm:$0xff]
      %v575 = vld [vmem:[%s1 + $0x2a8] sm:$0xff]
      %v576 = vld [vmem:[%s1 + $0x2b0] sm:$0xff]
      %v577 = vld [vmem:[%s1 + $0x2b8] sm:$0xff]
      %v578 = vld [vmem:[%s1 + $0x2c0] sm:$0xff]
      %v579 = vld [vmem:[%s1 + $0x2c8] sm:$0xff]
      %v580 = vld [vmem:[%s1 + $0x2d0] sm:$0xff]
      %v581 = vld [vmem:[%s1 + $0x2d8] sm:$0xff]
      %v582 = vld [vmem:[%s1 + $0x2e0] sm:$0xff]
      %v583 = vld [vmem:[%s1 + $0x2e8] sm:$0xff]
      %v584 = vld [vmem:[%s1 + $0x2f0] sm:$0xff]
      %v585 = vld [vmem:[%s1 + $0x2f8] sm:$0xff]
      %v586 = vld [vmem:[%s1 + $0x300] sm:$0xff]
      %v587 = vld [vmem:[%s1 + $0x308] sm:$0xff]
      %v588 = vld [vmem:[%s1 + $0x310] sm:$0xff]
      %v589 = vld [vmem:[%s1 + $0x318] sm:$0xff]
      %v590 = vld [vmem:[%s1 + $0x320] sm:$0xff]
      %v591 = vld [vmem:[%s1 + $0x328] sm:$0xff]
      %v592 = vld [vmem:[%s1 + $0x330] sm:$0xff]
      %v593 = vld [vmem:[%s1 + $0x338] sm:$0xff]
      %v594 = vld [vmem:[%s1 + $0x340] sm:$0xff]
      %v595 = vld [vmem:[%s1 + $0x348] sm:$0xff]
      %v596 = vld [vmem:[%s1 + $0x350] sm:$0xff]
      %v597 = vld [vmem:[%s1 + $0x358] sm:$0xff]
      %v598 = vld [vmem:[%s1 + $0x360] sm:$0xff]
      %v599 = vld [vmem:[%s1 + $0x368] sm:$0xff]
      %v600 = vld [vmem:[%s1 + $0x370] sm:$0xff]
      %v601 = vld [vmem:[%s1 + $0x378] sm:$0xff]
      %v602 = vld [vmem:[%s1 + $0x380] sm:$0xff]
      %v603 = vld [vmem:[%s1 + $0x388] sm:$0xff]
      %v604 = vld [vmem:[%s1 + $0x390] sm:$0xff]
      %v605 = vld [vmem:[%s1 + $0x398] sm:$0xff]
      %v606 = vld [vmem:[%s1 + $0x3a0] sm:$0xff]
      %v607 = vld [vmem:[%s1 + $0x3a8] sm:$0xff]
      %v608 = vld [vmem:[%s1 + $0x3b0] sm:$0xff]
      %v609 = vld [vmem:[%s1 + $0x3b8] sm:$0xff]
      %v610 = vld [vmem:[%s1 + $0x3c0] sm:$0xff]
      %v611 = vld [vmem:[%s1 + $0x3c8] sm:$0xff]
      %v612 = vld [vmem:[%s1 + $0x3d0] sm:$0xff]
      %v613 = vld [vmem:[%s1 + $0x3d8] sm:$0xff]
      %v614 = vld [vmem:[%s1 + $0x3e0] sm:$0xff]
      %v615 = vld [vmem:[%s1 + $0x3e8] sm:$0xff]
      %v616 = vld [vmem:[%s1 + $0x3f0] sm:$0xff]
      %v617 = vld [vmem:[%s1 + $0x3f8] sm:$0xff]
      %v618 = vld [vmem:[%s1 + $0x400] sm:$0xff]
      %v619 = vld [vmem:[%s1 + $0x408] sm:$0xff]
      %v620 = vld [vmem:[%s1 + $0x410] sm:$0xff]
      %v621 = vld [vmem:[%s1 + $0x418] sm:$0xff]
      %v622 = vld [vmem:[%s1 + $0x420] sm:$0xff]
      %v623 = vld [vmem:[%s1 + $0x428] sm:$0xff]
      %v624 = vld [vmem:[%s1 + $0x430] sm:$0xff]
      %v625 = vld [vmem:[%s1 + $0x438] sm:$0xff]
      %v626 = vld [vmem:[%s1 + $0x440] sm:$0xff]
      %v627 = vld [vmem:[%s1 + $0x448] sm:$0xff]
      %v628 = vld [vmem:[%s1 + $0x450] sm:$0xff]
      %v629 = vld [vmem:[%s1 + $0x458] sm:$0xff]
      %v630 = vld [vmem:[%s1 + $0x460] sm:$0xff]
      %v631 = vld [vmem:[%s1 + $0x468] sm:$0xff]
      %v632 = vld [vmem:[%s1 + $0x470] sm:$0xff]
      %v633 = vld [vmem:[%s1 + $0x478] sm:$0xff]
      %634 = vmatprep.subr.mxu0 0.0
      %635 = vmatpush1.msra.mxu0 %v505
      %636 = vmatprep.subr.mxu0 0.0
      %637 = vmatpush1.msra.mxu0 %v504
      %638 = vmatprep.subr.mxu0 0.0
      %639 = vmatpush1.msra.mxu0 %v503
      %640 = vmatprep.subr.mxu0 0.0
      %641 = vmatpush1.msra.mxu0 %v502
      %642 = vmatprep.subr.mxu0 0.0
      %643 = vmatpush1.msra.mxu0 %v501
      %644 = vmatprep.subr.mxu0 0.0
      %645 = vmatpush1.msra.mxu0 %v500
      %646 = vmatprep.subr.mxu0 0.0
      %647 = vmatpush1.msra.mxu0 %v499
      %648 = vmatprep.subr.mxu0 0.0
      %649 = vmatpush1.msra.mxu0 %v498
      %650 = vmatprep.subr.mxu0 0.0
      %651 = vmatpush1.msra.mxu0 %v497
      %652 = vmatprep.subr.mxu0 0.0
      %653 = vmatpush1.msra.mxu0 %v496
      %654 = vmatprep.subr.mxu0 0.0
      %655 = vmatpush1.msra.mxu0 %v495
      %656 = vmatprep.subr.mxu0 0.0
      %657 = vmatpush1.msra.mxu0 %v494
      %658 = vmatprep.subr.mxu0 0.0
      %659 = vmatpush1.msra.mxu0 %v493
      %660 = vmatprep.subr.mxu0 0.0
      %661 = vmatpush1.msra.mxu0 %v492
      %662 = vmatprep.subr.mxu0 0.0
      %663 = vmatpush1.msra.mxu0 %v491
      %664 = vmatprep.subr.mxu0 0.0
      %665 = vmatpush1.msra.mxu0 %v490
      %666 = vmatprep.subr.mxu0 0.0
      %667 = vmatpush2.msra.mxu0 %v521
      %668 = vmatprep.subr.mxu0 0.0
      %669 = vmatpush2.msra.mxu0 %v520
      %670 = vmatprep.subr.mxu0 0.0
      %671 = vmatpush2.msra.mxu0 %v519
      %672 = vmatprep.subr.mxu0 0.0
      %673 = vmatpush2.msra.mxu0 %v518
      %674 = vmatprep.subr.mxu0 0.0
      %675 = vmatpush2.msra.mxu0 %v517
      %676 = vmatprep.subr.mxu0 0.0
      %677 = vmatpush2.msra.mxu0 %v516
      %678 = vmatprep.subr.mxu0 0.0
      %679 = vmatpush2.msra.mxu0 %v515
      %680 = vmatprep.subr.mxu0 0.0
      %681 = vmatpush2.msra.mxu0 %v514
      %682 = vmatprep.subr.mxu0 0.0
      %683 = vmatpush2.msra.mxu0 %v513
      %684 = vmatprep.subr.mxu0 0.0
      %685 = vmatpush2.msra.mxu0 %v512
      %686 = vmatprep.subr.mxu0 0.0
      %687 = vmatpush2.msra.mxu0 %v511
      %688 = vmatprep.subr.mxu0 0.0
      %689 = vmatpush2.msra.mxu0 %v510
      %690 = vmatprep.subr.mxu0 0.0
      %691 = vmatpush2.msra.mxu0 %v509
      %692 = vmatprep.subr.mxu0 0.0
      %693 = vmatpush2.msra.mxu0 %v508
      %694 = vmatprep.subr.mxu0 0.0
      %695 = vmatpush2.msra.mxu0 %v507
      %696 = vmatprep.subr.mxu0 0.0
      %697 = vmatpush2.msra.mxu0 %v506
      %698 = vmatprep.mubr.f32.mxu0 %v419
      %699 = vmatmul.mubr.f32.gmra.mxu0 %v418
      %v700 = vpop.f32.mrf.mxu0
      %v701 = vadd.f32 0.0, %v700
      %v702 = vpop.f32.mrf.mxu0
      %703 = vmatprep.mubr.f32.mxu0 %v428
      %704 = vmatmul.mubr.f32.gmra.mxu0 %v427
      %v705 = vpop.f32.mrf.mxu0
      %v706 = vadd.f32 0.0, %v705
      %v707 = vpop.f32.mrf.mxu0
      %708 = vmatprep.mubr.f32.mxu0 %v437
      %709 = vmatmul.mubr.f32.gmra.mxu0 %v436
      %v710 = vpop.f32.mrf.mxu0
      %v711 = vadd.f32 0.0, %v710
      %v712 = vpop.f32.mrf.mxu0
      %713 = vmatprep.mubr.f32.mxu0 %v446
      %714 = vmatmul.mubr.f32.gmra.mxu0 %v445
      %v715 = vpop.f32.mrf.mxu0
      %v716 = vadd.f32 0.0, %v715
      %v717 = vpop.f32.mrf.mxu0
      %718 = vmatprep.mubr.f32.mxu0 %v455
      %719 = vmatmul.mubr.f32.gmra.mxu0 %v454
      %v720 = vpop.f32.mrf.mxu0
      %v721 = vadd.f32 0.0, %v720
      %v722 = vpop.f32.mrf.mxu0
      %723 = vmatprep.mubr.f32.mxu0 %v464
      %724 = vmatmul.mubr.f32.gmra.mxu0 %v463
      %v725 = vpop.f32.mrf.mxu0
      %v726 = vadd.f32 0.0, %v725
      %v727 = vpop.f32.mrf.mxu0
      %728 = vmatprep.mubr.f32.mxu0 %v473
      %729 = vmatmul.mubr.f32.gmra.mxu0 %v472
      %v730 = vpop.f32.mrf.mxu0
      %v731 = vadd.f32 0.0, %v730
      %v732 = vpop.f32.mrf.mxu0
      %733 = vmatprep.mubr.f32.mxu0 %v482
      %734 = vmatmul.mubr.f32.gmra.mxu0 %v481
      %v735 = vpop.f32.mrf.mxu0
      %v736 = vadd.f32 0.0, %v735
      %v737 = vpop.f32.mrf.mxu0
      %738 = vdwg.mxu0
      %739 = vmatprep.subr.mxu0 0.0
      %740 = vmatpush1.msra.mxu0 %v537
      %741 = vmatprep.subr.mxu0 0.0
      %742 = vmatpush1.msra.mxu0 %v536
      %743 = vmatprep.subr.mxu0 0.0
      %744 = vmatpush1.msra.mxu0 %v535
      %745 = vmatprep.subr.mxu0 0.0
      %746 = vmatpush1.msra.mxu0 %v534
      %747 = vmatprep.subr.mxu0 0.0
      %748 = vmatpush1.msra.mxu0 %v533
      %749 = vmatprep.subr.mxu0 0.0
      %750 = vmatpush1.msra.mxu0 %v532
      %751 = vmatprep.subr.mxu0 0.0
      %752 = vmatpush1.msra.mxu0 %v531
      %753 = vmatprep.subr.mxu0 0.0
      %754 = vmatpush1.msra.mxu0 %v530
      %755 = vmatprep.subr.mxu0 0.0
      %756 = vmatpush1.msra.mxu0 %v529
      %757 = vmatprep.subr.mxu0 0.0
      %758 = vmatpush1.msra.mxu0 %v528
      %759 = vmatprep.subr.mxu0 0.0
      %760 = vmatpush1.msra.mxu0 %v527
      %761 = vmatprep.subr.mxu0 0.0
      %762 = vmatpush1.msra.mxu0 %v526
      %763 = vmatprep.subr.mxu0 0.0
      %764 = vmatpush1.msra.mxu0 %v525
      %765 = vmatprep.subr.mxu0 0.0
      %766 = vmatpush1.msra.mxu0 %v524
      %767 = vmatprep.subr.mxu0 0.0
      %768 = vmatpush1.msra.mxu0 %v523
      %769 = vmatprep.subr.mxu0 0.0
      %770 = vmatpush1.msra.mxu0 %v522
      %771 = vmatprep.subr.mxu0 0.0
      %772 = vmatpush2.msra.mxu0 %v553
      %773 = vmatprep.subr.mxu0 0.0
      %774 = vmatpush2.msra.mxu0 %v552
      %775 = vmatprep.subr.mxu0 0.0
      %776 = vmatpush2.msra.mxu0 %v551
      %777 = vmatprep.subr.mxu0 0.0
      %778 = vmatpush2.msra.mxu0 %v550
      %779 = vmatprep.subr.mxu0 0.0
      %780 = vmatpush2.msra.mxu0 %v549
      %781 = vmatprep.subr.mxu0 0.0
      %782 = vmatpush2.msra.mxu0 %v548
      %783 = vmatprep.subr.mxu0 0.0
      %784 = vmatpush2.msra.mxu0 %v547
      %785 = vmatprep.subr.mxu0 0.0
      %786 = vmatpush2.msra.mxu0 %v546
      %787 = vmatprep.subr.mxu0 0.0
      %788 = vmatpush2.msra.mxu0 %v545
      %789 = vmatprep.subr.mxu0 0.0
      %790 = vmatpush2.msra.mxu0 %v544
      %791 = vmatprep.subr.mxu0 0.0
      %792 = vmatpush2.msra.mxu0 %v543
      %793 = vmatprep.subr.mxu0 0.0
      %794 = vmatpush2.msra.mxu0 %v542
      %795 = vmatprep.subr.mxu0 0.0
      %796 = vmatpush2.msra.mxu0 %v541
      %797 = vmatprep.subr.mxu0 0.0
      %798 = vmatpush2.msra.mxu0 %v540
      %799 = vmatprep.subr.mxu0 0.0
      %800 = vmatpush2.msra.mxu0 %v539
      %801 = vmatprep.subr.mxu0 0.0
      %802 = vmatpush2.msra.mxu0 %v538
      %803 = vmatprep.mubr.f32.mxu0 %v421
      %804 = vmatmul.mubr.f32.gmra.mxu0 %v420
      %v805 = vpop.f32.mrf.mxu0
      %v806 = vadd.f32 %v701, %v805
      %v807 = vpop.f32.mrf.mxu0
      %808 = vmatprep.mubr.f32.mxu0 %v430
      %809 = vmatmul.mubr.f32.gmra.mxu0 %v429
      %v810 = vpop.f32.mrf.mxu0
      %v811 = vadd.f32 %v706, %v810
      %v812 = vpop.f32.mrf.mxu0
      %813 = vmatprep.mubr.f32.mxu0 %v439
      %814 = vmatmul.mubr.f32.gmra.mxu0 %v438
      %v815 = vpop.f32.mrf.mxu0
      %v816 = vadd.f32 %v711, %v815
      %v817 = vpop.f32.mrf.mxu0
      %818 = vmatprep.mubr.f32.mxu0 %v448
      %819 = vmatmul.mubr.f32.gmra.mxu0 %v447
      %v820 = vpop.f32.mrf.mxu0
      %v821 = vadd.f32 %v716, %v820
      %v822 = vpop.f32.mrf.mxu0
      %823 = vmatprep.mubr.f32.mxu0 %v457
      %824 = vmatmul.mubr.f32.gmra.mxu0 %v456
      %v825 = vpop.f32.mrf.mxu0
      %v826 = vadd.f32 %v721, %v825
      %v827 = vpop.f32.mrf.mxu0
      %828 = vmatprep.mubr.f32.mxu0 %v466
      %829 = vmatmul.mubr.f32.gmra.mxu0 %v465
      %v830 = vpop.f32.mrf.mxu0
      %v831 = vadd.f32 %v726, %v830
      %v832 = vpop.f32.mrf.mxu0
      %833 = vmatprep.mubr.f32.mxu0 %v475
      %834 = vmatmul.mubr.f32.gmra.mxu0 %v474
      %v835 = vpop.f32.mrf.mxu0
      %v836 = vadd.f32 %v731, %v835
      %v837 = vpop.f32.mrf.mxu0
      %838 = vmatprep.mubr.f32.mxu0 %v484
      %839 = vmatmul.mubr.f32.gmra.mxu0 %v483
      %v840 = vpop.f32.mrf.mxu0
      %v841 = vadd.f32 %v736, %v840
      %v842 = vpop.f32.mrf.mxu0
      %843 = vdwg.mxu0
      %844 = vmatprep.subr.mxu0 0.0
      %845 = vmatpush1.msra.mxu0 %v569
      %846 = vmatprep.subr.mxu0 0.0
      %847 = vmatpush1.msra.mxu0 %v568
      %848 = vmatprep.subr.mxu0 0.0
      %849 = vmatpush1.msra.mxu0 %v567
      %850 = vmatprep.subr.mxu0 0.0
      %851 = vmatpush1.msra.mxu0 %v566
      %852 = vmatprep.subr.mxu0 0.0
      %853 = vmatpush1.msra.mxu0 %v565
      %854 = vmatprep.subr.mxu0 0.0
      %855 = vmatpush1.msra.mxu0 %v564
      %856 = vmatprep.subr.mxu0 0.0
      %857 = vmatpush1.msra.mxu0 %v563
      %858 = vmatprep.subr.mxu0 0.0
      %859 = vmatpush1.msra.mxu0 %v562
      %860 = vmatprep.subr.mxu0 0.0
      %861 = vmatpush1.msra.mxu0 %v561
      %862 = vmatprep.subr.mxu0 0.0
      %863 = vmatpush1.msra.mxu0 %v560
      %864 = vmatprep.subr.mxu0 0.0
      %865 = vmatpush1.msra.mxu0 %v559
      %866 = vmatprep.subr.mxu0 0.0
      %867 = vmatpush1.msra.mxu0 %v558
      %868 = vmatprep.subr.mxu0 0.0
      %869 = vmatpush1.msra.mxu0 %v557
      %870 = vmatprep.subr.mxu0 0.0
      %871 = vmatpush1.msra.mxu0 %v556
      %872 = vmatprep.subr.mxu0 0.0
      %873 = vmatpush1.msra.mxu0 %v555
      %874 = vmatprep.subr.mxu0 0.0
      %875 = vmatpush1.msra.mxu0 %v554
      %876 = vmatprep.subr.mxu0 0.0
      %877 = vmatpush2.msra.mxu0 %v585
      %878 = vmatprep.subr.mxu0 0.0
      %879 = vmatpush2.msra.mxu0 %v584
      %880 = vmatprep.subr.mxu0 0.0
      %881 = vmatpush2.msra.mxu0 %v583
      %882 = vmatprep.subr.mxu0 0.0
      %883 = vmatpush2.msra.mxu0 %v582
      %884 = vmatprep.subr.mxu0 0.0
      %885 = vmatpush2.msra.mxu0 %v581
      %886 = vmatprep.subr.mxu0 0.0
      %887 = vmatpush2.msra.mxu0 %v580
      %888 = vmatprep.subr.mxu0 0.0
      %889 = vmatpush2.msra.mxu0 %v579
      %890 = vmatprep.subr.mxu0 0.0
      %891 = vmatpush2.msra.mxu0 %v578
      %892 = vmatprep.subr.mxu0 0.0
      %893 = vmatpush2.msra.mxu0 %v577
      %894 = vmatprep.subr.mxu0 0.0
      %895 = vmatpush2.msra.mxu0 %v576
      %896 = vmatprep.subr.mxu0 0.0
      %897 = vmatpush2.msra.mxu0 %v575
      %898 = vmatprep.subr.mxu0 0.0
      %899 = vmatpush2.msra.mxu0 %v574
      %900 = vmatprep.subr.mxu0 0.0
      %901 = vmatpush2.msra.mxu0 %v573
      %902 = vmatprep.subr.mxu0 0.0
      %903 = vmatpush2.msra.mxu0 %v572
      %904 = vmatprep.subr.mxu0 0.0
      %905 = vmatpush2.msra.mxu0 %v571
      %906 = vmatprep.subr.mxu0 0.0
      %907 = vmatpush2.msra.mxu0 %v570
      %908 = vmatprep.mubr.f32.mxu0 %v423
      %909 = vmatmul.mubr.f32.gmra.mxu0 %v422
      %v910 = vpop.f32.mrf.mxu0
      %v911 = vadd.f32 %v806, %v910
      %v912 = vpop.f32.mrf.mxu0
      %913 = vmatprep.mubr.f32.mxu0 %v432
      %914 = vmatmul.mubr.f32.gmra.mxu0 %v431
      %v915 = vpop.f32.mrf.mxu0
      %v916 = vadd.f32 %v811, %v915
      %v917 = vpop.f32.mrf.mxu0
      %918 = vmatprep.mubr.f32.mxu0 %v441
      %919 = vmatmul.mubr.f32.gmra.mxu0 %v440
      %v920 = vpop.f32.mrf.mxu0
      %v921 = vadd.f32 %v816, %v920
      %v922 = vpop.f32.mrf.mxu0
      %923 = vmatprep.mubr.f32.mxu0 %v450
      %924 = vmatmul.mubr.f32.gmra.mxu0 %v449
      %v925 = vpop.f32.mrf.mxu0
      %v926 = vadd.f32 %v821, %v925
      %v927 = vpop.f32.mrf.mxu0
      %928 = vmatprep.mubr.f32.mxu0 %v459
      %929 = vmatmul.mubr.f32.gmra.mxu0 %v458
      %v930 = vpop.f32.mrf.mxu0
      %v931 = vadd.f32 %v826, %v930
      %v932 = vpop.f32.mrf.mxu0
      %933 = vmatprep.mubr.f32.mxu0 %v468
      %934 = vmatmul.mubr.f32.gmra.mxu0 %v467
      %v935 = vpop.f32.mrf.mxu0
      %v936 = vadd.f32 %v831, %v935
      %v937 = vpop.f32.mrf.mxu0
      %938 = vmatprep.mubr.f32.mxu0 %v477
      %939 = vmatmul.mubr.f32.gmra.mxu0 %v476
      %v940 = vpop.f32.mrf.mxu0
      %v941 = vadd.f32 %v836, %v940
      %v942 = vpop.f32.mrf.mxu0
      %943 = vmatprep.mubr.f32.mxu0 %v486
      %944 = vmatmul.mubr.f32.gmra.mxu0 %v485
      %v945 = vpop.f32.mrf.mxu0
      %v946 = vadd.f32 %v841, %v945
      %v947 = vpop.f32.mrf.mxu0
      %948 = vdwg.mxu0
      %949 = vmatprep.subr.mxu0 0.0
      %950 = vmatpush1.msra.mxu0 %v601
      %951 = vmatprep.subr.mxu0 0.0
      %952 = vmatpush1.msra.mxu0 %v600
      %953 = vmatprep.subr.mxu0 0.0
      %954 = vmatpush1.msra.mxu0 %v599
      %955 = vmatprep.subr.mxu0 0.0
      %956 = vmatpush1.msra.mxu0 %v598
      %957 = vmatprep.subr.mxu0 0.0
      %958 = vmatpush1.msra.mxu0 %v597
      %959 = vmatprep.subr.mxu0 0.0
      %960 = vmatpush1.msra.mxu0 %v596
      %961 = vmatprep.subr.mxu0 0.0
      %962 = vmatpush1.msra.mxu0 %v595
      %963 = vmatprep.subr.mxu0 0.0
      %964 = vmatpush1.msra.mxu0 %v594
      %965 = vmatprep.subr.mxu0 0.0
      %966 = vmatpush1.msra.mxu0 %v593
      %967 = vmatprep.subr.mxu0 0.0
      %968 = vmatpush1.msra.mxu0 %v592
      %969 = vmatprep.subr.mxu0 0.0
      %970 = vmatpush1.msra.mxu0 %v591
      %971 = vmatprep.subr.mxu0 0.0
      %972 = vmatpush1.msra.mxu0 %v590
      %973 = vmatprep.subr.mxu0 0.0
      %974 = vmatpush1.msra.mxu0 %v589
      %975 = vmatprep.subr.mxu0 0.0
      %976 = vmatpush1.msra.mxu0 %v588
      %977 = vmatprep.subr.mxu0 0.0
      %978 = vmatpush1.msra.mxu0 %v587
      %979 = vmatprep.subr.mxu0 0.0
      %980 = vmatpush1.msra.mxu0 %v586
      %981 = vmatprep.subr.mxu0 0.0
      %982 = vmatpush2.msra.mxu0 %v617
      %983 = vmatprep.subr.mxu0 0.0
      %984 = vmatpush2.msra.mxu0 %v616
      %985 = vmatprep.subr.mxu0 0.0
      %986 = vmatpush2.msra.mxu0 %v615
      %987 = vmatprep.subr.mxu0 0.0
      %988 = vmatpush2.msra.mxu0 %v614
      %989 = vmatprep.subr.mxu0 0.0
      %990 = vmatpush2.msra.mxu0 %v613
      %991 = vmatprep.subr.mxu0 0.0
      %992 = vmatpush2.msra.mxu0 %v612
      %993 = vmatprep.subr.mxu0 0.0
      %994 = vmatpush2.msra.mxu0 %v611
      %995 = vmatprep.subr.mxu0 0.0
      %996 = vmatpush2.msra.mxu0 %v610
      %997 = vmatprep.subr.mxu0 0.0
      %998 = vmatpush2.msra.mxu0 %v609
      %999 = vmatprep.subr.mxu0 0.0
      %1000 = vmatpush2.msra.mxu0 %v608
      %1001 = vmatprep.subr.mxu0 0.0
      %1002 = vmatpush2.msra.mxu0 %v607
      %1003 = vmatprep.subr.mxu0 0.0
      %1004 = vmatpush2.msra.mxu0 %v606
      %1005 = vmatprep.subr.mxu0 0.0
      %1006 = vmatpush2.msra.mxu0 %v605
      %1007 = vmatprep.subr.mxu0 0.0
      %1008 = vmatpush2.msra.mxu0 %v604
      %1009 = vmatprep.subr.mxu0 0.0
      %1010 = vmatpush2.msra.mxu0 %v603
      %1011 = vmatprep.subr.mxu0 0.0
      %1012 = vmatpush2.msra.mxu0 %v602
      %1013 = vmatprep.mubr.f32.mxu0 %v425
      %1014 = vmatmul.mubr.f32.gmra.mxu0 %v424
      %v1015 = vpop.f32.mrf.mxu0
      %v1016 = vadd.f32 %v911, %v1015
      %v1017 = vpop.f32.mrf.mxu0
      %1018 = vmatprep.mubr.f32.mxu0 %v434
      %1019 = vmatmul.mubr.f32.gmra.mxu0 %v433
      %v1020 = vpop.f32.mrf.mxu0
      %v1021 = vadd.f32 %v916, %v1020
      %v1022 = vpop.f32.mrf.mxu0
      %1023 = vmatprep.mubr.f32.mxu0 %v443
      %1024 = vmatmul.mubr.f32.gmra.mxu0 %v442
      %v1025 = vpop.f32.mrf.mxu0
      %v1026 = vadd.f32 %v921, %v1025
      %v1027 = vpop.f32.mrf.mxu0
      %1028 = vmatprep.mubr.f32.mxu0 %v452
      %1029 = vmatmul.mubr.f32.gmra.mxu0 %v451
      %v1030 = vpop.f32.mrf.mxu0
      %v1031 = vadd.f32 %v926, %v1030
      %v1032 = vpop.f32.mrf.mxu0
      %1033 = vmatprep.mubr.f32.mxu0 %v461
      %1034 = vmatmul.mubr.f32.gmra.mxu0 %v460
      %v1035 = vpop.f32.mrf.mxu0
      %v1036 = vadd.f32 %v931, %v1035
      %v1037 = vpop.f32.mrf.mxu0
      %1038 = vmatprep.mubr.f32.mxu0 %v470
      %1039 = vmatmul.mubr.f32.gmra.mxu0 %v469
      %v1040 = vpop.f32.mrf.mxu0
      %v1041 = vadd.f32 %v936, %v1040
      %v1042 = vpop.f32.mrf.mxu0
      %1043 = vmatprep.mubr.f32.mxu0 %v479
      %1044 = vmatmul.mubr.f32.gmra.mxu0 %v478
      %v1045 = vpop.f32.mrf.mxu0
      %v1046 = vadd.f32 %v941, %v1045
      %v1047 = vpop.f32.mrf.mxu0
      %1048 = vmatprep.mubr.f32.mxu0 %v488
      %1049 = vmatmul.mubr.f32.gmra.mxu0 %v487
      %v1050 = vpop.f32.mrf.mxu0
      %v1051 = vadd.f32 %v946, %v1050
      %v1052 = vpop.f32.mrf.mxu0
      %1053 = vdwg.mxu0
      %1054 = vmatprep.subr.mxu0 0.0
      %1055 = vmatpush1.msra.mxu0 %v633
      %1056 = vmatprep.subr.mxu0 0.0
      %1057 = vmatpush1.msra.mxu0 %v632
      %1058 = vmatprep.subr.mxu0 0.0
      %1059 = vmatpush1.msra.mxu0 %v631
      %1060 = vmatprep.subr.mxu0 0.0
      %1061 = vmatpush1.msra.mxu0 %v630
      %1062 = vmatprep.subr.mxu0 0.0
      %1063 = vmatpush1.msra.mxu0 %v629
      %1064 = vmatprep.subr.mxu0 0.0
      %1065 = vmatpush1.msra.mxu0 %v628
      %1066 = vmatprep.subr.mxu0 0.0
      %1067 = vmatpush1.msra.mxu0 %v627
      %1068 = vmatprep.subr.mxu0 0.0
      %1069 = vmatpush1.msra.mxu0 %v626
      %1070 = vmatprep.subr.mxu0 0.0
      %1071 = vmatpush1.msra.mxu0 %v625
      %1072 = vmatprep.subr.mxu0 0.0
      %1073 = vmatpush1.msra.mxu0 %v624
      %1074 = vmatprep.subr.mxu0 0.0
      %1075 = vmatpush1.msra.mxu0 %v623
      %1076 = vmatprep.subr.mxu0 0.0
      %1077 = vmatpush1.msra.mxu0 %v622
      %1078 = vmatprep.subr.mxu0 0.0
      %1079 = vmatpush1.msra.mxu0 %v621
      %1080 = vmatprep.subr.mxu0 0.0
      %1081 = vmatpush1.msra.mxu0 %v620
      %1082 = vmatprep.subr.mxu0 0.0
      %1083 = vmatpush1.msra.mxu0 %v619
      %1084 = vmatprep.subr.mxu0 0.0
      %1085 = vmatpush1.msra.mxu0 %v618
      %1086 = vmatprep.subr.mxu0 0.0
      %1087 = vmatpush2.msra.mxu0 0.0
      %1088 = vmatprep.subr.mxu0 0.0
      %1089 = vmatpush2.msra.mxu0 0.0
      %1090 = vmatprep.subr.mxu0 0.0
      %1091 = vmatpush2.msra.mxu0 0.0
      %1092 = vmatprep.subr.mxu0 0.0
      %1093 = vmatpush2.msra.mxu0 0.0
      %1094 = vmatprep.subr.mxu0 0.0
      %1095 = vmatpush2.msra.mxu0 0.0
      %1096 = vmatprep.subr.mxu0 0.0
      %1097 = vmatpush2.msra.mxu0 0.0
      %1098 = vmatprep.subr.mxu0 0.0
      %1099 = vmatpush2.msra.mxu0 0.0
      %1100 = vmatprep.subr.mxu0 0.0
      %1101 = vmatpush2.msra.mxu0 0.0
      %1102 = vmatprep.subr.mxu0 0.0
      %1103 = vmatpush2.msra.mxu0 0.0
      %1104 = vmatprep.subr.mxu0 0.0
      %1105 = vmatpush2.msra.mxu0 0.0
      %1106 = vmatprep.subr.mxu0 0.0
      %1107 = vmatpush2.msra.mxu0 0.0
      %1108 = vmatprep.subr.mxu0 0.0
      %1109 = vmatpush2.msra.mxu0 0.0
      %1110 = vmatprep.subr.mxu0 0.0
      %1111 = vmatpush2.msra.mxu0 0.0
      %1112 = vmatprep.subr.mxu0 0.0
      %1113 = vmatpush2.msra.mxu0 0.0
      %1114 = vmatprep.subr.mxu0 0.0
      %1115 = vmatpush2.msra.mxu0 0.0
      %1116 = vmatprep.subr.mxu0 0.0
      %1117 = vmatpush2.msra.mxu0 0.0
      %1118 = vmatprep.mubr.f32.mxu0 0.0
      %1119 = vmatmul.mubr.f32.gmra.mxu0 %v426
      %v1120 = vpop.f32.mrf.mxu0
      %v1121 = vadd.f32 %v1016, %v1120
      %v1122 = vpop.f32.mrf.mxu0
      %1123 = vmatprep.mubr.f32.mxu0 0.0
      %1124 = vmatmul.mubr.f32.gmra.mxu0 %v435
      %v1125 = vpop.f32.mrf.mxu0
      %v1126 = vadd.f32 %v1021, %v1125
      %v1127 = vpop.f32.mrf.mxu0
      %1128 = vmatprep.mubr.f32.mxu0 0.0
      %1129 = vmatmul.mubr.f32.gmra.mxu0 %v444
      %v1130 = vpop.f32.mrf.mxu0
      %v1131 = vadd.f32 %v1026, %v1130
      %v1132 = vpop.f32.mrf.mxu0
      %1133 = vmatprep.mubr.f32.mxu0 0.0
      %1134 = vmatmul.mubr.f32.gmra.mxu0 %v453
      %v1135 = vpop.f32.mrf.mxu0
      %v1136 = vadd.f32 %v1031, %v1135
      %v1137 = vpop.f32.mrf.mxu0
      %1138 = vmatprep.mubr.f32.mxu0 0.0
      %1139 = vmatmul.mubr.f32.gmra.mxu0 %v462
      %v1140 = vpop.f32.mrf.mxu0
      %v1141 = vadd.f32 %v1036, %v1140
      %v1142 = vpop.f32.mrf.mxu0
      %1143 = vmatprep.mubr.f32.mxu0 0.0
      %1144 = vmatmul.mubr.f32.gmra.mxu0 %v471
      %v1145 = vpop.f32.mrf.mxu0
      %v1146 = vadd.f32 %v1041, %v1145
      %v1147 = vpop.f32.mrf.mxu0
      %1148 = vmatprep.mubr.f32.mxu0 0.0
      %1149 = vmatmul.mubr.f32.gmra.mxu0 %v480
      %v1150 = vpop.f32.mrf.mxu0
      %v1151 = vadd.f32 %v1046, %v1150
      %v1152 = vpop.f32.mrf.mxu0
      %1153 = vmatprep.mubr.f32.mxu0 0.0
      %1154 = vmatmul.mubr.f32.gmra.mxu0 %v489
      %v1155 = vpop.f32.mrf.mxu0
      %v1156 = vadd.f32 %v1051, %v1155
      %v1157 = vpop.f32.mrf.mxu0
      %1158 = vdwg.mxu0
      %v1159 = vadd.f32 %v1121, %v1126
      %v1160 = vadd.f32 %v1159, %v1131
      %v1161 = vadd.f32 %v1160, %v1136
      %v1162 = vadd.f32 %v1161, %v1141
      %v1163 = vadd.f32 %v1162, %v1146
      %v1164 = vadd.f32 %v1163, %v1151
      %v1165 = vadd.f32 %v1164, %v1156
      %v1166 = vrot.slane %v1165, 4
      %v1167 = vadd.f32 %v1165, %v1166
      %v1168 = vrot.slane %v1167, 2
      %v1169 = vadd.f32 %v1167, %v1168
      %v1170 = vrot.slane %v1169, 1
      %v1171 = vadd.f32 %v1169, %v1170
      %v1172 = vmul.f32 %v1171, 0.015625
      %v1173 = vsub.f32 %v1121, %v1172
      %v1174 = vsub.f32 %v1126, %v1172
      %v1175 = vsub.f32 %v1131, %v1172
      %v1176 = vsub.f32 %v1136, %v1172
      %v1177 = vsub.f32 %v1141, %v1172
      %v1178 = vsub.f32 %v1146, %v1172
      %v1179 = vsub.f32 %v1151, %v1172
      %v1180 = vsub.f32 %v1156, %v1172
      %1181 = vst [vmem:[%s187] sm:$0x1] %v1171
      %v1182 = vmul.f32 %v1173, %v1173
      %v1183 = vmul.f32 %v1174, %v1174
      %v1184 = vmul.f32 %v1175, %v1175
      %v1185 = vmul.f32 %v1176, %v1176
      %v1186 = vmul.f32 %v1177, %v1177
      %v1187 = vmul.f32 %v1178, %v1178
      %v1188 = vmul.f32 %v1179, %v1179
      %v1189 = vmul.f32 %v1180, %v1180
      %v1190 = vadd.f32 %v1182, %v1183
      %v1191 = vadd.f32 %v1190, %v1184
      %v1192 = vadd.f32 %v1191, %v1185
      %v1193 = vadd.f32 %v1192, %v1186
      %v1194 = vadd.f32 %v1193, %v1187
      %v1195 = vadd.f32 %v1194, %v1188
      %v1196 = vadd.f32 %v1195, %v1189
      %v1197 = vrot.slane %v1196, 4
      %v1198 = vadd.f32 %v1196, %v1197
      %v1199 = vrot.slane %v1198, 2
      %v1200 = vadd.f32 %v1198, %v1199
      %v1201 = vrot.slane %v1200, 1
      %v1202 = vadd.f32 %v1200, %v1201
      %1203 = vst [vmem:[%s187 + $0x1] sm:$0x1] %v1202
      %1204 = vst [vmem:[%s182] sm:$0xff] %v1121
      %1205 = vst [vmem:[%s182 + $0x8] sm:$0xff] %v1126
      %1206 = vst [vmem:[%s182 + $0x10] sm:$0xff] %v1131
      %1207 = vst [vmem:[%s182 + $0x18] sm:$0xff] %v1136
      %1208 = vst [vmem:[%s182 + $0x20] sm:$0xff] %v1141
      %1209 = vst [vmem:[%s182 + $0x28] sm:$0xff] %v1146
      %1210 = vst [vmem:[%s182 + $0x30] sm:$0xff] %v1151
      %1211 = vst [vmem:[%s182 + $0x38] sm:$0xff] %v1156
      %s1212 = smul.u32 8, %s15
      %p1213 = scmp.lt.s32.totalorder %s1212, 15
      %s1214 = scalar_select %p1213, %s1212, 15
      %s1215 = smul.addr %s1214, 8
      %s1216 = scalar_lea.vmem %s2, %s1215
      %p1217 = scmp.lt.s32.totalorder %s15, 1
      %s1218 = scalar_select %p1217, %s15, 1
      %s1219 = smul.addr %s1218, 2
      %s1220 = scalar_lea.vmem %s3, %s1219
      // Predicated region
      $region29: #{down_forward.3} parent=27 // pred_check
        %p1221 = pneg %p80
      $region30: #{down_forward.3} parent=27 // pred_check_branch
        %1223 = sbr.rel (%p1221) target = $region32
      $region31: #{down_forward.3} parent=27 // pred_region
        %s1224 = smul.u32 8, %s15
      $region32: #{down_forward.3} parent=27 // pred_fallthru
        _
      // Predicated region
      $region33: #{down_forward.3} parent=27 // pred_check
        %p1225 = pneg %p106
      $region34: #{down_forward.3} parent=27 // pred_check_branch
        %1227 = sbr.rel (%p1225) target = $region36
      $region35: #{down_forward.3} parent=27 // pred_region
        _
      $region36: #{down_forward.3} parent=27 // pred_fallthru
        _
    $region28: #{down_forward.3} parent=5 // pred_fallthru
      _
    %p1228 = scmp.le.s32.totalorder 2, %s10
    // Predicated region
    $region37: #{down_forward.3} parent=5 // pred_check
      %p1229 = pneg %p1228
    $region38: #{down_forward.3} parent=5 // pred_check_branch
      %1231 = sbr.rel (%p1229) target = $region40
    $region39: #{down_forward.3} parent=5 // pred_region
      %s1232 = ssub.s32 %s10, 2
      // Predicated region
      $region41: #{down_forward.3} parent=39 // pred_check
        %p1233 = pneg %p86
      $region42: #{down_forward.3} parent=39 // pred_check_branch
        %1235 = sbr.rel (%p1233) target = $region44
      $region43: #{down_forward.3} parent=39 // pred_region
        %s1236 = smul.u32 8, %s16
        %p1237 = scmp.lt.s32.totalorder %s1236, 15
        %s1238 = scalar_select %p1237, %s1236, 15
        %s1239 = smul.addr %s1238, 8
        %s1240 = scalar_lea.vmem %s2, %s1239
      $region44: #{down_forward.3} parent=39 // pred_fallthru
        _
      // Predicated region
      $region45: #{down_forward.3} parent=39 // pred_check
        %p1241 = pneg %p112
      $region46: #{down_forward.3} parent=39 // pred_check_branch
        %1243 = sbr.rel (%p1241) target = $region48
      $region47: #{down_forward.3} parent=39 // pred_region
        %p1244 = scmp.lt.s32.totalorder %s16, 1
        %s1245 = scalar_select %p1244, %s16, 1
        %s1246 = smul.addr %s1245, 2
        %s1247 = scalar_lea.vmem %s3, %s1246
      $region48: #{down_forward.3} parent=39 // pred_fallthru
        _
    $region40: #{down_forward.3} parent=5 // pred_fallthru
      _
  $region6: #{down_forward.3} parent=0 // loop_footer
    %s14 = sadd.s32 1, %s10
  $region7: #{down_forward.3} parent=0 // loop_footer_branch
    %9 = sbr.rel target = $region3
  $region8: #{down_forward.3} parent=0 // loop_exit
    _

// kernel: down_forward.4
$region0: #{down_forward.4}
  #allocation0 [shape = 'u32[]', space=smem, size = 0x4, offset = 0x4, fixed_abs, tag = 'smem constant byte address 0x4 - core index']
  #allocation1 [shape = 'u32[144,128]{1,0:T(1,128)}', space=vmem, size = 0x12000, scoped, tag = 'internal scratch']
  #allocation2 [shape = 'f32[10,10,128]{2,1,0:T(8,128)}', space=vmem, size = 0x14000, scoped, tag = 'scratch operand']
  #allocation3 [shape = 'f32[64,1152]{1,0:T(8,128)}', space=vmem, size = 0x48000, scoped, tag = 'scratch operand']
  %s0 = inlined_call_operand.vmem [shape: f32[16,8,128], index: 0, kind: input, shape index: {}]
  %s1 = inlined_call_operand.vmem [shape: f32[1,128], index: 1, kind: input, shape index: {}]
  %s2 = inlined_call_operand.vmem [shape: f32[1,128], index: 2, kind: input, shape index: {}]
  %s3 = inlined_call_operand.vmem [shape: f32[1152,128], index: 3, kind: input, shape index: {}]
  %s4 = inlined_call_operand.vmem [shape: f32[16,8,128], index: 4, kind: output, shape index: {0}]
  %s5 = inlined_call_operand.vmem [shape: f32[2,2,128], index: 5, kind: output, shape index: {1}]
  %6 = xla_tuple %s4, %s5
  %s7 = sld [smem:[#allocation0]]
  $region57: #{down_forward.4} parent=0
    _
  %s9 = ssub.s32 1, %s7
  %s10 = scalar_select 0, %s9, %s7
  loop: start=0, step=1, limit=4
  $region2: #{down_forward.4} parent=0 // loop_pre_header
    _
  $region3: #{down_forward.4} parent=0 // loop_header
    %s12 = sphi 0, %s16
    %p13 = scmp.ge.s32.totalorder %s12, 4
    %s22 = sphi 0, %s24
    %s25 = sphi 0, %s22
    %s26 = sphi 0, %s25
    %s42 = sphi 0, %s26
    %s46 = sphi 0, %s46
    %s48 = sphi 0, %s46
    %s49 = sphi 0, %s48
    %s63 = sphi 0, %s49
    %s67 = sphi 0, %s67
    %s69 = sphi 0, %s67
    %s70 = sphi 0, %s69
    %s84 = sphi 0, %s70
    %s88 = sphi 0, %s88
    %s90 = sphi 0, %s88
    %s91 = sphi 0, %s90
    %s105 = sphi 0, %s91
    %s111 = sphi 0, %s113
    %s114 = sphi 0, %s111
    %s115 = sphi 0, %s114
    %s131 = sphi 0, %s115
    %s137 = sphi 0, %s139
    %s140 = sphi 0, %s137
    %s141 = sphi 0, %s140
    %s157 = sphi 0, %s141
  $region4: #{down_forward.4} parent=0 // loop_header_branch
    %15 = sbr.rel (%p13) target = $region8
  $region5: #{down_forward.4} parent=0 // loop_body
    %s17 = ssub.s32 %s12, 1
    %s18 = ssub.s32 %s12, 2
    %s19 = sadd.s32 %s12, 1
    %s20 = ssub.s32 %s12, %s19
    %p21 = scmp.eq.s32.totalorder %s20, 0
    %s23 = sadd.s32 %s22, 1
    %s24 = scalar_select %p21, %s22, %s23
    %p27 = pneg %p21
    %p28 = scmp.eq.s32.totalorder %s12, 1
    %p29 = por %p27, %p28
    %p30 = scmp.ne.s32.totalorder %s22, %s25
    %p31 = scmp.eq.s32.totalorder %s12, 0
    %p32 = por %p30, %p31
    %p33 = scmp.ne.s32.totalorder %s22, %s25
    %p34 = scmp.eq.s32.totalorder %s17, 1
    %p35 = por %p33, %p34
    %p36 = scmp.ne.s32.totalorder %s25, %s26
    %p37 = scmp.eq.s32.totalorder %s17, 0
    %p38 = por %p36, %p37
    %p39 = scmp.ne.s32.totalorder %s25, %s26
    %p40 = scmp.eq.s32.totalorder %s18, 1
    %p41 = por %p39, %p40
    %p43 = scmp.ne.s32.totalorder %s26, %s42
    %p44 = scmp.eq.s32.totalorder %s18, 0
    %p45 = por %p43, %p44
    %s47 = sadd.s32 %s46, 1
    %p50 = scmp.eq.s32.totalorder %s12, 1
    %p51 = scmp.ne.s32.totalorder %s46, %s48
    %p52 = scmp.eq.s32.totalorder %s12, 0
    %p53 = por %p51, %p52
    %p54 = scmp.ne.s32.totalorder %s46, %s48
    %p55 = scmp.eq.s32.totalorder %s17, 1
    %p56 = por %p54, %p55
    %p57 = scmp.ne.s32.totalorder %s48, %s49
    %p58 = scmp.eq.s32.totalorder %s17, 0
    %p59 = por %p57, %p58
    %p60 = scmp.ne.s32.totalorder %s48, %s49
    %p61 = scmp.eq.s32.totalorder %s18, 1
    %p62 = por %p60, %p61
    %p64 = scmp.ne.s32.totalorder %s49, %s63
    %p65 = scmp.eq.s32.totalorder %s18, 0
    %p66 = por %p64, %p65
    %s68 = sadd.s32 %s67, 1
    %p71 = scmp.eq.s32.totalorder %s12, 1
    %p72 = scmp.ne.s32.totalorder %s67, %s69
    %p73 = scmp.eq.s32.totalorder %s12, 0
    %p74 = por %p72, %p73
    %p75 = scmp.ne.s32.totalorder %s67, %s69
    %p76 = scmp.eq.s32.totalorder %s17, 1
    %p77 = por %p75, %p76
    %p78 = scmp.ne.s32.totalorder %s69, %s70
    %p79 = scmp.eq.s32.totalorder %s17, 0
    %p80 = por %p78, %p79
    %p81 = scmp.ne.s32.totalorder %s69, %s70
    %p82 = scmp.eq.s32.totalorder %s18, 1
    %p83 = por %p81, %p82
    %p85 = scmp.ne.s32.totalorder %s70, %s84
    %p86 = scmp.eq.s32.totalorder %s18, 0
    %p87 = por %p85, %p86
    %s89 = sadd.s32 %s88, 1
    %p92 = scmp.eq.s32.totalorder %s12, 1
    %p93 = scmp.ne.s32.totalorder %s88, %s90
    %p94 = scmp.eq.s32.totalorder %s12, 0
    %p95 = por %p93, %p94
    %p96 = scmp.ne.s32.totalorder %s88, %s90
    %p97 = scmp.eq.s32.totalorder %s17, 1
    %p98 = por %p96, %p97
    %p99 = scmp.ne.s32.totalorder %s90, %s91
    %p100 = scmp.eq.s32.totalorder %s17, 0
    %p101 = por %p99, %p100
    %p102 = scmp.ne.s32.totalorder %s90, %s91
    %p103 = scmp.eq.s32.totalorder %s18, 1
    %p104 = por %p102, %p103
    %p106 = scmp.ne.s32.totalorder %s91, %s105
    %p107 = scmp.eq.s32.totalorder %s18, 0
    %p108 = por %p106, %p107
    %s109 = ssub.s32 %s12, %s19
    %p110 = scmp.eq.s32.totalorder %s109, 0
    %s112 = sadd.s32 %s111, 1
    %s113 = scalar_select %p110, %s111, %s112
    %p116 = pneg %p110
    %p117 = scmp.eq.s32.totalorder %s12, 1
    %p118 = por %p116, %p117
    %p119 = scmp.ne.s32.totalorder %s111, %s114
    %p120 = scmp.eq.s32.totalorder %s12, 0
    %p121 = por %p119, %p120
    %p122 = scmp.ne.s32.totalorder %s111, %s114
    %p123 = scmp.eq.s32.totalorder %s17, 1
    %p124 = por %p122, %p123
    %p125 = scmp.ne.s32.totalorder %s114, %s115
    %p126 = scmp.eq.s32.totalorder %s17, 0
    %p127 = por %p125, %p126
    %p128 = scmp.ne.s32.totalorder %s114, %s115
    %p129 = scmp.eq.s32.totalorder %s18, 1
    %p130 = por %p128, %p129
    %p132 = scmp.ne.s32.totalorder %s115, %s131
    %p133 = scmp.eq.s32.totalorder %s18, 0
    %p134 = por %p132, %p133
    %s135 = ssub.s32 %s12, %s19
    %p136 = scmp.eq.s32.totalorder %s135, 0
    %s138 = sadd.s32 %s137, 1
    %s139 = scalar_select %p136, %s137, %s138
    %p142 = pneg %p136
    %p143 = scmp.eq.s32.totalorder %s12, 1
    %p144 = por %p142, %p143
    %p145 = scmp.ne.s32.totalorder %s137, %s140
    %p146 = scmp.eq.s32.totalorder %s12, 0
    %p147 = por %p145, %p146
    %p148 = scmp.ne.s32.totalorder %s137, %s140
    %p149 = scmp.eq.s32.totalorder %s17, 1
    %p150 = por %p148, %p149
    %p151 = scmp.ne.s32.totalorder %s140, %s141
    %p152 = scmp.eq.s32.totalorder %s17, 0
    %p153 = por %p151, %p152
    %p154 = scmp.ne.s32.totalorder %s140, %s141
    %p155 = scmp.eq.s32.totalorder %s18, 1
    %p156 = por %p154, %p155
    %p158 = scmp.ne.s32.totalorder %s141, %s157
    %p159 = scmp.eq.s32.totalorder %s18, 0
    %p160 = por %p158, %p159
    %p161 = scmp.le.s32.totalorder 1, %s12
    %p162 = scmp.lt.s32.totalorder %s12, 3
    %p163 = pnand %p161, %p162
    %p164 = pneg %p163
    // Predicated region
    $region9: #{down_forward.4} parent=5 // pred_check
      _
    $region10: #{down_forward.4} parent=5 // pred_check_branch
      %166 = sbr.rel (%p163) target = $region12
    $region11: #{down_forward.4} parent=5 // pred_region
      %s167 = ssub.s32 %s12, 1
      // Predicated region
      $region13: #{down_forward.4} parent=11 // pred_check
        %p168 = pneg %p59
      $region14: #{down_forward.4} parent=11 // pred_check_branch
        %170 = sbr.rel (%p168) target = $region16
      $region15: #{down_forward.4} parent=11 // pred_region
        _
      $region16: #{down_forward.4} parent=11 // pred_fallthru
        _
      // Predicated region
      $region17: #{down_forward.4} parent=11 // pred_check
        %p171 = pneg %p80
      $region18: #{down_forward.4} parent=11 // pred_check_branch
        %173 = sbr.rel (%p171) target = $region20
      $region19: #{down_forward.4} parent=11 // pred_region
        _
      $region20: #{down_forward.4} parent=11 // pred_fallthru
        _
      // Predicated region
      $region21: #{down_forward.4} parent=11 // pred_check
        %p174 = pneg %p101
      $region22: #{down_forward.4} parent=11 // pred_check_branch
        %176 = sbr.rel (%p174) target = $region24
      $region23: #{down_forward.4} parent=11 // pred_region
        _
      $region24: #{down_forward.4} parent=11 // pred_fallthru
        _
    $region12: #{down_forward.4} parent=5 // pred_fallthru
      _
    %p177 = scmp.lt.s32.totalorder %s12, 2
    // Predicated region
    $region25: #{down_forward.4} parent=5 // pred_check
      %p178 = pneg %p177
    $region26: #{down_forward.4} parent=5 // pred_check_branch
      %180 = sbr.rel (%p178) target = $region28
    $region27: #{down_forward.4} parent=5 // pred_region
      // Predicated region
      $region29: #{down_forward.4} parent=27 // pred_check
        %p181 = pneg %p32
      $region30: #{down_forward.4} parent=27 // pred_check_branch
        %183 = sbr.rel (%p181) target = $region32
      $region31: #{down_forward.4} parent=27 // pred_region
        %s184 = smul.u32 8, %s12
        %p185 = scmp.lt.s32.totalorder %s184, 15
        %s186 = scalar_select %p185, %s184, 15
        %s187 = smul.addr %s186, 8
        %s188 = scalar_lea.vmem %s0, %s187
        %s189 = smul.u32 8, %s12
      $region32: #{down_forward.4} parent=27 // pred_fallthru
        _
    $region28: #{down_forward.4} parent=5 // pred_fallthru
      _
    %p190 = scmp.le.s32.totalorder 1, %s12
    %p191 = scmp.lt.s32.totalorder %s12, 3
    %p192 = pnand %p190, %p191
    %p193 = pneg %p192
    // Predicated region
    $region33: #{down_forward.4} parent=5 // pred_check
      _
    $region34: #{down_forward.4} parent=5 // pred_check_branch
      %195 = sbr.rel (%p192) target = $region36
    $region35: #{down_forward.4} parent=5 // pred_region
      %s196 = ssub.s32 %s12, 1
      %s197 = smul.u32 8, %s17
      %p198 = scmp.lt.s32.totalorder %s197, 15
      %s199 = scalar_select %p198, %s197, 15
      %s200 = smul.addr %s199, 8
      %s201 = scalar_lea.vmem %s0, %s200
      %p202 = pneg %p38
      %p203 = pneg %p35
      %p204 = pneg %p59
      %p205 = pneg %p56
      %p206 = pneg %p80
      %p207 = pneg %p77
      %p208 = pneg %p101
      %p209 = pneg %p98
      %p210 = pneg %p127
      %p211 = pneg %p124
      %s212 = smul.u32 8, %s17
      %p213 = scmp.lt.s32.totalorder %s212, 15
      %s214 = scalar_select %p213, %s212, 15
      %s215 = smul.addr %s214, 8
      %s216 = scalar_lea.vmem %s4, %s215
      %p217 = pneg %p153
      %p218 = pneg %p150
      %p219 = scmp.lt.s32.totalorder %s17, 1
      %s220 = scalar_select %p219, %s17, 1
      %s221 = smul.addr %s220, 2
      %s222 = scalar_lea.vmem %s5, %s221
      %s223 = smul.u32 8, %s17
      %p224 = scmp.lt.s32.totalorder %s223, 15
      %s225 = scalar_select %p224, %s223, 15
      %s226 = smul.addr %s225, 8
      %s227 = scalar_lea.vmem %s0, %s226
      %s228 = smul.u32 8, %s17
      %s229 = smul.u32 8, %s17
      %p230 = scmp.lt.s32.totalorder %s229, 15
      %s231 = scalar_select %p230, %s229, 15
      %s232 = smul.addr %s231, 8
      %s233 = scalar_lea.vmem %s4, %s232
      %s234 = smul.u32 8, %s17
      %p235 = scmp.lt.s32.totalorder %s17, 1
      %s236 = scalar_select %p235, %s17, 1
      %s237 = smul.addr %s236, 2
      %s238 = scalar_lea.vmem %s5, %s237
      %239 = vst [vmem:[#allocation2] sm:$0xff] 0.0
      %240 = vst [vmem:[#allocation2 + $0x8] sm:$0x3] 0.0
      %241 = vst [vmem:[#allocation2 + $0x10] sm:$0xff] 0.0
      %242 = vst [vmem:[#allocation2 + $0x18] sm:$0x3] 0.0
      %243 = vst [vmem:[#allocation2 + $0x20] sm:$0xff] 0.0
      %244 = vst [vmem:[#allocation2 + $0x28] sm:$0x3] 0.0
      %245 = vst [vmem:[#allocation2 + $0x30] sm:$0xff] 0.0
      %246 = vst [vmem:[#allocation2 + $0x38] sm:$0x3] 0.0
      %247 = vst [vmem:[#allocation2 + $0x40] sm:$0xff] 0.0
      %248 = vst [vmem:[#allocation2 + $0x48] sm:$0x3] 0.0
      %249 = vst [vmem:[#allocation2 + $0x50] sm:$0xff] 0.0
      %250 = vst [vmem:[#allocation2 + $0x58] sm:$0x3] 0.0
      %251 = vst [vmem:[#allocation2 + $0x60] sm:$0xff] 0.0
      %252 = vst [vmem:[#allocation2 + $0x68] sm:$0x3] 0.0
      %253 = vst [vmem:[#allocation2 + $0x70] sm:$0xff] 0.0
      %254 = vst [vmem:[#allocation2 + $0x78] sm:$0x3] 0.0
      %255 = vst [vmem:[#allocation2 + $0x80] sm:$0xff] 0.0
      %256 = vst [vmem:[#allocation2 + $0x88] sm:$0x3] 0.0
      %257 = vst [vmem:[#allocation2 + $0x90] sm:$0xff] 0.0
      %258 = vst [vmem:[#allocation2 + $0x98] sm:$0x3] 0.0
      %v259 = vld [vmem:[%s227] sm:$0xff]
      %v260 = vld [vmem:[%s227 + $0x8] sm:$0xff]
      %v261 = vld [vmem:[%s227 + $0x10] sm:$0xff]
      %v262 = vld [vmem:[%s227 + $0x18] sm:$0xff]
      %v263 = vld [vmem:[%s227 + $0x20] sm:$0xff]
      %v264 = vld [vmem:[%s227 + $0x28] sm:$0xff]
      %v265 = vld [vmem:[%s227 + $0x30] sm:$0xff]
      %v266 = vld [vmem:[%s227 + $0x38] sm:$0xff]
      %v267 = vld [vmem:[%s1] sm:$0x1]
      %v269 = vlaneseq
      %v270 = vshrl.u32 %v269, 7
      %v271 = vsub.s32 0, %v270
      %v272 = vrot.slane %v267, %v271
      %v274 = vmul.f32 %v259, %v272
      %v275 = vmul.f32 %v260, %v272
      %v276 = vmul.f32 %v261, %v272
      %v277 = vmul.f32 %v262, %v272
      %v278 = vmul.f32 %v263, %v272
      %v279 = vmul.f32 %v264, %v272
      %v280 = vmul.f32 %v265, %v272
      %v281 = vmul.f32 %v266, %v272
      %v282 = vld [vmem:[%s2] sm:$0x1]
      %v284 = vlaneseq
      %v285 = vshrl.u32 %v284, 7
      %v286 = vsub.s32 0, %v285
      %v287 = vrot.slane %v282, %v286
      %v289 = vadd.f32 %v274, %v287
      %v290 = vadd.f32 %v275, %v287
      %v291 = vadd.f32 %v276, %v287
      %v292 = vadd.f32 %v277, %v287
      %v293 = vadd.f32 %v278, %v287
      %v294 = vadd.f32 %v279, %v287
      %v295 = vadd.f32 %v280, %v287
      %v296 = vadd.f32 %v281, %v287
      %v297 = vmax.f32 %v289, 0.0
      %v298 = vmax.f32 %v290, 0.0
      %v299 = vmax.f32 %v291, 0.0
      %v300 = vmax.f32 %v292, 0.0
      %v301 = vmax.f32 %v293, 0.0
      %v302 = vmax.f32 %v294, 0.0
      %v303 = vmax.f32 %v295, 0.0
      %v304 = vmax.f32 %v296, 0.0
      %s305 = scalar_lea.vmem [#allocation2], 16
      %306 = vst [vmem:[%s305 + $0x1] sm:$0xff] %v297
      %307 = vst [vmem:[%s305 + $0x11] sm:$0xff] %v298
      %308 = vst [vmem:[%s305 + $0x21] sm:$0xff] %v299
      %309 = vst [vmem:[%s305 + $0x31] sm:$0xff] %v300
      %310 = vst [vmem:[%s305 + $0x41] sm:$0xff] %v301
      %311 = vst [vmem:[%s305 + $0x51] sm:$0xff] %v302
      %312 = vst [vmem:[%s305 + $0x61] sm:$0xff] %v303
      %313 = vst [vmem:[%s305 + $0x71] sm:$0xff] %v304
      %v314 = vld [vmem:[#allocation2] sm:$0xff]
      %v315 = vld [vmem:[#allocation2 + $0x10] sm:$0xff]
      %v316 = vld [vmem:[#allocation2 + $0x20] sm:$0xff]
      %v317 = vld [vmem:[#allocation2 + $0x30] sm:$0xff]
      %v318 = vld [vmem:[#allocation2 + $0x40] sm:$0xff]
      %v319 = vld [vmem:[#allocation2 + $0x50] sm:$0xff]
      %v320 = vld [vmem:[#allocation2 + $0x60] sm:$0xff]
      %v321 = vld [vmem:[#allocation2 + $0x70] sm:$0xff]
      %322 = vst [vmem:[#allocation3] sm:$0xff] %v314
      %323 = vst [vmem:[#allocation3 + $0x48] sm:$0xff] %v315
      %324 = vst [vmem:[#allocation3 + $0x90] sm:$0xff] %v316
      %325 = vst [vmem:[#allocation3 + $0xd8] sm:$0xff] %v317
      %326 = vst [vmem:[#allocation3 + $0x120] sm:$0xff] %v318
      %327 = vst [vmem:[#allocation3 + $0x168] sm:$0xff] %v319
      %328 = vst [vmem:[#allocation3 + $0x1b0] sm:$0xff] %v320
      %329 = vst [vmem:[#allocation3 + $0x1f8] sm:$0xff] %v321
      %v330 = vld [vmem:[#allocation2 + $0x1] sm:$0xff]
      %v331 = vld [vmem:[#allocation2 + $0x11] sm:$0xff]
      %v332 = vld [vmem:[#allocation2 + $0x21] sm:$0xff]
      %v333 = vld [vmem:[#allocation2 + $0x31] sm:$0xff]
      %v334 = vld [vmem:[#allocation2 + $0x41] sm:$0xff]
      %v335 = vld [vmem:[#allocation2 + $0x51] sm:$0xff]
      %v336 = vld [vmem:[#allocation2 + $0x61] sm:$0xff]
      %v337 = vld [vmem:[#allocation2 + $0x71] sm:$0xff]
      %338 = vst [vmem:[#allocation3 + $0x8] sm:$0xff] %v330
      %339 = vst [vmem:[#allocation3 + $0x50] sm:$0xff] %v331
      %340 = vst [vmem:[#allocation3 + $0x98] sm:$0xff] %v332
      %341 = vst [vmem:[#allocation3 + $0xe0] sm:$0xff] %v333
      %342 = vst [vmem:[#allocation3 + $0x128] sm:$0xff] %v334
      %343 = vst [vmem:[#allocation3 + $0x170] sm:$0xff] %v335
      %344 = vst [vmem:[#allocation3 + $0x1b8] sm:$0xff] %v336
      %345 = vst [vmem:[#allocation3 + $0x200] sm:$0xff] %v337
      %v346 = vld [vmem:[#allocation2 + $0x2] sm:$0xff]
      %v347 = vld [vmem:[#allocation2 + $0x12] sm:$0xff]
      %v348 = vld [vmem:[#allocation2 + $0x22] sm:$0xff]
      %v349 = vld [vmem:[#allocation2 + $0x32] sm:$0xff]
      %v350 = vld [vmem:[#allocation2 + $0x42] sm:$0xff]
      %v351 = vld [vmem:[#allocation2 + $0x52] sm:$0xff]
      %v352 = vld [vmem:[#allocation2 + $0x62] sm:$0xff]
      %v353 = vld [vmem:[#allocation2 + $0x72] sm:$0xff]
      %354 = vst [vmem:[#allocation3 + $0x10] sm:$0xff] %v346
      %355 = vst [vmem:[#allocation3 + $0x58] sm:$0xff] %v347
      %356 = vst [vmem:[#allocation3 + $0xa0] sm:$0xff] %v348
      %357 = vst [vmem:[#allocation3 + $0xe8] sm:$0xff] %v349
      %358 = vst [vmem:[#allocation3 + $0x130] sm:$0xff] %v350
      %359 = vst [vmem:[#allocation3 + $0x178] sm:$0xff] %v351
      %360 = vst [vmem:[#allocation3 + $0x1c0] sm:$0xff] %v352
      %361 = vst [vmem:[#allocation3 + $0x208] sm:$0xff] %v353
      %v362 = vld [vmem:[%s305] sm:$0xff]
      %v363 = vld [vmem:[%s305 + $0x10] sm:$0xff]
      %v364 = vld [vmem:[%s305 + $0x20] sm:$0xff]
      %v365 = vld [vmem:[%s305 + $0x30] sm:$0xff]
      %v366 = vld [vmem:[%s305 + $0x40] sm:$0xff]
      %v367 = vld [vmem:[%s305 + $0x50] sm:$0xff]
      %v368 = vld [vmem:[%s305 + $0x60] sm:$0xff]
      %v369 = vld [vmem:[%s305 + $0x70] sm:$0xff]
      %370 = vst [vmem:[#allocation3 + $0x18] sm:$0xff] %v362
      %371 = vst [vmem:[#allocation3 + $0x60] sm:$0xff] %v363
      %372 = vst [vmem:[#allocation3 + $0xa8] sm:$0xff] %v364
      %373 = vst [vmem:[#allocation3 + $0xf0] sm:$0xff] %v365
      %374 = vst [vmem:[#allocation3 + $0x138] sm:$0xff] %v366
      %375 = vst [vmem:[#allocation3 + $0x180] sm:$0xff] %v367
      %376 = vst [vmem:[#allocation3 + $0x1c8] sm:$0xff] %v368
      %377 = vst [vmem:[#allocation3 + $0x210] sm:$0xff] %v369
      %v378 = vld [vmem:[%s305 + $0x1] sm:$0xff]
      %v379 = vld [vmem:[%s305 + $0x11] sm:$0xff]
      %v380 = vld [vmem:[%s305 + $0x21] sm:$0xff]
      %v381 = vld [vmem:[%s305 + $0x31] sm:$0xff]
      %v382 = vld [vmem:[%s305 + $0x41] sm:$0xff]
      %v383 = vld [vmem:[%s305 + $0x51] sm:$0xff]
      %v384 = vld [vmem:[%s305 + $0x61] sm:$0xff]
      %v385 = vld [vmem:[%s305 + $0x71] sm:$0xff]
      %386 = vst [vmem:[#allocation3 + $0x20] sm:$0xff] %v378
      %387 = vst [vmem:[#allocation3 + $0x68] sm:$0xff] %v379
      %388 = vst [vmem:[#allocation3 + $0xb0] sm:$0xff] %v380
      %389 = vst [vmem:[#allocation3 + $0xf8] sm:$0xff] %v381
      %390 = vst [vmem:[#allocation3 + $0x140] sm:$0xff] %v382
      %391 = vst [vmem:[#allocation3 + $0x188] sm:$0xff] %v383
      %392 = vst [vmem:[#allocation3 + $0x1d0] sm:$0xff] %v384
      %393 = vst [vmem:[#allocation3 + $0x218] sm:$0xff] %v385
      %v394 = vld [vmem:[%s305 + $0x2] sm:$0xff]
      %v395 = vld [vmem:[%s305 + $0x12] sm:$0xff]
      %v396 = vld [vmem:[%s305 + $0x22] sm:$0xff]
      %v397 = vld [vmem:[%s305 + $0x32] sm:$0xff]
      %v398 = vld [vmem:[%s305 + $0x42] sm:$0xff]
      %v399 = vld [vmem:[%s305 + $0x52] sm:$0xff]
      %v400 = vld [vmem:[%s305 + $0x62] sm:$0xff]
      %v401 = vld [vmem:[%s305 + $0x72] sm:$0xff]
      %402 = vst [vmem:[#allocation3 + $0x28] sm:$0xff] %v394
      %403 = vst [vmem:[#allocation3 + $0x70] sm:$0xff] %v395
      %404 = vst [vmem:[#allocation3 + $0xb8] sm:$0xff] %v396
      %405 = vst [vmem:[#allocation3 + $0x100] sm:$0xff] %v397
      %406 = vst [vmem:[#allocation3 + $0x148] sm:$0xff] %v398
      %407 = vst [vmem:[#allocation3 + $0x190] sm:$0xff] %v399
      %408 = vst [vmem:[#allocation3 + $0x1d8] sm:$0xff] %v400
      %409 = vst [vmem:[#allocation3 + $0x220] sm:$0xff] %v401
      %s410 = scalar_lea.vmem [#allocation2], 32
      %v411 = vld [vmem:[%s410] sm:$0xff]
      %v412 = vld [vmem:[%s410 + $0x10] sm:$0xff]
      %v413 = vld [vmem:[%s410 + $0x20] sm:$0xff]
      %v414 = vld [vmem:[%s410 + $0x30] sm:$0xff]
      %v415 = vld [vmem:[%s410 + $0x40] sm:$0xff]
      %v416 = vld [vmem:[%s410 + $0x50] sm:$0xff]
      %v417 = vld [vmem:[%s410 + $0x60] sm:$0xff]
      %v418 = vld [vmem:[%s410 + $0x70] sm:$0xff]
      %419 = vst [vmem:[#allocation3 + $0x30] sm:$0xff] %v411
      %420 = vst [vmem:[#allocation3 + $0x78] sm:$0xff] %v412
      %421 = vst [vmem:[#allocation3 + $0xc0] sm:$0xff] %v413
      %422 = vst [vmem:[#allocation3 + $0x108] sm:$0xff] %v414
      %423 = vst [vmem:[#allocation3 + $0x150] sm:$0xff] %v415
      %424 = vst [vmem:[#allocation3 + $0x198] sm:$0xff] %v416
      %425 = vst [vmem:[#allocation3 + $0x1e0] sm:$0xff] %v417
      %426 = vst [vmem:[#allocation3 + $0x228] sm:$0xff] %v418
      %v427 = vld [vmem:[%s410 + $0x1] sm:$0xff]
      %v428 = vld [vmem:[%s410 + $0x11] sm:$0xff]
      %v429 = vld [vmem:[%s410 + $0x21] sm:$0xff]
      %v430 = vld [vmem:[%s410 + $0x31] sm:$0xff]
      %v431 = vld [vmem:[%s410 + $0x41] sm:$0xff]
      %v432 = vld [vmem:[%s410 + $0x51] sm:$0xff]
      %v433 = vld [vmem:[%s410 + $0x61] sm:$0xff]
      %v434 = vld [vmem:[%s410 + $0x71] sm:$0xff]
      %435 = vst [vmem:[#allocation3 + $0x38] sm:$0xff] %v427
      %436 = vst [vmem:[#allocation3 + $0x80] sm:$0xff] %v428
      %437 = vst [vmem:[#allocation3 + $0xc8] sm:$0xff] %v429
      %438 = vst [vmem:[#allocation3 + $0x110] sm:$0xff] %v430
      %439 = vst [vmem:[#allocation3 + $0x158] sm:$0xff] %v431
      %440 = vst [vmem:[#allocation3 + $0x1a0] sm:$0xff] %v432
      %441 = vst [vmem:[#allocation3 + $0x1e8] sm:$0xff] %v433
      %442 = vst [vmem:[#allocation3 + $0x230] sm:$0xff] %v434
      %v443 = vld [vmem:[%s410 + $0x2] sm:$0xff]
      %v444 = vld [vmem:[%s410 + $0x12] sm:$0xff]
      %v445 = vld [vmem:[%s410 + $0x22] sm:$0xff]
      %v446 = vld [vmem:[%s410 + $0x32] sm:$0xff]
      %v447 = vld [vmem:[%s410 + $0x42] sm:$0xff]
      %v448 = vld [vmem:[%s410 + $0x52] sm:$0xff]
      %v449 = vld [vmem:[%s410 + $0x62] sm:$0xff]
      %v450 = vld [vmem:[%s410 + $0x72] sm:$0xff]
      %451 = vst [vmem:[#allocation3 + $0x40] sm:$0xff] %v443
      %452 = vst [vmem:[#allocation3 + $0x88] sm:$0xff] %v444
      %453 = vst [vmem:[#allocation3 + $0xd0] sm:$0xff] %v445
      %454 = vst [vmem:[#allocation3 + $0x118] sm:$0xff] %v446
      %455 = vst [vmem:[#allocation3 + $0x160] sm:$0xff] %v447
      %456 = vst [vmem:[#allocation3 + $0x1a8] sm:$0xff] %v448
      %457 = vst [vmem:[#allocation3 + $0x1f0] sm:$0xff] %v449
      %458 = vst [vmem:[#allocation3 + $0x238] sm:$0xff] %v450
      %v459 = vld [vmem:[#allocation3] sm:$0xff]
      %v460 = vld [vmem:[#allocation3 + $0x8] sm:$0xff]
      %v461 = vld [vmem:[#allocation3 + $0x10] sm:$0xff]
      %v462 = vld [vmem:[#allocation3 + $0x18] sm:$0xff]
      %v463 = vld [vmem:[#allocation3 + $0x20] sm:$0xff]
      %v464 = vld [vmem:[#allocation3 + $0x28] sm:$0xff]
      %v465 = vld [vmem:[#allocation3 + $0x30] sm:$0xff]
      %v466 = vld [vmem:[#allocation3 + $0x38] sm:$0xff]
      %v467 = vld [vmem:[#allocation3 + $0x40] sm:$0xff]
      %v468 = vld [vmem:[#allocation3 + $0x48] sm:$0xff]
      %v469 = vld [vmem:[#allocation3 + $0x50] sm:$0xff]
      %v470 = vld [vmem:[#allocation3 + $0x58] sm:$0xff]
      %v471 = vld [vmem:[#allocation3 + $0x60] sm:$0xff]
      %v472 = vld [vmem:[#allocation3 + $0x68] sm:$0xff]
      %v473 = vld [vmem:[#allocation3 + $0x70] sm:$0xff]
      %v474 = vld [vmem:[#allocation3 + $0x78] sm:$0xff]
      %v475 = vld [vmem:[#allocation3 + $0x80] sm:$0xff]
      %v476 = vld [vmem:[#allocation3 + $0x88] sm:$0xff]
      %v477 = vld [vmem:[#allocation3 + $0x90] sm:$0xff]
      %v478 = vld [vmem:[#allocation3 + $0x98] sm:$0xff]
      %v479 = vld [vmem:[#allocation3 + $0xa0] sm:$0xff]
      %v480 = vld [vmem:[#allocation3 + $0xa8] sm:$0xff]
      %v481 = vld [vmem:[#allocation3 + $0xb0] sm:$0xff]
      %v482 = vld [vmem:[#allocation3 + $0xb8] sm:$0xff]
      %v483 = vld [vmem:[#allocation3 + $0xc0] sm:$0xff]
      %v484 = vld [vmem:[#allocation3 + $0xc8] sm:$0xff]
      %v485 = vld [vmem:[#allocation3 + $0xd0] sm:$0xff]
      %v486 = vld [vmem:[#allocation3 + $0xd8] sm:$0xff]
      %v487 = vld [vmem:[#allocation3 + $0xe0] sm:$0xff]
      %v488 = vld [vmem:[#allocation3 + $0xe8] sm:$0xff]
      %v489 = vld [vmem:[#allocation3 + $0xf0] sm:$0xff]
      %v490 = vld [vmem:[#allocation3 + $0xf8] sm:$0xff]
      %v491 = vld [vmem:[#allocation3 + $0x100] sm:$0xff]
      %v492 = vld [vmem:[#allocation3 + $0x108] sm:$0xff]
      %v493 = vld [vmem:[#allocation3 + $0x110] sm:$0xff]
      %v494 = vld [vmem:[#allocation3 + $0x118] sm:$0xff]
      %v495 = vld [vmem:[#allocation3 + $0x120] sm:$0xff]
      %v496 = vld [vmem:[#allocation3 + $0x128] sm:$0xff]
      %v497 = vld [vmem:[#allocation3 + $0x130] sm:$0xff]
      %v498 = vld [vmem:[#allocation3 + $0x138] sm:$0xff]
      %v499 = vld [vmem:[#allocation3 + $0x140] sm:$0xff]
      %v500 = vld [vmem:[#allocation3 + $0x148] sm:$0xff]
      %v501 = vld [vmem:[#allocation3 + $0x150] sm:$0xff]
      %v502 = vld [vmem:[#allocation3 + $0x158] sm:$0xff]
      %v503 = vld [vmem:[#allocation3 + $0x160] sm:$0xff]
      %v504 = vld [vmem:[#allocation3 + $0x168] sm:$0xff]
      %v505 = vld [vmem:[#allocation3 + $0x170] sm:$0xff]
      %v506 = vld [vmem:[#allocation3 + $0x178] sm:$0xff]
      %v507 = vld [vmem:[#allocation3 + $0x180] sm:$0xff]
      %v508 = vld [vmem:[#allocation3 + $0x188] sm:$0xff]
      %v509 = vld [vmem:[#allocation3 + $0x190] sm:$0xff]
      %v510 = vld [vmem:[#allocation3 + $0x198] sm:$0xff]
      %v511 = vld [vmem:[#allocation3 + $0x1a0] sm:$0xff]
      %v512 = vld [vmem:[#allocation3 + $0x1a8] sm:$0xff]
      %v513 = vld [vmem:[#allocation3 + $0x1b0] sm:$0xff]
      %v514 = vld [vmem:[#allocation3 + $0x1b8] sm:$0xff]
      %v515 = vld [vmem:[#allocation3 + $0x1c0] sm:$0xff]
      %v516 = vld [vmem:[#allocation3 + $0x1c8] sm:$0xff]
      %v517 = vld [vmem:[#allocation3 + $0x1d0] sm:$0xff]
      %v518 = vld [vmem:[#allocation3 + $0x1d8] sm:$0xff]
      %v519 = vld [vmem:[#allocation3 + $0x1e0] sm:$0xff]
      %v520 = vld [vmem:[#allocation3 + $0x1e8] sm:$0xff]
      %v521 = vld [vmem:[#allocation3 + $0x1f0] sm:$0xff]
      %v522 = vld [vmem:[#allocation3 + $0x1f8] sm:$0xff]
      %v523 = vld [vmem:[#allocation3 + $0x200] sm:$0xff]
      %v524 = vld [vmem:[#allocation3 + $0x208] sm:$0xff]
      %v525 = vld [vmem:[#allocation3 + $0x210] sm:$0xff]
      %v526 = vld [vmem:[#allocation3 + $0x218] sm:$0xff]
      %v527 = vld [vmem:[#allocation3 + $0x220] sm:$0xff]
      %v528 = vld [vmem:[#allocation3 + $0x228] sm:$0xff]
      %v529 = vld [vmem:[#allocation3 + $0x230] sm:$0xff]
      %v530 = vld [vmem:[#allocation3 + $0x238] sm:$0xff]
      %v531 = vld [vmem:[%s3] sm:$0xff]
      %v532 = vld [vmem:[%s3 + $0x8] sm:$0xff]
      %v533 = vld [vmem:[%s3 + $0x10] sm:$0xff]
      %v534 = vld [vmem:[%s3 + $0x18] sm:$0xff]
      %v535 = vld [vmem:[%s3 + $0x20] sm:$0xff]
      %v536 = vld [vmem:[%s3 + $0x28] sm:$0xff]
      %v537 = vld [vmem:[%s3 + $0x30] sm:$0xff]
      %v538 = vld [vmem:[%s3 + $0x38] sm:$0xff]
      %v539 = vld [vmem:[%s3 + $0x40] sm:$0xff]
      %v540 = vld [vmem:[%s3 + $0x48] sm:$0xff]
      %v541 = vld [vmem:[%s3 + $0x50] sm:$0xff]
      %v542 = vld [vmem:[%s3 + $0x58] sm:$0xff]
      %v543 = vld [vmem:[%s3 + $0x60] sm:$0xff]
      %v544 = vld [vmem:[%s3 + $0x68] sm:$0xff]
      %v545 = vld [vmem:[%s3 + $0x70] sm:$0xff]
      %v546 = vld [vmem:[%s3 + $0x78] sm:$0xff]
      %v547 = vld [vmem:[%s3 + $0x80] sm:$0xff]
      %v548 = vld [vmem:[%s3 + $0x88] sm:$0xff]
      %v549 = vld [vmem:[%s3 + $0x90] sm:$0xff]
      %v550 = vld [vmem:[%s3 + $0x98] sm:$0xff]
      %v551 = vld [vmem:[%s3 + $0xa0] sm:$0xff]
      %v552 = vld [vmem:[%s3 + $0xa8] sm:$0xff]
      %v553 = vld [vmem:[%s3 + $0xb0] sm:$0xff]
      %v554 = vld [vmem:[%s3 + $0xb8] sm:$0xff]
      %v555 = vld [vmem:[%s3 + $0xc0] sm:$0xff]
      %v556 = vld [vmem:[%s3 + $0xc8] sm:$0xff]
      %v557 = vld [vmem:[%s3 + $0xd0] sm:$0xff]
      %v558 = vld [vmem:[%s3 + $0xd8] sm:$0xff]
      %v559 = vld [vmem:[%s3 + $0xe0] sm:$0xff]
      %v560 = vld [vmem:[%s3 + $0xe8] sm:$0xff]
      %v561 = vld [vmem:[%s3 + $0xf0] sm:$0xff]
      %v562 = vld [vmem:[%s3 + $0xf8] sm:$0xff]
      %v563 = vld [vmem:[%s3 + $0x100] sm:$0xff]
      %v564 = vld [vmem:[%s3 + $0x108] sm:$0xff]
      %v565 = vld [vmem:[%s3 + $0x110] sm:$0xff]
      %v566 = vld [vmem:[%s3 + $0x118] sm:$0xff]
      %v567 = vld [vmem:[%s3 + $0x120] sm:$0xff]
      %v568 = vld [vmem:[%s3 + $0x128] sm:$0xff]
      %v569 = vld [vmem:[%s3 + $0x130] sm:$0xff]
      %v570 = vld [vmem:[%s3 + $0x138] sm:$0xff]
      %v571 = vld [vmem:[%s3 + $0x140] sm:$0xff]
      %v572 = vld [vmem:[%s3 + $0x148] sm:$0xff]
      %v573 = vld [vmem:[%s3 + $0x150] sm:$0xff]
      %v574 = vld [vmem:[%s3 + $0x158] sm:$0xff]
      %v575 = vld [vmem:[%s3 + $0x160] sm:$0xff]
      %v576 = vld [vmem:[%s3 + $0x168] sm:$0xff]
      %v577 = vld [vmem:[%s3 + $0x170] sm:$0xff]
      %v578 = vld [vmem:[%s3 + $0x178] sm:$0xff]
      %v579 = vld [vmem:[%s3 + $0x180] sm:$0xff]
      %v580 = vld [vmem:[%s3 + $0x188] sm:$0xff]
      %v581 = vld [vmem:[%s3 + $0x190] sm:$0xff]
      %v582 = vld [vmem:[%s3 + $0x198] sm:$0xff]
      %v583 = vld [vmem:[%s3 + $0x1a0] sm:$0xff]
      %v584 = vld [vmem:[%s3 + $0x1a8] sm:$0xff]
      %v585 = vld [vmem:[%s3 + $0x1b0] sm:$0xff]
      %v586 = vld [vmem:[%s3 + $0x1b8] sm:$0xff]
      %v587 = vld [vmem:[%s3 + $0x1c0] sm:$0xff]
      %v588 = vld [vmem:[%s3 + $0x1c8] sm:$0xff]
      %v589 = vld [vmem:[%s3 + $0x1d0] sm:$0xff]
      %v590 = vld [vmem:[%s3 + $0x1d8] sm:$0xff]
      %v591 = vld [vmem:[%s3 + $0x1e0] sm:$0xff]
      %v592 = vld [vmem:[%s3 + $0x1e8] sm:$0xff]
      %v593 = vld [vmem:[%s3 + $0x1f0] sm:$0xff]
      %v594 = vld [vmem:[%s3 + $0x1f8] sm:$0xff]
      %v595 = vld [vmem:[%s3 + $0x200] sm:$0xff]
      %v596 = vld [vmem:[%s3 + $0x208] sm:$0xff]
      %v597 = vld [vmem:[%s3 + $0x210] sm:$0xff]
      %v598 = vld [vmem:[%s3 + $0x218] sm:$0xff]
      %v599 = vld [vmem:[%s3 + $0x220] sm:$0xff]
      %v600 = vld [vmem:[%s3 + $0x228] sm:$0xff]
      %v601 = vld [vmem:[%s3 + $0x230] sm:$0xff]
      %v602 = vld [vmem:[%s3 + $0x238] sm:$0xff]
      %v603 = vld [vmem:[%s3 + $0x240] sm:$0xff]
      %v604 = vld [vmem:[%s3 + $0x248] sm:$0xff]
      %v605 = vld [vmem:[%s3 + $0x250] sm:$0xff]
      %v606 = vld [vmem:[%s3 + $0x258] sm:$0xff]
      %v607 = vld [vmem:[%s3 + $0x260] sm:$0xff]
      %v608 = vld [vmem:[%s3 + $0x268] sm:$0xff]
      %v609 = vld [vmem:[%s3 + $0x270] sm:$0xff]
      %v610 = vld [vmem:[%s3 + $0x278] sm:$0xff]
      %v611 = vld [vmem:[%s3 + $0x280] sm:$0xff]
      %v612 = vld [vmem:[%s3 + $0x288] sm:$0xff]
      %v613 = vld [vmem:[%s3 + $0x290] sm:$0xff]
      %v614 = vld [vmem:[%s3 + $0x298] sm:$0xff]
      %v615 = vld [vmem:[%s3 + $0x2a0] sm:$0xff]
      %v616 = vld [vmem:[%s3 + $0x2a8] sm:$0xff]
      %v617 = vld [vmem:[%s3 + $0x2b0] sm:$0xff]
      %v618 = vld [vmem:[%s3 + $0x2b8] sm:$0xff]
      %v619 = vld [vmem:[%s3 + $0x2c0] sm:$0xff]
      %v620 = vld [vmem:[%s3 + $0x2c8] sm:$0xff]
      %v621 = vld [vmem:[%s3 + $0x2d0] sm:$0xff]
      %v622 = vld [vmem:[%s3 + $0x2d8] sm:$0xff]
      %v623 = vld [vmem:[%s3 + $0x2e0] sm:$0xff]
      %v624 = vld [vmem:[%s3 + $0x2e8] sm:$0xff]
      %v625 = vld [vmem:[%s3 + $0x2f0] sm:$0xff]
      %v626 = vld [vmem:[%s3 + $0x2f8] sm:$0xff]
      %v627 = vld [vmem:[%s3 + $0x300] sm:$0xff]
      %v628 = vld [vmem:[%s3 + $0x308] sm:$0xff]
      %v629 = vld [vmem:[%s3 + $0x310] sm:$0xff]
      %v630 = vld [vmem:[%s3 + $0x318] sm:$0xff]
      %v631 = vld [vmem:[%s3 + $0x320] sm:$0xff]
      %v632 = vld [vmem:[%s3 + $0x328] sm:$0xff]
      %v633 = vld [vmem:[%s3 + $0x330] sm:$0xff]
      %v634 = vld [vmem:[%s3 + $0x338] sm:$0xff]
      %v635 = vld [vmem:[%s3 + $0x340] sm:$0xff]
      %v636 = vld [vmem:[%s3 + $0x348] sm:$0xff]
      %v637 = vld [vmem:[%s3 + $0x350] sm:$0xff]
      %v638 = vld [vmem:[%s3 + $0x358] sm:$0xff]
      %v639 = vld [vmem:[%s3 + $0x360] sm:$0xff]
      %v640 = vld [vmem:[%s3 + $0x368] sm:$0xff]
      %v641 = vld [vmem:[%s3 + $0x370] sm:$0xff]
      %v642 = vld [vmem:[%s3 + $0x378] sm:$0xff]
      %v643 = vld [vmem:[%s3 + $0x380] sm:$0xff]
      %v644 = vld [vmem:[%s3 + $0x388] sm:$0xff]
      %v645 = vld [vmem:[%s3 + $0x390] sm:$0xff]
      %v646 = vld [vmem:[%s3 + $0x398] sm:$0xff]
      %v647 = vld [vmem:[%s3 + $0x3a0] sm:$0xff]
      %v648 = vld [vmem:[%s3 + $0x3a8] sm:$0xff]
      %v649 = vld [vmem:[%s3 + $0x3b0] sm:$0xff]
      %v650 = vld [vmem:[%s3 + $0x3b8] sm:$0xff]
      %v651 = vld [vmem:[%s3 + $0x3c0] sm:$0xff]
      %v652 = vld [vmem:[%s3 + $0x3c8] sm:$0xff]
      %v653 = vld [vmem:[%s3 + $0x3d0] sm:$0xff]
      %v654 = vld [vmem:[%s3 + $0x3d8] sm:$0xff]
      %v655 = vld [vmem:[%s3 + $0x3e0] sm:$0xff]
      %v656 = vld [vmem:[%s3 + $0x3e8] sm:$0xff]
      %v657 = vld [vmem:[%s3 + $0x3f0] sm:$0xff]
      %v658 = vld [vmem:[%s3 + $0x3f8] sm:$0xff]
      %v659 = vld [vmem:[%s3 + $0x400] sm:$0xff]
      %v660 = vld [vmem:[%s3 + $0x408] sm:$0xff]
      %v661 = vld [vmem:[%s3 + $0x410] sm:$0xff]
      %v662 = vld [vmem:[%s3 + $0x418] sm:$0xff]
      %v663 = vld [vmem:[%s3 + $0x420] sm:$0xff]
      %v664 = vld [vmem:[%s3 + $0x428] sm:$0xff]
      %v665 = vld [vmem:[%s3 + $0x430] sm:$0xff]
      %v666 = vld [vmem:[%s3 + $0x438] sm:$0xff]
      %v667 = vld [vmem:[%s3 + $0x440] sm:$0xff]
      %v668 = vld [vmem:[%s3 + $0x448] sm:$0xff]
      %v669 = vld [vmem:[%s3 + $0x450] sm:$0xff]
      %v670 = vld [vmem:[%s3 + $0x458] sm:$0xff]
      %v671 = vld [vmem:[%s3 + $0x460] sm:$0xff]
      %v672 = vld [vmem:[%s3 + $0x468] sm:$0xff]
      %v673 = vld [vmem:[%s3 + $0x470] sm:$0xff]
      %v674 = vld [vmem:[%s3 + $0x478] sm:$0xff]
      %675 = vmatprep.subr.mxu0 0.0
      %676 = vmatpush1.msra.mxu0 %v546
      %677 = vmatprep.subr.mxu0 0.0
      %678 = vmatpush1.msra.mxu0 %v545
      %679 = vmatprep.subr.mxu0 0.0
      %680 = vmatpush1.msra.mxu0 %v544
      %681 = vmatprep.subr.mxu0 0.0
      %682 = vmatpush1.msra.mxu0 %v543
      %683 = vmatprep.subr.mxu0 0.0
      %684 = vmatpush1.msra.mxu0 %v542
      %685 = vmatprep.subr.mxu0 0.0
      %686 = vmatpush1.msra.mxu0 %v541
      %687 = vmatprep.subr.mxu0 0.0
      %688 = vmatpush1.msra.mxu0 %v540
      %689 = vmatprep.subr.mxu0 0.0
      %690 = vmatpush1.msra.mxu0 %v539
      %691 = vmatprep.subr.mxu0 0.0
      %692 = vmatpush1.msra.mxu0 %v538
      %693 = vmatprep.subr.mxu0 0.0
      %694 = vmatpush1.msra.mxu0 %v537
      %695 = vmatprep.subr.mxu0 0.0
      %696 = vmatpush1.msra.mxu0 %v536
      %697 = vmatprep.subr.mxu0 0.0
      %698 = vmatpush1.msra.mxu0 %v535
      %699 = vmatprep.subr.mxu0 0.0
      %700 = vmatpush1.msra.mxu0 %v534
      %701 = vmatprep.subr.mxu0 0.0
      %702 = vmatpush1.msra.mxu0 %v533
      %703 = vmatprep.subr.mxu0 0.0
      %704 = vmatpush1.msra.mxu0 %v532
      %705 = vmatprep.subr.mxu0 0.0
      %706 = vmatpush1.msra.mxu0 %v531
      %707 = vmatprep.subr.mxu0 0.0
      %708 = vmatpush2.msra.mxu0 %v562
      %709 = vmatprep.subr.mxu0 0.0
      %710 = vmatpush2.msra.mxu0 %v561
      %711 = vmatprep.subr.mxu0 0.0
      %712 = vmatpush2.msra.mxu0 %v560
      %713 = vmatprep.subr.mxu0 0.0
      %714 = vmatpush2.msra.mxu0 %v559
      %715 = vmatprep.subr.mxu0 0.0
      %716 = vmatpush2.msra.mxu0 %v558
      %717 = vmatprep.subr.mxu0 0.0
      %718 = vmatpush2.msra.mxu0 %v557
      %719 = vmatprep.subr.mxu0 0.0
      %720 = vmatpush2.msra.mxu0 %v556
      %721 = vmatprep.subr.mxu0 0.0
      %722 = vmatpush2.msra.mxu0 %v555
      %723 = vmatprep.subr.mxu0 0.0
      %724 = vmatpush2.msra.mxu0 %v554
      %725 = vmatprep.subr.mxu0 0.0
      %726 = vmatpush2.msra.mxu0 %v553
      %727 = vmatprep.subr.mxu0 0.0
      %728 = vmatpush2.msra.mxu0 %v552
      %729 = vmatprep.subr.mxu0 0.0
      %730 = vmatpush2.msra.mxu0 %v551
      %731 = vmatprep.subr.mxu0 0.0
      %732 = vmatpush2.msra.mxu0 %v550
      %733 = vmatprep.subr.mxu0 0.0
      %734 = vmatpush2.msra.mxu0 %v549
      %735 = vmatprep.subr.mxu0 0.0
      %736 = vmatpush2.msra.mxu0 %v548
      %737 = vmatprep.subr.mxu0 0.0
      %738 = vmatpush2.msra.mxu0 %v547
      %739 = vmatprep.mubr.f32.mxu0 %v460
      %740 = vmatmul.mubr.f32.gmra.mxu0 %v459
      %v741 = vpop.f32.mrf.mxu0
      %v742 = vadd.f32 0.0, %v741
      %v743 = vpop.f32.mrf.mxu0
      %744 = vmatprep.mubr.f32.mxu0 %v469
      %745 = vmatmul.mubr.f32.gmra.mxu0 %v468
      %v746 = vpop.f32.mrf.mxu0
      %v747 = vadd.f32 0.0, %v746
      %v748 = vpop.f32.mrf.mxu0
      %749 = vmatprep.mubr.f32.mxu0 %v478
      %750 = vmatmul.mubr.f32.gmra.mxu0 %v477
      %v751 = vpop.f32.mrf.mxu0
      %v752 = vadd.f32 0.0, %v751
      %v753 = vpop.f32.mrf.mxu0
      %754 = vmatprep.mubr.f32.mxu0 %v487
      %755 = vmatmul.mubr.f32.gmra.mxu0 %v486
      %v756 = vpop.f32.mrf.mxu0
      %v757 = vadd.f32 0.0, %v756
      %v758 = vpop.f32.mrf.mxu0
      %759 = vmatprep.mubr.f32.mxu0 %v496
      %760 = vmatmul.mubr.f32.gmra.mxu0 %v495
      %v761 = vpop.f32.mrf.mxu0
      %v762 = vadd.f32 0.0, %v761
      %v763 = vpop.f32.mrf.mxu0
      %764 = vmatprep.mubr.f32.mxu0 %v505
      %765 = vmatmul.mubr.f32.gmra.mxu0 %v504
      %v766 = vpop.f32.mrf.mxu0
      %v767 = vadd.f32 0.0, %v766
      %v768 = vpop.f32.mrf.mxu0
      %769 = vmatprep.mubr.f32.mxu0 %v514
      %770 = vmatmul.mubr.f32.gmra.mxu0 %v513
      %v771 = vpop.f32.mrf.mxu0
      %v772 = vadd.f32 0.0, %v771
      %v773 = vpop.f32.mrf.mxu0
      %774 = vmatprep.mubr.f32.mxu0 %v523
      %775 = vmatmul.mubr.f32.gmra.mxu0 %v522
      %v776 = vpop.f32.mrf.mxu0
      %v777 = vadd.f32 0.0, %v776
      %v778 = vpop.f32.mrf.mxu0
      %779 = vdwg.mxu0
      %780 = vmatprep.subr.mxu0 0.0
      %781 = vmatpush1.msra.mxu0 %v578
      %782 = vmatprep.subr.mxu0 0.0
      %783 = vmatpush1.msra.mxu0 %v577
      %784 = vmatprep.subr.mxu0 0.0
      %785 = vmatpush1.msra.mxu0 %v576
      %786 = vmatprep.subr.mxu0 0.0
      %787 = vmatpush1.msra.mxu0 %v575
      %788 = vmatprep.subr.mxu0 0.0
      %789 = vmatpush1.msra.mxu0 %v574
      %790 = vmatprep.subr.mxu0 0.0
      %791 = vmatpush1.msra.mxu0 %v573
      %792 = vmatprep.subr.mxu0 0.0
      %793 = vmatpush1.msra.mxu0 %v572
      %794 = vmatprep.subr.mxu0 0.0
      %795 = vmatpush1.msra.mxu0 %v571
      %796 = vmatprep.subr.mxu0 0.0
      %797 = vmatpush1.msra.mxu0 %v570
      %798 = vmatprep.subr.mxu0 0.0
      %799 = vmatpush1.msra.mxu0 %v569
      %800 = vmatprep.subr.mxu0 0.0
      %801 = vmatpush1.msra.mxu0 %v568
      %802 = vmatprep.subr.mxu0 0.0
      %803 = vmatpush1.msra.mxu0 %v567
      %804 = vmatprep.subr.mxu0 0.0
      %805 = vmatpush1.msra.mxu0 %v566
      %806 = vmatprep.subr.mxu0 0.0
      %807 = vmatpush1.msra.mxu0 %v565
      %808 = vmatprep.subr.mxu0 0.0
      %809 = vmatpush1.msra.mxu0 %v564
      %810 = vmatprep.subr.mxu0 0.0
      %811 = vmatpush1.msra.mxu0 %v563
      %812 = vmatprep.subr.mxu0 0.0
      %813 = vmatpush2.msra.mxu0 %v594
      %814 = vmatprep.subr.mxu0 0.0
      %815 = vmatpush2.msra.mxu0 %v593
      %816 = vmatprep.subr.mxu0 0.0
      %817 = vmatpush2.msra.mxu0 %v592
      %818 = vmatprep.subr.mxu0 0.0
      %819 = vmatpush2.msra.mxu0 %v591
      %820 = vmatprep.subr.mxu0 0.0
      %821 = vmatpush2.msra.mxu0 %v590
      %822 = vmatprep.subr.mxu0 0.0
      %823 = vmatpush2.msra.mxu0 %v589
      %824 = vmatprep.subr.mxu0 0.0
      %825 = vmatpush2.msra.mxu0 %v588
      %826 = vmatprep.subr.mxu0 0.0
      %827 = vmatpush2.msra.mxu0 %v587
      %828 = vmatprep.subr.mxu0 0.0
      %829 = vmatpush2.msra.mxu0 %v586
      %830 = vmatprep.subr.mxu0 0.0
      %831 = vmatpush2.msra.mxu0 %v585
      %832 = vmatprep.subr.mxu0 0.0
      %833 = vmatpush2.msra.mxu0 %v584
      %834 = vmatprep.subr.mxu0 0.0
      %835 = vmatpush2.msra.mxu0 %v583
      %836 = vmatprep.subr.mxu0 0.0
      %837 = vmatpush2.msra.mxu0 %v582
      %838 = vmatprep.subr.mxu0 0.0
      %839 = vmatpush2.msra.mxu0 %v581
      %840 = vmatprep.subr.mxu0 0.0
      %841 = vmatpush2.msra.mxu0 %v580
      %842 = vmatprep.subr.mxu0 0.0
      %843 = vmatpush2.msra.mxu0 %v579
      %844 = vmatprep.mubr.f32.mxu0 %v462
      %845 = vmatmul.mubr.f32.gmra.mxu0 %v461
      %v846 = vpop.f32.mrf.mxu0
      %v847 = vadd.f32 %v742, %v846
      %v848 = vpop.f32.mrf.mxu0
      %849 = vmatprep.mubr.f32.mxu0 %v471
      %850 = vmatmul.mubr.f32.gmra.mxu0 %v470
      %v851 = vpop.f32.mrf.mxu0
      %v852 = vadd.f32 %v747, %v851
      %v853 = vpop.f32.mrf.mxu0
      %854 = vmatprep.mubr.f32.mxu0 %v480
      %855 = vmatmul.mubr.f32.gmra.mxu0 %v479
      %v856 = vpop.f32.mrf.mxu0
      %v857 = vadd.f32 %v752, %v856
      %v858 = vpop.f32.mrf.mxu0
      %859 = vmatprep.mubr.f32.mxu0 %v489
      %860 = vmatmul.mubr.f32.gmra.mxu0 %v488
      %v861 = vpop.f32.mrf.mxu0
      %v862 = vadd.f32 %v757, %v861
      %v863 = vpop.f32.mrf.mxu0
      %864 = vmatprep.mubr.f32.mxu0 %v498
      %865 = vmatmul.mubr.f32.gmra.mxu0 %v497
      %v866 = vpop.f32.mrf.mxu0
      %v867 = vadd.f32 %v762, %v866
      %v868 = vpop.f32.mrf.mxu0
      %869 = vmatprep.mubr.f32.mxu0 %v507
      %870 = vmatmul.mubr.f32.gmra.mxu0 %v506
      %v871 = vpop.f32.mrf.mxu0
      %v872 = vadd.f32 %v767, %v871
      %v873 = vpop.f32.mrf.mxu0
      %874 = vmatprep.mubr.f32.mxu0 %v516
      %875 = vmatmul.mubr.f32.gmra.mxu0 %v515
      %v876 = vpop.f32.mrf.mxu0
      %v877 = vadd.f32 %v772, %v876
      %v878 = vpop.f32.mrf.mxu0
      %879 = vmatprep.mubr.f32.mxu0 %v525
      %880 = vmatmul.mubr.f32.gmra.mxu0 %v524
      %v881 = vpop.f32.mrf.mxu0
      %v882 = vadd.f32 %v777, %v881
      %v883 = vpop.f32.mrf.mxu0
      %884 = vdwg.mxu0
      %885 = vmatprep.subr.mxu0 0.0
      %886 = vmatpush1.msra.mxu0 %v610
      %887 = vmatprep.subr.mxu0 0.0
      %888 = vmatpush1.msra.mxu0 %v609
      %889 = vmatprep.subr.mxu0 0.0
      %890 = vmatpush1.msra.mxu0 %v608
      %891 = vmatprep.subr.mxu0 0.0
      %892 = vmatpush1.msra.mxu0 %v607
      %893 = vmatprep.subr.mxu0 0.0
      %894 = vmatpush1.msra.mxu0 %v606
      %895 = vmatprep.subr.mxu0 0.0
      %896 = vmatpush1.msra.mxu0 %v605
      %897 = vmatprep.subr.mxu0 0.0
      %898 = vmatpush1.msra.mxu0 %v604
      %899 = vmatprep.subr.mxu0 0.0
      %900 = vmatpush1.msra.mxu0 %v603
      %901 = vmatprep.subr.mxu0 0.0
      %902 = vmatpush1.msra.mxu0 %v602
      %903 = vmatprep.subr.mxu0 0.0
      %904 = vmatpush1.msra.mxu0 %v601
      %905 = vmatprep.subr.mxu0 0.0
      %906 = vmatpush1.msra.mxu0 %v600
      %907 = vmatprep.subr.mxu0 0.0
      %908 = vmatpush1.msra.mxu0 %v599
      %909 = vmatprep.subr.mxu0 0.0
      %910 = vmatpush1.msra.mxu0 %v598
      %911 = vmatprep.subr.mxu0 0.0
      %912 = vmatpush1.msra.mxu0 %v597
      %913 = vmatprep.subr.mxu0 0.0
      %914 = vmatpush1.msra.mxu0 %v596
      %915 = vmatprep.subr.mxu0 0.0
      %916 = vmatpush1.msra.mxu0 %v595
      %917 = vmatprep.subr.mxu0 0.0
      %918 = vmatpush2.msra.mxu0 %v626
      %919 = vmatprep.subr.mxu0 0.0
      %920 = vmatpush2.msra.mxu0 %v625
      %921 = vmatprep.subr.mxu0 0.0
      %922 = vmatpush2.msra.mxu0 %v624
      %923 = vmatprep.subr.mxu0 0.0
      %924 = vmatpush2.msra.mxu0 %v623
      %925 = vmatprep.subr.mxu0 0.0
      %926 = vmatpush2.msra.mxu0 %v622
      %927 = vmatprep.subr.mxu0 0.0
      %928 = vmatpush2.msra.mxu0 %v621
      %929 = vmatprep.subr.mxu0 0.0
      %930 = vmatpush2.msra.mxu0 %v620
      %931 = vmatprep.subr.mxu0 0.0
      %932 = vmatpush2.msra.mxu0 %v619
      %933 = vmatprep.subr.mxu0 0.0
      %934 = vmatpush2.msra.mxu0 %v618
      %935 = vmatprep.subr.mxu0 0.0
      %936 = vmatpush2.msra.mxu0 %v617
      %937 = vmatprep.subr.mxu0 0.0
      %938 = vmatpush2.msra.mxu0 %v616
      %939 = vmatprep.subr.mxu0 0.0
      %940 = vmatpush2.msra.mxu0 %v615
      %941 = vmatprep.subr.mxu0 0.0
      %942 = vmatpush2.msra.mxu0 %v614
      %943 = vmatprep.subr.mxu0 0.0
      %944 = vmatpush2.msra.mxu0 %v613
      %945 = vmatprep.subr.mxu0 0.0
      %946 = vmatpush2.msra.mxu0 %v612
      %947 = vmatprep.subr.mxu0 0.0
      %948 = vmatpush2.msra.mxu0 %v611
      %949 = vmatprep.mubr.f32.mxu0 %v464
      %950 = vmatmul.mubr.f32.gmra.mxu0 %v463
      %v951 = vpop.f32.mrf.mxu0
      %v952 = vadd.f32 %v847, %v951
      %v953 = vpop.f32.mrf.mxu0
      %954 = vmatprep.mubr.f32.mxu0 %v473
      %955 = vmatmul.mubr.f32.gmra.mxu0 %v472
      %v956 = vpop.f32.mrf.mxu0
      %v957 = vadd.f32 %v852, %v956
      %v958 = vpop.f32.mrf.mxu0
      %959 = vmatprep.mubr.f32.mxu0 %v482
      %960 = vmatmul.mubr.f32.gmra.mxu0 %v481
      %v961 = vpop.f32.mrf.mxu0
      %v962 = vadd.f32 %v857, %v961
      %v963 = vpop.f32.mrf.mxu0
      %964 = vmatprep.mubr.f32.mxu0 %v491
      %965 = vmatmul.mubr.f32.gmra.mxu0 %v490
      %v966 = vpop.f32.mrf.mxu0
      %v967 = vadd.f32 %v862, %v966
      %v968 = vpop.f32.mrf.mxu0
      %969 = vmatprep.mubr.f32.mxu0 %v500
      %970 = vmatmul.mubr.f32.gmra.mxu0 %v499
      %v971 = vpop.f32.mrf.mxu0
      %v972 = vadd.f32 %v867, %v971
      %v973 = vpop.f32.mrf.mxu0
      %974 = vmatprep.mubr.f32.mxu0 %v509
      %975 = vmatmul.mubr.f32.gmra.mxu0 %v508
      %v976 = vpop.f32.mrf.mxu0
      %v977 = vadd.f32 %v872, %v976
      %v978 = vpop.f32.mrf.mxu0
      %979 = vmatprep.mubr.f32.mxu0 %v518
      %980 = vmatmul.mubr.f32.gmra.mxu0 %v517
      %v981 = vpop.f32.mrf.mxu0
      %v982 = vadd.f32 %v877, %v981
      %v983 = vpop.f32.mrf.mxu0
      %984 = vmatprep.mubr.f32.mxu0 %v527
      %985 = vmatmul.mubr.f32.gmra.mxu0 %v526
      %v986 = vpop.f32.mrf.mxu0
      %v987 = vadd.f32 %v882, %v986
      %v988 = vpop.f32.mrf.mxu0
      %989 = vdwg.mxu0
      %990 = vmatprep.subr.mxu0 0.0
      %991 = vmatpush1.msra.mxu0 %v642
      %992 = vmatprep.subr.mxu0 0.0
      %993 = vmatpush1.msra.mxu0 %v641
      %994 = vmatprep.subr.mxu0 0.0
      %995 = vmatpush1.msra.mxu0 %v640
      %996 = vmatprep.subr.mxu0 0.0
      %997 = vmatpush1.msra.mxu0 %v639
      %998 = vmatprep.subr.mxu0 0.0
      %999 = vmatpush1.msra.mxu0 %v638
      %1000 = vmatprep.subr.mxu0 0.0
      %1001 = vmatpush1.msra.mxu0 %v637
      %1002 = vmatprep.subr.mxu0 0.0
      %1003 = vmatpush1.msra.mxu0 %v636
      %1004 = vmatprep.subr.mxu0 0.0
      %1005 = vmatpush1.msra.mxu0 %v635
      %1006 = vmatprep.subr.mxu0 0.0
      %1007 = vmatpush1.msra.mxu0 %v634
      %1008 = vmatprep.subr.mxu0 0.0
      %1009 = vmatpush1.msra.mxu0 %v633
      %1010 = vmatprep.subr.mxu0 0.0
      %1011 = vmatpush1.msra.mxu0 %v632
      %1012 = vmatprep.subr.mxu0 0.0
      %1013 = vmatpush1.msra.mxu0 %v631
      %1014 = vmatprep.subr.mxu0 0.0
      %1015 = vmatpush1.msra.mxu0 %v630
      %1016 = vmatprep.subr.mxu0 0.0
      %1017 = vmatpush1.msra.mxu0 %v629
      %1018 = vmatprep.subr.mxu0 0.0
      %1019 = vmatpush1.msra.mxu0 %v628
      %1020 = vmatprep.subr.mxu0 0.0
      %1021 = vmatpush1.msra.mxu0 %v627
      %1022 = vmatprep.subr.mxu0 0.0
      %1023 = vmatpush2.msra.mxu0 %v658
      %1024 = vmatprep.subr.mxu0 0.0
      %1025 = vmatpush2.msra.mxu0 %v657
      %1026 = vmatprep.subr.mxu0 0.0
      %1027 = vmatpush2.msra.mxu0 %v656
      %1028 = vmatprep.subr.mxu0 0.0
      %1029 = vmatpush2.msra.mxu0 %v655
      %1030 = vmatprep.subr.mxu0 0.0
      %1031 = vmatpush2.msra.mxu0 %v654
      %1032 = vmatprep.subr.mxu0 0.0
      %1033 = vmatpush2.msra.mxu0 %v653
      %1034 = vmatprep.subr.mxu0 0.0
      %1035 = vmatpush2.msra.mxu0 %v652
      %1036 = vmatprep.subr.mxu0 0.0
      %1037 = vmatpush2.msra.mxu0 %v651
      %1038 = vmatprep.subr.mxu0 0.0
      %1039 = vmatpush2.msra.mxu0 %v650
      %1040 = vmatprep.subr.mxu0 0.0
      %1041 = vmatpush2.msra.mxu0 %v649
      %1042 = vmatprep.subr.mxu0 0.0
      %1043 = vmatpush2.msra.mxu0 %v648
      %1044 = vmatprep.subr.mxu0 0.0
      %1045 = vmatpush2.msra.mxu0 %v647
      %1046 = vmatprep.subr.mxu0 0.0
      %1047 = vmatpush2.msra.mxu0 %v646
      %1048 = vmatprep.subr.mxu0 0.0
      %1049 = vmatpush2.msra.mxu0 %v645
      %1050 = vmatprep.subr.mxu0 0.0
      %1051 = vmatpush2.msra.mxu0 %v644
      %1052 = vmatprep.subr.mxu0 0.0
      %1053 = vmatpush2.msra.mxu0 %v643
      %1054 = vmatprep.mubr.f32.mxu0 %v466
      %1055 = vmatmul.mubr.f32.gmra.mxu0 %v465
      %v1056 = vpop.f32.mrf.mxu0
      %v1057 = vadd.f32 %v952, %v1056
      %v1058 = vpop.f32.mrf.mxu0
      %1059 = vmatprep.mubr.f32.mxu0 %v475
      %1060 = vmatmul.mubr.f32.gmra.mxu0 %v474
      %v1061 = vpop.f32.mrf.mxu0
      %v1062 = vadd.f32 %v957, %v1061
      %v1063 = vpop.f32.mrf.mxu0
      %1064 = vmatprep.mubr.f32.mxu0 %v484
      %1065 = vmatmul.mubr.f32.gmra.mxu0 %v483
      %v1066 = vpop.f32.mrf.mxu0
      %v1067 = vadd.f32 %v962, %v1066
      %v1068 = vpop.f32.mrf.mxu0
      %1069 = vmatprep.mubr.f32.mxu0 %v493
      %1070 = vmatmul.mubr.f32.gmra.mxu0 %v492
      %v1071 = vpop.f32.mrf.mxu0
      %v1072 = vadd.f32 %v967, %v1071
      %v1073 = vpop.f32.mrf.mxu0
      %1074 = vmatprep.mubr.f32.mxu0 %v502
      %1075 = vmatmul.mubr.f32.gmra.mxu0 %v501
      %v1076 = vpop.f32.mrf.mxu0
      %v1077 = vadd.f32 %v972, %v1076
      %v1078 = vpop.f32.mrf.mxu0
      %1079 = vmatprep.mubr.f32.mxu0 %v511
      %1080 = vmatmul.mubr.f32.gmra.mxu0 %v510
      %v1081 = vpop.f32.mrf.mxu0
      %v1082 = vadd.f32 %v977, %v1081
      %v1083 = vpop.f32.mrf.mxu0
      %1084 = vmatprep.mubr.f32.mxu0 %v520
      %1085 = vmatmul.mubr.f32.gmra.mxu0 %v519
      %v1086 = vpop.f32.mrf.mxu0
      %v1087 = vadd.f32 %v982, %v1086
      %v1088 = vpop.f32.mrf.mxu0
      %1089 = vmatprep.mubr.f32.mxu0 %v529
      %1090 = vmatmul.mubr.f32.gmra.mxu0 %v528
      %v1091 = vpop.f32.mrf.mxu0
      %v1092 = vadd.f32 %v987, %v1091
      %v1093 = vpop.f32.mrf.mxu0
      %1094 = vdwg.mxu0
      %1095 = vmatprep.subr.mxu0 0.0
      %1096 = vmatpush1.msra.mxu0 %v674
      %1097 = vmatprep.subr.mxu0 0.0
      %1098 = vmatpush1.msra.mxu0 %v673
      %1099 = vmatprep.subr.mxu0 0.0
      %1100 = vmatpush1.msra.mxu0 %v672
      %1101 = vmatprep.subr.mxu0 0.0
      %1102 = vmatpush1.msra.mxu0 %v671
      %1103 = vmatprep.subr.mxu0 0.0
      %1104 = vmatpush1.msra.mxu0 %v670
      %1105 = vmatprep.subr.mxu0 0.0
      %1106 = vmatpush1.msra.mxu0 %v669
      %1107 = vmatprep.subr.mxu0 0.0
      %1108 = vmatpush1.msra.mxu0 %v668
      %1109 = vmatprep.subr.mxu0 0.0
      %1110 = vmatpush1.msra.mxu0 %v667
      %1111 = vmatprep.subr.mxu0 0.0
      %1112 = vmatpush1.msra.mxu0 %v666
      %1113 = vmatprep.subr.mxu0 0.0
      %1114 = vmatpush1.msra.mxu0 %v665
      %1115 = vmatprep.subr.mxu0 0.0
      %1116 = vmatpush1.msra.mxu0 %v664
      %1117 = vmatprep.subr.mxu0 0.0
      %1118 = vmatpush1.msra.mxu0 %v663
      %1119 = vmatprep.subr.mxu0 0.0
      %1120 = vmatpush1.msra.mxu0 %v662
      %1121 = vmatprep.subr.mxu0 0.0
      %1122 = vmatpush1.msra.mxu0 %v661
      %1123 = vmatprep.subr.mxu0 0.0
      %1124 = vmatpush1.msra.mxu0 %v660
      %1125 = vmatprep.subr.mxu0 0.0
      %1126 = vmatpush1.msra.mxu0 %v659
      %1127 = vmatprep.subr.mxu0 0.0
      %1128 = vmatpush2.msra.mxu0 0.0
      %1129 = vmatprep.subr.mxu0 0.0
      %1130 = vmatpush2.msra.mxu0 0.0
      %1131 = vmatprep.subr.mxu0 0.0
      %1132 = vmatpush2.msra.mxu0 0.0
      %1133 = vmatprep.subr.mxu0 0.0
      %1134 = vmatpush2.msra.mxu0 0.0
      %1135 = vmatprep.subr.mxu0 0.0
      %1136 = vmatpush2.msra.mxu0 0.0
      %1137 = vmatprep.subr.mxu0 0.0
      %1138 = vmatpush2.msra.mxu0 0.0
      %1139 = vmatprep.subr.mxu0 0.0
      %1140 = vmatpush2.msra.mxu0 0.0
      %1141 = vmatprep.subr.mxu0 0.0
      %1142 = vmatpush2.msra.mxu0 0.0
      %1143 = vmatprep.subr.mxu0 0.0
      %1144 = vmatpush2.msra.mxu0 0.0
      %1145 = vmatprep.subr.mxu0 0.0
      %1146 = vmatpush2.msra.mxu0 0.0
      %1147 = vmatprep.subr.mxu0 0.0
      %1148 = vmatpush2.msra.mxu0 0.0
      %1149 = vmatprep.subr.mxu0 0.0
      %1150 = vmatpush2.msra.mxu0 0.0
      %1151 = vmatprep.subr.mxu0 0.0
      %1152 = vmatpush2.msra.mxu0 0.0
      %1153 = vmatprep.subr.mxu0 0.0
      %1154 = vmatpush2.msra.mxu0 0.0
      %1155 = vmatprep.subr.mxu0 0.0
      %1156 = vmatpush2.msra.mxu0 0.0
      %1157 = vmatprep.subr.mxu0 0.0
      %1158 = vmatpush2.msra.mxu0 0.0
      %1159 = vmatprep.mubr.f32.mxu0 0.0
      %1160 = vmatmul.mubr.f32.gmra.mxu0 %v467
      %v1161 = vpop.f32.mrf.mxu0
      %v1162 = vadd.f32 %v1057, %v1161
      %v1163 = vpop.f32.mrf.mxu0
      %1164 = vmatprep.mubr.f32.mxu0 0.0
      %1165 = vmatmul.mubr.f32.gmra.mxu0 %v476
      %v1166 = vpop.f32.mrf.mxu0
      %v1167 = vadd.f32 %v1062, %v1166
      %v1168 = vpop.f32.mrf.mxu0
      %1169 = vmatprep.mubr.f32.mxu0 0.0
      %1170 = vmatmul.mubr.f32.gmra.mxu0 %v485
      %v1171 = vpop.f32.mrf.mxu0
      %v1172 = vadd.f32 %v1067, %v1171
      %v1173 = vpop.f32.mrf.mxu0
      %1174 = vmatprep.mubr.f32.mxu0 0.0
      %1175 = vmatmul.mubr.f32.gmra.mxu0 %v494
      %v1176 = vpop.f32.mrf.mxu0
      %v1177 = vadd.f32 %v1072, %v1176
      %v1178 = vpop.f32.mrf.mxu0
      %1179 = vmatprep.mubr.f32.mxu0 0.0
      %1180 = vmatmul.mubr.f32.gmra.mxu0 %v503
      %v1181 = vpop.f32.mrf.mxu0
      %v1182 = vadd.f32 %v1077, %v1181
      %v1183 = vpop.f32.mrf.mxu0
      %1184 = vmatprep.mubr.f32.mxu0 0.0
      %1185 = vmatmul.mubr.f32.gmra.mxu0 %v512
      %v1186 = vpop.f32.mrf.mxu0
      %v1187 = vadd.f32 %v1082, %v1186
      %v1188 = vpop.f32.mrf.mxu0
      %1189 = vmatprep.mubr.f32.mxu0 0.0
      %1190 = vmatmul.mubr.f32.gmra.mxu0 %v521
      %v1191 = vpop.f32.mrf.mxu0
      %v1192 = vadd.f32 %v1087, %v1191
      %v1193 = vpop.f32.mrf.mxu0
      %1194 = vmatprep.mubr.f32.mxu0 0.0
      %1195 = vmatmul.mubr.f32.gmra.mxu0 %v530
      %v1196 = vpop.f32.mrf.mxu0
      %v1197 = vadd.f32 %v1092, %v1196
      %v1198 = vpop.f32.mrf.mxu0
      %1199 = vdwg.mxu0
      %v1200 = vadd.f32 %v1162, %v1167
      %v1201 = vadd.f32 %v1200, %v1172
      %v1202 = vadd.f32 %v1201, %v1177
      %v1203 = vadd.f32 %v1202, %v1182
      %v1204 = vadd.f32 %v1203, %v1187
      %v1205 = vadd.f32 %v1204, %v1192
      %v1206 = vadd.f32 %v1205, %v1197
      %v1207 = vrot.slane %v1206, 4
      %v1208 = vadd.f32 %v1206, %v1207
      %v1209 = vrot.slane %v1208, 2
      %v1210 = vadd.f32 %v1208, %v1209
      %v1211 = vrot.slane %v1210, 1
      %v1212 = vadd.f32 %v1210, %v1211
      %v1213 = vmul.f32 %v1212, 0.015625
      %v1214 = vsub.f32 %v1162, %v1213
      %v1215 = vsub.f32 %v1167, %v1213
      %v1216 = vsub.f32 %v1172, %v1213
      %v1217 = vsub.f32 %v1177, %v1213
      %v1218 = vsub.f32 %v1182, %v1213
      %v1219 = vsub.f32 %v1187, %v1213
      %v1220 = vsub.f32 %v1192, %v1213
      %v1221 = vsub.f32 %v1197, %v1213
      %1222 = vst [vmem:[%s238] sm:$0x1] %v1212
      %v1223 = vmul.f32 %v1214, %v1214
      %v1224 = vmul.f32 %v1215, %v1215
      %v1225 = vmul.f32 %v1216, %v1216
      %v1226 = vmul.f32 %v1217, %v1217
      %v1227 = vmul.f32 %v1218, %v1218
      %v1228 = vmul.f32 %v1219, %v1219
      %v1229 = vmul.f32 %v1220, %v1220
      %v1230 = vmul.f32 %v1221, %v1221
      %v1231 = vadd.f32 %v1223, %v1224
      %v1232 = vadd.f32 %v1231, %v1225
      %v1233 = vadd.f32 %v1232, %v1226
      %v1234 = vadd.f32 %v1233, %v1227
      %v1235 = vadd.f32 %v1234, %v1228
      %v1236 = vadd.f32 %v1235, %v1229
      %v1237 = vadd.f32 %v1236, %v1230
      %v1238 = vrot.slane %v1237, 4
      %v1239 = vadd.f32 %v1237, %v1238
      %v1240 = vrot.slane %v1239, 2
      %v1241 = vadd.f32 %v1239, %v1240
      %v1242 = vrot.slane %v1241, 1
      %v1243 = vadd.f32 %v1241, %v1242
      %1244 = vst [vmem:[%s238 + $0x1] sm:$0x1] %v1243
      %1245 = vst [vmem:[%s233] sm:$0xff] %v1162
      %1246 = vst [vmem:[%s233 + $0x8] sm:$0xff] %v1167
      %1247 = vst [vmem:[%s233 + $0x10] sm:$0xff] %v1172
      %1248 = vst [vmem:[%s233 + $0x18] sm:$0xff] %v1177
      %1249 = vst [vmem:[%s233 + $0x20] sm:$0xff] %v1182
      %1250 = vst [vmem:[%s233 + $0x28] sm:$0xff] %v1187
      %1251 = vst [vmem:[%s233 + $0x30] sm:$0xff] %v1192
      %1252 = vst [vmem:[%s233 + $0x38] sm:$0xff] %v1197
      %s1253 = smul.u32 8, %s17
      %p1254 = scmp.lt.s32.totalorder %s1253, 15
      %s1255 = scalar_select %p1254, %s1253, 15
      %s1256 = smul.addr %s1255, 8
      %s1257 = scalar_lea.vmem %s4, %s1256
      %p1258 = scmp.lt.s32.totalorder %s17, 1
      %s1259 = scalar_select %p1258, %s17, 1
      %s1260 = smul.addr %s1259, 2
      %s1261 = scalar_lea.vmem %s5, %s1260
      // Predicated region
      $region37: #{down_forward.4} parent=35 // pred_check
        %p1262 = pneg %p124
      $region38: #{down_forward.4} parent=35 // pred_check_branch
        %1264 = sbr.rel (%p1262) target = $region40
      $region39: #{down_forward.4} parent=35 // pred_region
        %s1265 = smul.u32 8, %s17
      $region40: #{down_forward.4} parent=35 // pred_fallthru
        _
      // Predicated region
      $region41: #{down_forward.4} parent=35 // pred_check
        %p1266 = pneg %p150
      $region42: #{down_forward.4} parent=35 // pred_check_branch
        %1268 = sbr.rel (%p1266) target = $region44
      $region43: #{down_forward.4} parent=35 // pred_region
        _
      $region44: #{down_forward.4} parent=35 // pred_fallthru
        _
    $region36: #{down_forward.4} parent=5 // pred_fallthru
      _
    %p1269 = scmp.le.s32.totalorder 2, %s12
    // Predicated region
    $region45: #{down_forward.4} parent=5 // pred_check
      %p1270 = pneg %p1269
    $region46: #{down_forward.4} parent=5 // pred_check_branch
      %1272 = sbr.rel (%p1270) target = $region48
    $region47: #{down_forward.4} parent=5 // pred_region
      %s1273 = ssub.s32 %s12, 2
      // Predicated region
      $region49: #{down_forward.4} parent=47 // pred_check
        %p1274 = pneg %p130
      $region50: #{down_forward.4} parent=47 // pred_check_branch
        %1276 = sbr.rel (%p1274) target = $region52
      $region51: #{down_forward.4} parent=47 // pred_region
        %s1277 = smul.u32 8, %s18
        %p1278 = scmp.lt.s32.totalorder %s1277, 15
        %s1279 = scalar_select %p1278, %s1277, 15
        %s1280 = smul.addr %s1279, 8
        %s1281 = scalar_lea.vmem %s4, %s1280
      $region52: #{down_forward.4} parent=47 // pred_fallthru
        _
      // Predicated region
      $region53: #{down_forward.4} parent=47 // pred_check
        %p1282 = pneg %p156
      $region54: #{down_forward.4} parent=47 // pred_check_branch
        %1284 = sbr.rel (%p1282) target = $region56
      $region55: #{down_forward.4} parent=47 // pred_region
        %p1285 = scmp.lt.s32.totalorder %s18, 1
        %s1286 = scalar_select %p1285, %s18, 1
        %s1287 = smul.addr %s1286, 2
        %s1288 = scalar_lea.vmem %s5, %s1287
      $region56: #{down_forward.4} parent=47 // pred_fallthru
        _
    $region48: #{down_forward.4} parent=5 // pred_fallthru
      _
  $region6: #{down_forward.4} parent=0 // loop_footer
    %s16 = sadd.s32 1, %s12
  $region7: #{down_forward.4} parent=0 // loop_footer_branch
    %11 = sbr.rel target = $region3
  $region8: #{down_forward.4} parent=0 // loop_exit
    _

</llo_original>
